<compile_context>
chip_gen: v7x
topology: tpu7x:2x2x1
jax: 0.10.0
libtpu: 0.0.40
codegen_flags: <defaults>
</compile_context>

<pallas_src>
import functools

import jax
import jax.numpy as jnp
from jax.experimental import pallas as pl
from jax.experimental.pallas import tpu as pltpu


def _round_up(v, m):
    return (v + m - 1) // m * m


def _vmem_tile_bytes(shape, dtype):
    """Rough VMEM footprint of one tile after (sublane, lane) padding."""
    item = jnp.dtype(dtype).itemsize
    shape = tuple(int(d) for d in shape)
    if len(shape) < 2:
        shape = (1,) * (2 - len(shape)) + shape
    *lead, r, c = shape
    sub = max(8, 32 // item)
    b = _round_up(r, sub) * _round_up(c, 128) * item
    for d in lead:
        b *= max(1, d)
    return b


# contract the last dim of both operands: A @ B^T
_DN_NT = (((1,), (1,)), ((), ()))


def _pool_gcn_kernel(x_ref, y_ref, ws_ref, bs_ref, wp_ref, bp_ref,
                     w1aa_ref, w1ab_ref, w1ba_ref, w1bb_ref, b1a_ref, b1b_ref,
                     w2_ref, w3a_ref, w3b_ref, b3_ref, we_ref, bns_ref,
                     g_ref, xn_acc, yn_acc, *, l_valid, l_tile):
    f32, bf16 = jnp.float32, jnp.bfloat16
    l = pl.program_id(1)

    @pl.when(l == 0)
    def _init():
        xn_acc[...] = jnp.zeros_like(xn_acc)
        yn_acc[...] = jnp.zeros_like(yn_acc)

    x = x_ref[...]                         # (C, TL) bf16
    y = y_ref[...]                         # (C, TL) bf16
    Ws, Wp = ws_ref[...], wp_ref[...]      # (S, C) / (N, C) bf16

    # conv_state / conv_proj (1x1 convs) on this L tile: bf16 MXU, f32 accumulate,
    # f32 bias add (elementwise stays f32 for v5e's VPU).
    xs = jnp.dot(Ws, x, preferred_element_type=f32) + bs_ref[...]     # (S, TL)
    ys = jnp.dot(Ws, y, preferred_element_type=f32) + bs_ref[...]     # (S, TL)
    xp = jnp.dot(Wp, x, preferred_element_type=f32) + bp_ref[...]     # (N, TL)
    yp = jnp.dot(Wp, y, preferred_element_type=f32) + bp_ref[...]     # (N, TL)

    if l_valid % l_tile != 0:
        # zero padded lanes so the conv bias does not pollute the pooling
        lane = jax.lax.broadcasted_iota(jnp.int32, (1, l_tile), 1) + l * l_tile
        valid = lane < l_valid
        xp = jnp.where(valid, xp, 0.0)
        yp = jnp.where(valid, yp, 0.0)

    # bilinear pooling, accumulated across L tiles: (S, TL) . (N, TL)^T -> (S, N)
    xn_acc[...] += jax.lax.dot_general(xs.astype(bf16), yp.astype(bf16),
                                       _DN_NT, preferred_element_type=f32)
    yn_acc[...] += jax.lax.dot_general(ys.astype(bf16), xp.astype(bf16),
                                       _DN_NT, preferred_element_type=f32)

    @pl.when(l == pl.num_programs(1) - 1)
    def _finalize():
        xn, yn = xn_acc[...], yn_acc[...]              # (S, N) f32
        dg = functools.partial(jax.lax.dot_general, dimension_numbers=_DN_NT,
                               preferred_element_type=f32)
        # GCN conv1 over the node dim; W1 pre-split in quadrants so the (S, 2N)
        # concatenation never materializes in VMEM.
        h1a = dg(xn, w1aa_ref[...]) + dg(yn, w1ab_ref[...]) + b1a_ref[...]
        h1b = dg(xn, w1ba_ref[...]) + dg(yn, w1bb_ref[...]) + b1b_ref[...]
        ha = jnp.maximum(h1a + xn, 0.0)
        hb = jnp.maximum(h1b + yn, 0.0)
        # GCN conv2 over the state dim (no bias)
        W2 = w2_ref[...]
        h2a = jnp.dot(W2, ha, preferred_element_type=f32)
        h2b = jnp.dot(W2, hb, preferred_element_type=f32)
        # GCN conv3: node -> node/2
        h3 = dg(h2a, w3a_ref[...]) + dg(h2b, w3b_ref[...]) + b3_ref[...]   # (S, N)
        # fold conv_extend (no bias) and the BN scale: g = bn_scale * (We @ h3)
        g_ref[...] = jnp.dot(we_ref[...], h3, preferred_element_type=f32) * bns_ref[...]


def _expand_kernel(y_ref, g_ref, wp_ref, bp_ref, bnb_ref, out_ref):
    f32, bf16 = jnp.float32, jnp.bfloat16
    y = y_ref[...]                                                      # (C, TL) bf16
    yp = jnp.dot(wp_ref[...], y, preferred_element_type=f32) + bp_ref[...]   # (N, TL)
    # BN scale was folded into g in pass 1; only the BN bias remains here.
    ext = jnp.dot(g_ref[...].astype(bf16), yp.astype(bf16),
                  preferred_element_type=f32)                           # (C, TL)
    out_ref[...] = y.astype(f32) + ext + bnb_ref[...]


def g_gcn_forward(x, y, params, *, l_tile=None, single_buffer_weights=True):
    n, C, H, W = x.shape
    L = H * W
    S = int(params["Ws"].shape[0])
    N = int(params["Wp"].shape[0])
    f32, bf16 = jnp.float32, jnp.bfloat16

    # lane-dense tiling of the pixel dim (multiple of 128 lanes)
    if l_tile is None:
        l_tile = min(512, _round_up(L, 128))
    l_tile = _round_up(int(l_tile), 128)
    Lp = _round_up(L, l_tile)
    n_lt = Lp // l_tile

    xf = x.reshape(n, C, L)
    yf = y.reshape(n, C, L)
    if Lp != L:
        pad = ((0, 0), (0, 0), (0, Lp - L))
        xf = jnp.pad(xf, pad)
        yf = jnp.pad(yf, pad)
    xb = xf.astype(bf16)     # bf16 activations: MXU-native, half the DMA bytes
    yb = yf.astype(bf16)

    # per-pixel projection weights in bf16; tiny GCN / bias / BN terms stay f32
    Ws = params["Ws"].astype(bf16)
    Wp = params["Wp"].astype(bf16)
    bs = params["bs"].astype(f32)
    bp = params["bp"].astype(f32)
    W1 = params["W1"].astype(f32)
    b1 = params["b1"].astype(f32)
    W2 = params["W2"].astype(f32)
    W3 = params["W3"].astype(f32)
    b3 = params["b3"].astype(f32)
    We = params["We"].astype(f32)
    bn_scale = params["bn_scale"].astype(f32)
    bn_bias = params["bn_bias"].astype(f32)

    # split W1 / b1 / W3 so the kernel never builds the (S, 2N) concat
    W1aa, W1ab = W1[:N, :N], W1[:N, N:]
    W1ba, W1bb = W1[N:, :N], W1[N:, N:]
    b1a, b1b = b1[:, :N], b1[:, N:]
    W3a, W3b = W3[:, :N], W3[:, N:]

    pool_weights = (Ws, bs, Wp, bp, W1aa, W1ab, W1ba, W1bb, b1a, b1b,
                    W2, W3a, W3b, b3, We, bn_scale)
    expand_weights = (Wp, bp, bn_bias)

    def act_spec():
        return pl.BlockSpec((None, C, l_tile), lambda b, l: (b, 0, l))

    def small_spec():
        return pl.BlockSpec((None, C, N), lambda b, l: (b, 0, 0))

    def w_spec(w):
        nd = w.ndim
        kwargs = {}
        if single_buffer_weights:
            # index map is constant across the grid -> no need for double-buffering
            kwargs["pipeline_mode"] = pl.Buffered(1)
        return pl.BlockSpec(w.shape, lambda b, l, _nd=nd: (0,) * _nd, **kwargs)

    # ---- VMEM budget (blocks + scratch + temps, with headroom) --------------
    wbuf = 1 if single_buffer_weights else 2
    act_tile = _vmem_tile_bytes((C, l_tile), bf16)
    est1 = (2 * 2 * act_tile                                    # x, y double-buffered
            + 2 * _vmem_tile_bytes((C, N), f32)                 # g output block
            + 2 * _vmem_tile_bytes((S, N), f32)                 # accumulators
            + wbuf * sum(_vmem_tile_bytes(w.shape, w.dtype) for w in pool_weights)
            + 6 * _vmem_tile_bytes((max(S, N), l_tile), f32))   # xs/ys/xp/yp temps
    est2 = (2 * act_tile
            + 2 * _vmem_tile_bytes((C, l_tile), f32)            # output block
            + 2 * _vmem_tile_bytes((C, N), f32)                 # g block
            + wbuf * sum(_vmem_tile_bytes(w.shape, w.dtype) for w in expand_weights)
            + 3 * _vmem_tile_bytes((max(C, N), l_tile), f32))
    vmem_limit = int(min(96 * 2 ** 20, max(32 * 2 ** 20, 2 * max(est1, est2))))

    # ---- cost estimates ------------------------------------------------------
    w_bytes1 = sum(int(w.size) * w.dtype.itemsize for w in pool_weights)
    w_bytes2 = sum(int(w.size) * w.dtype.itemsize for w in expand_weights)
    flops1 = n * (4 * S * C * Lp + 4 * N * C * Lp              # conv_state / conv_proj
                  + 4 * S * N * Lp                             # bilinear pooling
                  + 12 * S * N * N + 4 * S * S * N             # GCN conv1/2/3
                  + 2 * C * S * N)                             # folded conv_extend
    bytes1 = n * (2 * C * Lp * 2 + C * N * 4) + w_bytes1
    flops2 = n * Lp * 4 * C * N
    bytes2 = n * (C * Lp * 2 + C * N * 4 + C * Lp * 4) + w_bytes2

    # ---- pass 1: projections + bilinear pooling (L reduction) + GCN ---------
    pool_kernel = functools.partial(_pool_gcn_kernel, l_valid=L, l_tile=l_tile)
    g = pl.pallas_call(
        pool_kernel,
        out_shape=jax.ShapeDtypeStruct((n, C, N), f32),
        grid_spec=pltpu.PrefetchScalarGridSpec(
            num_scalar_prefetch=0,
            grid=(n, n_lt),
            in_specs=[act_spec(), act_spec()] + [w_spec(w) for w in pool_weights],
            out_specs=small_spec(),
            scratch_shapes=[pltpu.VMEM((S, N), f32), pltpu.VMEM((S, N), f32)],
        ),
        compiler_params=pltpu.CompilerParams(
            dimension_semantics=("parallel", "arbitrary"),
            vmem_limit_bytes=vmem_limit),
        cost_estimate=pl.CostEstimate(flops=flops1, transcendentals=0,
                                      bytes_accessed=bytes1),
    )(xb, yb, *pool_weights)

    # ---- pass 2: project graph features back to pixels + BN bias + residual -
    out = pl.pallas_call(
        _expand_kernel,
        out_shape=jax.ShapeDtypeStruct((n, C, Lp), f32),
        grid_spec=pltpu.PrefetchScalarGridSpec(
            num_scalar_prefetch=0,
            grid=(n, n_lt),
            in_specs=[act_spec(), small_spec()] + [w_spec(w) for w in expand_weights],
            out_specs=act_spec(),
        ),
        compiler_params=pltpu.CompilerParams(
            dimension_semantics=("parallel", "parallel"),
            vmem_limit_bytes=vmem_limit),
        cost_estimate=pl.CostEstimate(flops=flops2, transcendentals=0,
                                      bytes_accessed=bytes2),
    )(yb, g, *expand_weights)

    return out[:, :, :L].reshape(n, C, H, W)


def init_params(key, num_in, num_mid):
    """Deterministic synthetic parameters matching g_GCN's __init__ shapes."""
    S = 2 * num_mid          # num_s
    N = 2 * num_mid          # num_n
    node = 2 * N             # gcn num_node
    ks = jax.random.split(key, 12)
    f = jnp.float32
    rnd = lambda k, shape: 0.1 * jax.random.normal(k, shape, dtype=f)
    params = dict(
        Ws=rnd(ks[0], (S, num_in)),        # conv_state weight (1x1)
        bs=rnd(ks[1], (S, 1)),             # conv_state bias
        Wp=rnd(ks[2], (N, num_in)),        # conv_proj weight
        bp=rnd(ks[3], (N, 1)),             # conv_proj bias
        W1=rnd(ks[4], (node, node)),       # gcn.conv1 weight
        b1=rnd(ks[5], (1, node)),          # gcn.conv1 bias
        W2=rnd(ks[6], (S, S)),             # gcn.conv2 weight (no bias)
        W3=rnd(ks[7], (node // 2, node)),  # gcn.conv3 weight
        b3=rnd(ks[8], (1, node // 2)),     # gcn.conv3 bias
        We=rnd(ks[9], (num_in, S)),        # conv_extend weight (no bias)
    )
    # BatchNorm2d(num_in, eps=1e-4) folded in eval mode.
    # TODO(synk): training-mode BatchNorm (batch statistics over N,H,W) not implemented.
    gamma = 1.0 + rnd(ks[10], (num_in, 1))
    beta = rnd(ks[11], (num_in, 1))
    running_mean = jnp.zeros((num_in, 1), f)
    running_var = jnp.ones((num_in, 1), f)
    eps = 1e-4
    bn_scale = gamma / jnp.sqrt(running_var + eps)
    params["bn_scale"] = bn_scale
    params["bn_bias"] = beta - running_mean * bn_scale
    return params


def _reference(x, y, p):
    """Pure-JAX f32 reference mirroring the PyTorch forward (normalize=False)."""
    n, C, H, W = x.shape
    L = H * W
    xf, yf = x.reshape(n, C, L), y.reshape(n, C, L)
    with jax.default_matmul_precision("highest"):
        xs = jnp.einsum("sc,bcl->bsl", p["Ws"], xf) + p["bs"][None]
        ys = jnp.einsum("sc,bcl->bsl", p["Ws"], yf) + p["bs"][None]
        xp = jnp.einsum("nc,bcl->bnl", p["Wp"], xf) + p["bp"][None]
        yp = jnp.einsum("nc,bcl->bnl", p["Wp"], yf) + p["bp"][None]
        xn = jnp.einsum("bsl,bnl->bsn", xs, yp)
        yn = jnp.einsum("bsl,bnl->bsn", ys, xp)
        cat = jnp.concatenate([xn, yn], axis=2)
        h = jnp.einsum("bsj,ij->bsi", cat, p["W1"]) + p["b1"][None]
        h = jnp.maximum(h + cat, 0.0)
        h = jnp.einsum("st,btj->bsj", p["W2"], h)
        h = jnp.einsum("bsj,ij->bsi", h, p["W3"]) + p["b3"][None]
        xsr = jnp.einsum("bsn,bnl->bsl", h, yp)
        ext = jnp.einsum("cs,bsl->bcl", p["We"], xsr)
        out = yf + ext * p["bn_scale"][None] + p["bn_bias"][None]
    return out.reshape(n, C, H, W)


if __name__ == "__main__":
    key = jax.random.PRNGKey(0)
    kx, ky, kp, k2x, k2y = jax.random.split(key, 5)
    num_in, num_mid = 16, 8          # -> num_s = num_n = 16, gcn num_node = 32
    n, H, W = 2, 16, 16              # L = 256 -> two 128-lane tiles per image
    x = jax.random.normal(kx, (n, num_in, H, W), dtype=jnp.float32)
    y = jax.random.normal(ky, (n, num_in, H, W), dtype=jnp.float32)
    params = init_params(kp, num_in, num_mid)

    sbw = True
    try:
        out = g_gcn_forward(x, y, params, l_tile=128, single_buffer_weights=True)
        out = jax.block_until_ready(out)
    except Exception:
        # fall back if this jax version rejects pl.Buffered(1) single-buffering
        sbw = False
        out = g_gcn_forward(x, y, params, l_tile=128, single_buffer_weights=False)
        out = jax.block_until_ready(out)

    assert out.shape == (n, num_in, H, W)
    ref = _reference(x, y, params)
    # bf16 matmul operands (f32 accumulation) -> compare against f32 reference
    # with a bf16-appropriate tolerance.
    assert jnp.allclose(out, ref, rtol=3e-2, atol=3e-2), "mismatch vs JAX reference"

    # second check: spatial size that is NOT a multiple of 128 (exercises the
    # L padding + lane-mask path)
    x2 = jax.random.normal(k2x, (n, num_in, 9, 7), dtype=jnp.float32)
    y2 = jax.random.normal(k2y, (n, num_in, 9, 7), dtype=jnp.float32)
    out2 = jax.block_until_ready(
        g_gcn_forward(x2, y2, params, single_buffer_weights=sbw))
    ref2 = _reference(x2, y2, params)
    assert out2.shape == (n, num_in, 9, 7)
    assert jnp.allclose(out2, ref2, rtol=3e-2, atol=3e-2), "mismatch (padded L case)"

    print("KERNEL_OK")
</pallas_src>

<mosaic_0001>
module attributes {stable_mosaic.version = 11 : i64} {
  func.func @_pool_gcn_kernel(%arg0: i32, %arg1: i32, %arg2: memref<1x16x128xbf16, #tpu.memory_space<vmem>>, %arg3: memref<1x16x128xbf16, #tpu.memory_space<vmem>>, %arg4: memref<16x16xbf16, #tpu.memory_space<vmem>>, %arg5: memref<16x1xf32, #tpu.memory_space<vmem>>, %arg6: memref<16x16xbf16, #tpu.memory_space<vmem>>, %arg7: memref<16x1xf32, #tpu.memory_space<vmem>>, %arg8: memref<16x16xf32, #tpu.memory_space<vmem>>, %arg9: memref<16x16xf32, #tpu.memory_space<vmem>>, %arg10: memref<16x16xf32, #tpu.memory_space<vmem>>, %arg11: memref<16x16xf32, #tpu.memory_space<vmem>>, %arg12: memref<1x16xf32, #tpu.memory_space<vmem>>, %arg13: memref<1x16xf32, #tpu.memory_space<vmem>>, %arg14: memref<16x16xf32, #tpu.memory_space<vmem>>, %arg15: memref<16x16xf32, #tpu.memory_space<vmem>>, %arg16: memref<16x16xf32, #tpu.memory_space<vmem>>, %arg17: memref<1x16xf32, #tpu.memory_space<vmem>>, %arg18: memref<16x16xf32, #tpu.memory_space<vmem>>, %arg19: memref<16x1xf32, #tpu.memory_space<vmem>>, %arg20: memref<1x16x16xf32, #tpu.memory_space<vmem>>, %arg21: memref<16x16xf32, #tpu.memory_space<vmem>>, %arg22: memref<16x16xf32, #tpu.memory_space<vmem>>) attributes {dimension_semantics = [#tpu.dimension_semantics<parallel>, #tpu.dimension_semantics<arbitrary>], iteration_bounds = array<i64: 2, 2>, scalar_prefetch = 0 : i64, scratch_operands = 2 : i64, tpu.core_type = #tpu.core_type<tc>, window_params = [{transform_indices = @transform_0, window_bounds = array<i64: 1, 16, 128>}, {transform_indices = @transform_1, window_bounds = array<i64: 1, 16, 128>}, {pipeline_mode = #tpu.pipeline_mode<synchronous>, transform_indices = @transform_2, window_bounds = array<i64: 16, 16>}, {pipeline_mode = #tpu.pipeline_mode<synchronous>, transform_indices = @transform_3, window_bounds = array<i64: 16, 1>}, {pipeline_mode = #tpu.pipeline_mode<synchronous>, transform_indices = @transform_4, window_bounds = array<i64: 16, 16>}, {pipeline_mode = #tpu.pipeline_mode<synchronous>, transform_indices = @transform_5, window_bounds = array<i64: 16, 1>}, {pipeline_mode = #tpu.pipeline_mode<synchronous>, transform_indices = @transform_6, window_bounds = array<i64: 16, 16>}, {pipeline_mode = #tpu.pipeline_mode<synchronous>, transform_indices = @transform_7, window_bounds = array<i64: 16, 16>}, {pipeline_mode = #tpu.pipeline_mode<synchronous>, transform_indices = @transform_8, window_bounds = array<i64: 16, 16>}, {pipeline_mode = #tpu.pipeline_mode<synchronous>, transform_indices = @transform_9, window_bounds = array<i64: 16, 16>}, {pipeline_mode = #tpu.pipeline_mode<synchronous>, transform_indices = @transform_10, window_bounds = array<i64: 1, 16>}, {pipeline_mode = #tpu.pipeline_mode<synchronous>, transform_indices = @transform_11, window_bounds = array<i64: 1, 16>}, {pipeline_mode = #tpu.pipeline_mode<synchronous>, transform_indices = @transform_12, window_bounds = array<i64: 16, 16>}, {pipeline_mode = #tpu.pipeline_mode<synchronous>, transform_indices = @transform_13, window_bounds = array<i64: 16, 16>}, {pipeline_mode = #tpu.pipeline_mode<synchronous>, transform_indices = @transform_14, window_bounds = array<i64: 16, 16>}, {pipeline_mode = #tpu.pipeline_mode<synchronous>, transform_indices = @transform_15, window_bounds = array<i64: 1, 16>}, {pipeline_mode = #tpu.pipeline_mode<synchronous>, transform_indices = @transform_16, window_bounds = array<i64: 16, 16>}, {pipeline_mode = #tpu.pipeline_mode<synchronous>, transform_indices = @transform_17, window_bounds = array<i64: 16, 1>}, {transform_indices = @transform_18, window_bounds = array<i64: 1, 16, 16>}]} {
    %c0_i32 = arith.constant 0 : i32
    %0 = arith.cmpi eq, %arg1, %c0_i32 : i32
    %1 = arith.extui %0 : i1 to i32
    %c0_i32_0 = arith.constant 0 : i32
    %2 = arith.cmpi ne, %1, %c0_i32_0 : i32
    scf.if %2 {
      %cst_32 = arith.constant 0.000000e+00 : f32
      %40 = vector.broadcast %cst_32 : f32 to vector<16x16xf32>
      %c0_33 = arith.constant 0 : index
      %c0_34 = arith.constant 0 : index
      %41 = vector.load %arg21[%c0_33, %c0_34] : memref<16x16xf32, #tpu.memory_space<vmem>>, vector<16x16xf32>
      tpu.vector_store %arg21[%c0_33, %c0_34], %40 {strides = array<i32>} : memref<16x16xf32, #tpu.memory_space<vmem>>, vector<16x16xf32>,
      %cst_35 = arith.constant 0.000000e+00 : f32
      %42 = vector.broadcast %cst_35 : f32 to vector<16x16xf32>
      %c0_36 = arith.constant 0 : index
      %c0_37 = arith.constant 0 : index
      %43 = vector.load %arg22[%c0_36, %c0_37] : memref<16x16xf32, #tpu.memory_space<vmem>>, vector<16x16xf32>
      tpu.vector_store %arg22[%c0_36, %c0_37], %42 {strides = array<i32>} : memref<16x16xf32, #tpu.memory_space<vmem>>, vector<16x16xf32>,
    } else {
    }
    %c0 = arith.constant 0 : index
    %c0_1 = arith.constant 0 : index
    %c0_2 = arith.constant 0 : index
    %3 = vector.load %arg2[%c0, %c0_1, %c0_2] : memref<1x16x128xbf16, #tpu.memory_space<vmem>>, vector<1x16x128xbf16>
    %4 = vector.shape_cast %3 : vector<1x16x128xbf16> to vector<16x128xbf16>
    %c0_3 = arith.constant 0 : index
    %c0_4 = arith.constant 0 : index
    %c0_5 = arith.constant 0 : index
    %5 = vector.load %arg3[%c0_3, %c0_4, %c0_5] : memref<1x16x128xbf16, #tpu.memory_space<vmem>>, vector<1x16x128xbf16>
    %6 = vector.shape_cast %5 : vector<1x16x128xbf16> to vector<16x128xbf16>
    %c0_6 = arith.constant 0 : index
    %c0_7 = arith.constant 0 : index
    %7 = vector.load %arg4[%c0_6, %c0_7] : memref<16x16xbf16, #tpu.memory_space<vmem>>, vector<16x16xbf16>
    %c0_8 = arith.constant 0 : index
    %c0_9 = arith.constant 0 : index
    %8 = vector.load %arg6[%c0_8, %c0_9] : memref<16x16xbf16, #tpu.memory_space<vmem>>, vector<16x16xbf16>
    %cst = arith.constant dense<0.000000e+00> : vector<16x128xf32>
    %9 = tpu.matmul %7, %4, %cst {dimension_numbers = #tpu.dot_dimension_numbers<[1], [0], [0], [1], [0, 0, 1, 1], [], []>} : vector<16x16xbf16>, vector<16x128xbf16>, vector<16x128xf32> -> vector<16x128xf32>
    %c0_10 = arith.constant 0 : index
    %c0_11 = arith.constant 0 : index
    %10 = vector.load %arg5[%c0_10, %c0_11] : memref<16x1xf32, #tpu.memory_space<vmem>>, vector<16x1xf32>
    %11 = vector.broadcast %10 : vector<16x1xf32> to vector<16x128xf32>
    %12 = arith.addf %9, %11 : vector<16x128xf32>
    %cst_12 = arith.constant dense<0.000000e+00> : vector<16x128xf32>
    %13 = tpu.matmul %7, %6, %cst_12 {dimension_numbers = #tpu.dot_dimension_numbers<[1], [0], [0], [1], [0, 0, 1, 1], [], []>} : vector<16x16xbf16>, vector<16x128xbf16>, vector<16x128xf32> -> vector<16x128xf32>
    %c0_13 = arith.constant 0 : index
    %c0_14 = arith.constant 0 : index
    %14 = vector.load %arg5[%c0_13, %c0_14] : memref<16x1xf32, #tpu.memory_space<vmem>>, vector<16x1xf32>
    %15 = vector.broadcast %14 : vector<16x1xf32> to vector<16x128xf32>
    %16 = arith.addf %13, %15 : vector<16x128xf32>
    %cst_15 = arith.constant dense<0.000000e+00> : vector<16x128xf32>
    %17 = tpu.matmul %8, %4, %cst_15 {dimension_numbers = #tpu.dot_dimension_numbers<[1], [0], [0], [1], [0, 0, 1, 1], [], []>} : vector<16x16xbf16>, vector<16x128xbf16>, vector<16x128xf32> -> vector<16x128xf32>
    %c0_16 = arith.constant 0 : index
    %c0_17 = arith.constant 0 : index
    %18 = vector.load %arg7[%c0_16, %c0_17] : memref<16x1xf32, #tpu.memory_space<vmem>>, vector<16x1xf32>
    %19 = vector.broadcast %18 : vector<16x1xf32> to vector<16x128xf32>
    %20 = arith.addf %17, %19 : vector<16x128xf32>
    %cst_18 = arith.constant dense<0.000000e+00> : vector<16x128xf32>
    %21 = tpu.matmul %8, %6, %cst_18 {dimension_numbers = #tpu.dot_dimension_numbers<[1], [0], [0], [1], [0, 0, 1, 1], [], []>} : vector<16x16xbf16>, vector<16x128xbf16>, vector<16x128xf32> -> vector<16x128xf32>
    %c0_19 = arith.constant 0 : index
    %c0_20 = arith.constant 0 : index
    %22 = vector.load %arg7[%c0_19, %c0_20] : memref<16x1xf32, #tpu.memory_space<vmem>>, vector<16x1xf32>
    %23 = vector.broadcast %22 : vector<16x1xf32> to vector<16x128xf32>
    %24 = arith.addf %21, %23 : vector<16x128xf32>
    %c0_21 = arith.constant 0 : index
    %c0_22 = arith.constant 0 : index
    %25 = vector.load %arg21[%c0_21, %c0_22] : memref<16x16xf32, #tpu.memory_space<vmem>>, vector<16x16xf32>
    %26 = arith.truncf %12 : vector<16x128xf32> to vector<16x128xbf16>
    %27 = arith.truncf %24 : vector<16x128xf32> to vector<16x128xbf16>
    %cst_23 = arith.constant dense<0.000000e+00> : vector<16x16xf32>
    %28 = tpu.matmul %26, %27, %cst_23 {dimension_numbers = #tpu.dot_dimension_numbers<[1], [1], [0], [0], [0, 0, 1, 0], [], []>} : vector<16x128xbf16>, vector<16x128xbf16>, vector<16x16xf32> -> vector<16x16xf32>
    %29 = arith.addf %25, %28 : vector<16x16xf32>
    %c0_24 = arith.constant 0 : index
    %c0_25 = arith.constant 0 : index
    %30 = vector.load %arg21[%c0_24, %c0_25] : memref<16x16xf32, #tpu.memory_space<vmem>>, vector<16x16xf32>
    tpu.vector_store %arg21[%c0_24, %c0_25], %29 {strides = array<i32>} : memref<16x16xf32, #tpu.memory_space<vmem>>, vector<16x16xf32>,
    %c0_26 = arith.constant 0 : index
    %c0_27 = arith.constant 0 : index
    %31 = vector.load %arg22[%c0_26, %c0_27] : memref<16x16xf32, #tpu.memory_space<vmem>>, vector<16x16xf32>
    %32 = arith.truncf %16 : vector<16x128xf32> to vector<16x128xbf16>
    %33 = arith.truncf %20 : vector<16x128xf32> to vector<16x128xbf16>
    %cst_28 = arith.constant dense<0.000000e+00> : vector<16x16xf32>
    %34 = tpu.matmul %32, %33, %cst_28 {dimension_numbers = #tpu.dot_dimension_numbers<[1], [1], [0], [0], [0, 0, 1, 0], [], []>} : vector<16x128xbf16>, vector<16x128xbf16>, vector<16x16xf32> -> vector<16x16xf32>
    %35 = arith.addf %31, %34 : vector<16x16xf32>
    %c0_29 = arith.constant 0 : index
    %c0_30 = arith.constant 0 : index
    %36 = vector.load %arg22[%c0_29, %c0_30] : memref<16x16xf32, #tpu.memory_space<vmem>>, vector<16x16xf32>
    tpu.vector_store %arg22[%c0_29, %c0_30], %35 {strides = array<i32>} : memref<16x16xf32, #tpu.memory_space<vmem>>, vector<16x16xf32>,
    %c1_i32 = arith.constant 1 : i32
    %37 = arith.cmpi eq, %arg1, %c1_i32 : i32
    %38 = arith.extui %37 : i1 to i32
    %c0_i32_31 = arith.constant 0 : i32
    %39 = arith.cmpi ne, %38, %c0_i32_31 : i32
    scf.if %39 {
      %c0_32 = arith.constant 0 : index
      %c0_33 = arith.constant 0 : index
      %40 = vector.load %arg21[%c0_32, %c0_33] : memref<16x16xf32, #tpu.memory_space<vmem>>, vector<16x16xf32>
      %c0_34 = arith.constant 0 : index
      %c0_35 = arith.constant 0 : index
      %41 = vector.load %arg22[%c0_34, %c0_35] : memref<16x16xf32, #tpu.memory_space<vmem>>, vector<16x16xf32>
      %c0_36 = arith.constant 0 : index
      %c0_37 = arith.constant 0 : index
      %42 = vector.load %arg8[%c0_36, %c0_37] : memref<16x16xf32, #tpu.memory_space<vmem>>, vector<16x16xf32>
      %cst_38 = arith.constant dense<0.000000e+00> : vector<16x16xf32>
      %43 = tpu.matmul %40, %42, %cst_38 {dimension_numbers = #tpu.dot_dimension_numbers<[1], [1], [0], [0], [0, 0, 1, 0], [], []>} : vector<16x16xf32>, vector<16x16xf32>, vector<16x16xf32> -> vector<16x16xf32>
      %c0_39 = arith.constant 0 : index
      %c0_40 = arith.constant 0 : index
      %44 = vector.load %arg9[%c0_39, %c0_40] : memref<16x16xf32, #tpu.memory_space<vmem>>, vector<16x16xf32>
      %cst_41 = arith.constant dense<0.000000e+00> : vector<16x16xf32>
      %45 = tpu.matmul %41, %44, %cst_41 {dimension_numbers = #tpu.dot_dimension_numbers<[1], [1], [0], [0], [0, 0, 1, 0], [], []>} : vector<16x16xf32>, vector<16x16xf32>, vector<16x16xf32> -> vector<16x16xf32>
      %46 = arith.addf %43, %45 : vector<16x16xf32>
      %c0_42 = arith.constant 0 : index
      %c0_43 = arith.constant 0 : index
      %47 = vector.load %arg12[%c0_42, %c0_43] : memref<1x16xf32, #tpu.memory_space<vmem>>, vector<1x16xf32>
      %48 = vector.broadcast %47 : vector<1x16xf32> to vector<16x16xf32>
      %49 = arith.addf %46, %48 : vector<16x16xf32>
      %c0_44 = arith.constant 0 : index
      %c0_45 = arith.constant 0 : index
      %50 = vector.load %arg10[%c0_44, %c0_45] : memref<16x16xf32, #tpu.memory_space<vmem>>, vector<16x16xf32>
      %cst_46 = arith.constant dense<0.000000e+00> : vector<16x16xf32>
      %51 = tpu.matmul %40, %50, %cst_46 {dimension_numbers = #tpu.dot_dimension_numbers<[1], [1], [0], [0], [0, 0, 1, 0], [], []>} : vector<16x16xf32>, vector<16x16xf32>, vector<16x16xf32> -> vector<16x16xf32>
      %c0_47 = arith.constant 0 : index
      %c0_48 = arith.constant 0 : index
      %52 = vector.load %arg11[%c0_47, %c0_48] : memref<16x16xf32, #tpu.memory_space<vmem>>, vector<16x16xf32>
      %cst_49 = arith.constant dense<0.000000e+00> : vector<16x16xf32>
      %53 = tpu.matmul %41, %52, %cst_49 {dimension_numbers = #tpu.dot_dimension_numbers<[1], [1], [0], [0], [0, 0, 1, 0], [], []>} : vector<16x16xf32>, vector<16x16xf32>, vector<16x16xf32> -> vector<16x16xf32>
      %54 = arith.addf %51, %53 : vector<16x16xf32>
      %c0_50 = arith.constant 0 : index
      %c0_51 = arith.constant 0 : index
      %55 = vector.load %arg13[%c0_50, %c0_51] : memref<1x16xf32, #tpu.memory_space<vmem>>, vector<1x16xf32>
      %56 = vector.broadcast %55 : vector<1x16xf32> to vector<16x16xf32>
      %57 = arith.addf %54, %56 : vector<16x16xf32>
      %58 = arith.addf %49, %40 : vector<16x16xf32>
      %cst_52 = arith.constant 0.000000e+00 : f32
      %59 = vector.broadcast %cst_52 : f32 to vector<16x16xf32>
      %60 = arith.maximumf %58, %59 : vector<16x16xf32>
      %61 = arith.addf %57, %41 : vector<16x16xf32>
      %cst_53 = arith.constant 0.000000e+00 : f32
      %62 = vector.broadcast %cst_53 : f32 to vector<16x16xf32>
      %63 = arith.maximumf %61, %62 : vector<16x16xf32>
      %c0_54 = arith.constant 0 : index
      %c0_55 = arith.constant 0 : index
      %64 = vector.load %arg14[%c0_54, %c0_55] : memref<16x16xf32, #tpu.memory_space<vmem>>, vector<16x16xf32>
      %cst_56 = arith.constant dense<0.000000e+00> : vector<16x16xf32>
      %65 = tpu.matmul %64, %60, %cst_56 {dimension_numbers = #tpu.dot_dimension_numbers<[1], [0], [0], [1], [0, 0, 1, 1], [], []>} : vector<16x16xf32>, vector<16x16xf32>, vector<16x16xf32> -> vector<16x16xf32>
      %cst_57 = arith.constant dense<0.000000e+00> : vector<16x16xf32>
      %66 = tpu.matmul %64, %63, %cst_57 {dimension_numbers = #tpu.dot_dimension_numbers<[1], [0], [0], [1], [0, 0, 1, 1], [], []>} : vector<16x16xf32>, vector<16x16xf32>, vector<16x16xf32> -> vector<16x16xf32>
      %c0_58 = arith.constant 0 : index
      %c0_59 = arith.constant 0 : index
      %67 = vector.load %arg15[%c0_58, %c0_59] : memref<16x16xf32, #tpu.memory_space<vmem>>, vector<16x16xf32>
      %cst_60 = arith.constant dense<0.000000e+00> : vector<16x16xf32>
      %68 = tpu.matmul %65, %67, %cst_60 {dimension_numbers = #tpu.dot_dimension_numbers<[1], [1], [0], [0], [0, 0, 1, 0], [], []>} : vector<16x16xf32>, vector<16x16xf32>, vector<16x16xf32> -> vector<16x16xf32>
      %c0_61 = arith.constant 0 : index
      %c0_62 = arith.constant 0 : index
      %69 = vector.load %arg16[%c0_61, %c0_62] : memref<16x16xf32, #tpu.memory_space<vmem>>, vector<16x16xf32>
      %cst_63 = arith.constant dense<0.000000e+00> : vector<16x16xf32>
      %70 = tpu.matmul %66, %69, %cst_63 {dimension_numbers = #tpu.dot_dimension_numbers<[1], [1], [0], [0], [0, 0, 1, 0], [], []>} : vector<16x16xf32>, vector<16x16xf32>, vector<16x16xf32> -> vector<16x16xf32>
      %71 = arith.addf %68, %70 : vector<16x16xf32>
      %c0_64 = arith.constant 0 : index
      %c0_65 = arith.constant 0 : index
      %72 = vector.load %arg17[%c0_64, %c0_65] : memref<1x16xf32, #tpu.memory_space<vmem>>, vector<1x16xf32>
      %73 = vector.broadcast %72 : vector<1x16xf32> to vector<16x16xf32>
      %74 = arith.addf %71, %73 : vector<16x16xf32>
      %c0_66 = arith.constant 0 : index
      %c0_67 = arith.constant 0 : index
      %75 = vector.load %arg18[%c0_66, %c0_67] : memref<16x16xf32, #tpu.memory_space<vmem>>, vector<16x16xf32>
      %cst_68 = arith.constant dense<0.000000e+00> : vector<16x16xf32>
      %76 = tpu.matmul %75, %74, %cst_68 {dimension_numbers = #tpu.dot_dimension_numbers<[1], [0], [0], [1], [0, 0, 1, 1], [], []>} : vector<16x16xf32>, vector<16x16xf32>, vector<16x16xf32> -> vector<16x16xf32>
      %c0_69 = arith.constant 0 : index
      %c0_70 = arith.constant 0 : index
      %77 = vector.load %arg19[%c0_69, %c0_70] : memref<16x1xf32, #tpu.memory_space<vmem>>, vector<16x1xf32>
      %78 = vector.broadcast %77 : vector<16x1xf32> to vector<16x16xf32>
      %79 = arith.mulf %76, %78 : vector<16x16xf32>
      %c0_71 = arith.constant 0 : index
      %c0_72 = arith.constant 0 : index
      %c0_73 = arith.constant 0 : index
      %80 = vector.load %arg20[%c0_71, %c0_72, %c0_73] : memref<1x16x16xf32, #tpu.memory_space<vmem>>, vector<1x16x16xf32>
      %81 = vector.shape_cast %80 : vector<1x16x16xf32> to vector<16x16xf32>
      %82 = vector.shape_cast %79 : vector<16x16xf32> to vector<1x16x16xf32>
      tpu.vector_store %arg20[%c0_71, %c0_72, %c0_73], %82 {strides = array<i32>} : memref<1x16x16xf32, #tpu.memory_space<vmem>>, vector<1x16x16xf32>,
    } else {
    }
    return
  }
  func.func @transform_0(%arg0: i32, %arg1: i32) -> (i32, i32, i32) {
    %c0_i32 = arith.constant 0 : i32
    %c0_i32_0 = arith.constant 0 : i32
    return %arg0, %c0_i32, %arg1 : i32, i32, i32
  }
  func.func @transform_1(%arg0: i32, %arg1: i32) -> (i32, i32, i32) {
    %c0_i32 = arith.constant 0 : i32
    %c0_i32_0 = arith.constant 0 : i32
    return %arg0, %c0_i32, %arg1 : i32, i32, i32
  }
  func.func @transform_2(%arg0: i32, %arg1: i32) -> (i32, i32) {
    %c0_i32 = arith.constant 0 : i32
    %c0_i32_0 = arith.constant 0 : i32
    %c0_i32_1 = arith.constant 0 : i32
    return %c0_i32, %c0_i32_0 : i32, i32
  }
  func.func @transform_3(%arg0: i32, %arg1: i32) -> (i32, i32) {
    %c0_i32 = arith.constant 0 : i32
    %c0_i32_0 = arith.constant 0 : i32
    %c0_i32_1 = arith.constant 0 : i32
    return %c0_i32, %c0_i32_0 : i32, i32
  }
  func.func @transform_4(%arg0: i32, %arg1: i32) -> (i32, i32) {
    %c0_i32 = arith.constant 0 : i32
    %c0_i32_0 = arith.constant 0 : i32
    %c0_i32_1 = arith.constant 0 : i32
    return %c0_i32, %c0_i32_0 : i32, i32
  }
  func.func @transform_5(%arg0: i32, %arg1: i32) -> (i32, i32) {
    %c0_i32 = arith.constant 0 : i32
    %c0_i32_0 = arith.constant 0 : i32
    %c0_i32_1 = arith.constant 0 : i32
    return %c0_i32, %c0_i32_0 : i32, i32
  }
  func.func @transform_6(%arg0: i32, %arg1: i32) -> (i32, i32) {
    %c0_i32 = arith.constant 0 : i32
    %c0_i32_0 = arith.constant 0 : i32
    %c0_i32_1 = arith.constant 0 : i32
    return %c0_i32, %c0_i32_0 : i32, i32
  }
  func.func @transform_7(%arg0: i32, %arg1: i32) -> (i32, i32) {
    %c0_i32 = arith.constant 0 : i32
    %c0_i32_0 = arith.constant 0 : i32
    %c0_i32_1 = arith.constant 0 : i32
    return %c0_i32, %c0_i32_0 : i32, i32
  }
  func.func @transform_8(%arg0: i32, %arg1: i32) -> (i32, i32) {
    %c0_i32 = arith.constant 0 : i32
    %c0_i32_0 = arith.constant 0 : i32
    %c0_i32_1 = arith.constant 0 : i32
    return %c0_i32, %c0_i32_0 : i32, i32
  }
  func.func @transform_9(%arg0: i32, %arg1: i32) -> (i32, i32) {
    %c0_i32 = arith.constant 0 : i32
    %c0_i32_0 = arith.constant 0 : i32
    %c0_i32_1 = arith.constant 0 : i32
    return %c0_i32, %c0_i32_0 : i32, i32
  }
  func.func @transform_10(%arg0: i32, %arg1: i32) -> (i32, i32) {
    %c0_i32 = arith.constant 0 : i32
    %c0_i32_0 = arith.constant 0 : i32
    %c0_i32_1 = arith.constant 0 : i32
    return %c0_i32, %c0_i32_0 : i32, i32
  }
  func.func @transform_11(%arg0: i32, %arg1: i32) -> (i32, i32) {
    %c0_i32 = arith.constant 0 : i32
    %c0_i32_0 = arith.constant 0 : i32
    %c0_i32_1 = arith.constant 0 : i32
    return %c0_i32, %c0_i32_0 : i32, i32
  }
  func.func @transform_12(%arg0: i32, %arg1: i32) -> (i32, i32) {
    %c0_i32 = arith.constant 0 : i32
    %c0_i32_0 = arith.constant 0 : i32
    %c0_i32_1 = arith.constant 0 : i32
    return %c0_i32, %c0_i32_0 : i32, i32
  }
  func.func @transform_13(%arg0: i32, %arg1: i32) -> (i32, i32) {
    %c0_i32 = arith.constant 0 : i32
    %c0_i32_0 = arith.constant 0 : i32
    %c0_i32_1 = arith.constant 0 : i32
    return %c0_i32, %c0_i32_0 : i32, i32
  }
  func.func @transform_14(%arg0: i32, %arg1: i32) -> (i32, i32) {
    %c0_i32 = arith.constant 0 : i32
    %c0_i32_0 = arith.constant 0 : i32
    %c0_i32_1 = arith.constant 0 : i32
    return %c0_i32, %c0_i32_0 : i32, i32
  }
  func.func @transform_15(%arg0: i32, %arg1: i32) -> (i32, i32) {
    %c0_i32 = arith.constant 0 : i32
    %c0_i32_0 = arith.constant 0 : i32
    %c0_i32_1 = arith.constant 0 : i32
    return %c0_i32, %c0_i32_0 : i32, i32
  }
  func.func @transform_16(%arg0: i32, %arg1: i32) -> (i32, i32) {
    %c0_i32 = arith.constant 0 : i32
    %c0_i32_0 = arith.constant 0 : i32
    %c0_i32_1 = arith.constant 0 : i32
    return %c0_i32, %c0_i32_0 : i32, i32
  }
  func.func @transform_17(%arg0: i32, %arg1: i32) -> (i32, i32) {
    %c0_i32 = arith.constant 0 : i32
    %c0_i32_0 = arith.constant 0 : i32
    %c0_i32_1 = arith.constant 0 : i32
    return %c0_i32, %c0_i32_0 : i32, i32
  }
  func.func @transform_18(%arg0: i32, %arg1: i32) -> (i32, i32, i32) {
    %c0_i32 = arith.constant 0 : i32
    %c0_i32_0 = arith.constant 0 : i32
    %c0_i32_1 = arith.constant 0 : i32
    return %arg0, %c0_i32, %c0_i32_0 : i32, i32, i32
  }
}

module attributes {stable_mosaic.version = 11 : i64} {
  func.func @_pool_gcn_kernel(%arg0: i32, %arg1: i32, %arg2: memref<1x16x128xbf16, #tpu.memory_space<vmem>>, %arg3: memref<1x16x128xbf16, #tpu.memory_space<vmem>>, %arg4: memref<16x16xbf16, #tpu.memory_space<vmem>>, %arg5: memref<16x1xf32, #tpu.memory_space<vmem>>, %arg6: memref<16x16xbf16, #tpu.memory_space<vmem>>, %arg7: memref<16x1xf32, #tpu.memory_space<vmem>>, %arg8: memref<16x16xf32, #tpu.memory_space<vmem>>, %arg9: memref<16x16xf32, #tpu.memory_space<vmem>>, %arg10: memref<16x16xf32, #tpu.memory_space<vmem>>, %arg11: memref<16x16xf32, #tpu.memory_space<vmem>>, %arg12: memref<1x16xf32, #tpu.memory_space<vmem>>, %arg13: memref<1x16xf32, #tpu.memory_space<vmem>>, %arg14: memref<16x16xf32, #tpu.memory_space<vmem>>, %arg15: memref<16x16xf32, #tpu.memory_space<vmem>>, %arg16: memref<16x16xf32, #tpu.memory_space<vmem>>, %arg17: memref<1x16xf32, #tpu.memory_space<vmem>>, %arg18: memref<16x16xf32, #tpu.memory_space<vmem>>, %arg19: memref<16x1xf32, #tpu.memory_space<vmem>>, %arg20: memref<1x16x16xf32, #tpu.memory_space<vmem>>, %arg21: memref<16x16xf32, #tpu.memory_space<vmem>>, %arg22: memref<16x16xf32, #tpu.memory_space<vmem>>) attributes {dimension_semantics = [#tpu.dimension_semantics<parallel>, #tpu.dimension_semantics<arbitrary>], iteration_bounds = array<i64: 2, 2>, scalar_prefetch = 0 : i64, scratch_operands = 2 : i64, tpu.core_type = #tpu.core_type<tc>, window_params = [{transform_indices = @transform_0, window_bounds = array<i64: 1, 16, 128>}, {transform_indices = @transform_1, window_bounds = array<i64: 1, 16, 128>}, {pipeline_mode = #tpu.pipeline_mode<synchronous>, transform_indices = @transform_2, window_bounds = array<i64: 16, 16>}, {pipeline_mode = #tpu.pipeline_mode<synchronous>, transform_indices = @transform_3, window_bounds = array<i64: 16, 1>}, {pipeline_mode = #tpu.pipeline_mode<synchronous>, transform_indices = @transform_4, window_bounds = array<i64: 16, 16>}, {pipeline_mode = #tpu.pipeline_mode<synchronous>, transform_indices = @transform_5, window_bounds = array<i64: 16, 1>}, {pipeline_mode = #tpu.pipeline_mode<synchronous>, transform_indices = @transform_6, window_bounds = array<i64: 16, 16>}, {pipeline_mode = #tpu.pipeline_mode<synchronous>, transform_indices = @transform_7, window_bounds = array<i64: 16, 16>}, {pipeline_mode = #tpu.pipeline_mode<synchronous>, transform_indices = @transform_8, window_bounds = array<i64: 16, 16>}, {pipeline_mode = #tpu.pipeline_mode<synchronous>, transform_indices = @transform_9, window_bounds = array<i64: 16, 16>}, {pipeline_mode = #tpu.pipeline_mode<synchronous>, transform_indices = @transform_10, window_bounds = array<i64: 1, 16>}, {pipeline_mode = #tpu.pipeline_mode<synchronous>, transform_indices = @transform_11, window_bounds = array<i64: 1, 16>}, {pipeline_mode = #tpu.pipeline_mode<synchronous>, transform_indices = @transform_12, window_bounds = array<i64: 16, 16>}, {pipeline_mode = #tpu.pipeline_mode<synchronous>, transform_indices = @transform_13, window_bounds = array<i64: 16, 16>}, {pipeline_mode = #tpu.pipeline_mode<synchronous>, transform_indices = @transform_14, window_bounds = array<i64: 16, 16>}, {pipeline_mode = #tpu.pipeline_mode<synchronous>, transform_indices = @transform_15, window_bounds = array<i64: 1, 16>}, {pipeline_mode = #tpu.pipeline_mode<synchronous>, transform_indices = @transform_16, window_bounds = array<i64: 16, 16>}, {pipeline_mode = #tpu.pipeline_mode<synchronous>, transform_indices = @transform_17, window_bounds = array<i64: 16, 1>}, {transform_indices = @transform_18, window_bounds = array<i64: 1, 16, 16>}]} {
    %c0_i32 = arith.constant 0 : i32
    %0 = arith.cmpi eq, %arg1, %c0_i32 : i32
    %1 = arith.extui %0 : i1 to i32
    %c0_i32_0 = arith.constant 0 : i32
    %2 = arith.cmpi ne, %1, %c0_i32_0 : i32
    scf.if %2 {
      %cst_32 = arith.constant 0.000000e+00 : f32
      %40 = vector.broadcast %cst_32 : f32 to vector<16x16xf32>
      %c0_33 = arith.constant 0 : index
      %c0_34 = arith.constant 0 : index
      %41 = vector.load %arg21[%c0_33, %c0_34] : memref<16x16xf32, #tpu.memory_space<vmem>>, vector<16x16xf32>
      tpu.vector_store %arg21[%c0_33, %c0_34], %40 {strides = array<i32>} : memref<16x16xf32, #tpu.memory_space<vmem>>, vector<16x16xf32>,
      %cst_35 = arith.constant 0.000000e+00 : f32
      %42 = vector.broadcast %cst_35 : f32 to vector<16x16xf32>
      %c0_36 = arith.constant 0 : index
      %c0_37 = arith.constant 0 : index
      %43 = vector.load %arg22[%c0_36, %c0_37] : memref<16x16xf32, #tpu.memory_space<vmem>>, vector<16x16xf32>
      tpu.vector_store %arg22[%c0_36, %c0_37], %42 {strides = array<i32>} : memref<16x16xf32, #tpu.memory_space<vmem>>, vector<16x16xf32>,
    } else {
    }
    %c0 = arith.constant 0 : index
    %c0_1 = arith.constant 0 : index
    %c0_2 = arith.constant 0 : index
    %3 = vector.load %arg2[%c0, %c0_1, %c0_2] : memref<1x16x128xbf16, #tpu.memory_space<vmem>>, vector<1x16x128xbf16>
    %4 = vector.shape_cast %3 : vector<1x16x128xbf16> to vector<16x128xbf16>
    %c0_3 = arith.constant 0 : index
    %c0_4 = arith.constant 0 : index
    %c0_5 = arith.constant 0 : index
    %5 = vector.load %arg3[%c0_3, %c0_4, %c0_5] : memref<1x16x128xbf16, #tpu.memory_space<vmem>>, vector<1x16x128xbf16>
    %6 = vector.shape_cast %5 : vector<1x16x128xbf16> to vector<16x128xbf16>
    %c0_6 = arith.constant 0 : index
    %c0_7 = arith.constant 0 : index
    %7 = vector.load %arg4[%c0_6, %c0_7] : memref<16x16xbf16, #tpu.memory_space<vmem>>, vector<16x16xbf16>
    %c0_8 = arith.constant 0 : index
    %c0_9 = arith.constant 0 : index
    %8 = vector.load %arg6[%c0_8, %c0_9] : memref<16x16xbf16, #tpu.memory_space<vmem>>, vector<16x16xbf16>
    %cst = arith.constant dense<0.000000e+00> : vector<16x128xf32>
    %9 = tpu.matmul %7, %4, %cst {dimension_numbers = #tpu.dot_dimension_numbers<[1], [0], [0], [1], [0, 0, 1, 1], [], []>} : vector<16x16xbf16>, vector<16x128xbf16>, vector<16x128xf32> -> vector<16x128xf32>
    %c0_10 = arith.constant 0 : index
    %c0_11 = arith.constant 0 : index
    %10 = vector.load %arg5[%c0_10, %c0_11] : memref<16x1xf32, #tpu.memory_space<vmem>>, vector<16x1xf32>
    %11 = vector.broadcast %10 : vector<16x1xf32> to vector<16x128xf32>
    %12 = arith.addf %9, %11 : vector<16x128xf32>
    %cst_12 = arith.constant dense<0.000000e+00> : vector<16x128xf32>
    %13 = tpu.matmul %7, %6, %cst_12 {dimension_numbers = #tpu.dot_dimension_numbers<[1], [0], [0], [1], [0, 0, 1, 1], [], []>} : vector<16x16xbf16>, vector<16x128xbf16>, vector<16x128xf32> -> vector<16x128xf32>
    %c0_13 = arith.constant 0 : index
    %c0_14 = arith.constant 0 : index
    %14 = vector.load %arg5[%c0_13, %c0_14] : memref<16x1xf32, #tpu.memory_space<vmem>>, vector<16x1xf32>
    %15 = vector.broadcast %14 : vector<16x1xf32> to vector<16x128xf32>
    %16 = arith.addf %13, %15 : vector<16x128xf32>
    %cst_15 = arith.constant dense<0.000000e+00> : vector<16x128xf32>
    %17 = tpu.matmul %8, %4, %cst_15 {dimension_numbers = #tpu.dot_dimension_numbers<[1], [0], [0], [1], [0, 0, 1, 1], [], []>} : vector<16x16xbf16>, vector<16x128xbf16>, vector<16x128xf32> -> vector<16x128xf32>
    %c0_16 = arith.constant 0 : index
    %c0_17 = arith.constant 0 : index
    %18 = vector.load %arg7[%c0_16, %c0_17] : memref<16x1xf32, #tpu.memory_space<vmem>>, vector<16x1xf32>
    %19 = vector.broadcast %18 : vector<16x1xf32> to vector<16x128xf32>
    %20 = arith.addf %17, %19 : vector<16x128xf32>
    %cst_18 = arith.constant dense<0.000000e+00> : vector<16x128xf32>
    %21 = tpu.matmul %8, %6, %cst_18 {dimension_numbers = #tpu.dot_dimension_numbers<[1], [0], [0], [1], [0, 0, 1, 1], [], []>} : vector<16x16xbf16>, vector<16x128xbf16>, vector<16x128xf32> -> vector<16x128xf32>
    %c0_19 = arith.constant 0 : index
    %c0_20 = arith.constant 0 : index
    %22 = vector.load %arg7[%c0_19, %c0_20] : memref<16x1xf32, #tpu.memory_space<vmem>>, vector<16x1xf32>
    %23 = vector.broadcast %22 : vector<16x1xf32> to vector<16x128xf32>
    %24 = arith.addf %21, %23 : vector<16x128xf32>
    %c0_21 = arith.constant 0 : index
    %c0_22 = arith.constant 0 : index
    %25 = vector.load %arg21[%c0_21, %c0_22] : memref<16x16xf32, #tpu.memory_space<vmem>>, vector<16x16xf32>
    %26 = arith.truncf %12 : vector<16x128xf32> to vector<16x128xbf16>
    %27 = arith.truncf %24 : vector<16x128xf32> to vector<16x128xbf16>
    %cst_23 = arith.constant dense<0.000000e+00> : vector<16x16xf32>
    %28 = tpu.matmul %26, %27, %cst_23 {dimension_numbers = #tpu.dot_dimension_numbers<[1], [1], [0], [0], [0, 0, 1, 0], [], []>} : vector<16x128xbf16>, vector<16x128xbf16>, vector<16x16xf32> -> vector<16x16xf32>
    %29 = arith.addf %25, %28 : vector<16x16xf32>
    %c0_24 = arith.constant 0 : index
    %c0_25 = arith.constant 0 : index
    %30 = vector.load %arg21[%c0_24, %c0_25] : memref<16x16xf32, #tpu.memory_space<vmem>>, vector<16x16xf32>
    tpu.vector_store %arg21[%c0_24, %c0_25], %29 {strides = array<i32>} : memref<16x16xf32, #tpu.memory_space<vmem>>, vector<16x16xf32>,
    %c0_26 = arith.constant 0 : index
    %c0_27 = arith.constant 0 : index
    %31 = vector.load %arg22[%c0_26, %c0_27] : memref<16x16xf32, #tpu.memory_space<vmem>>, vector<16x16xf32>
    %32 = arith.truncf %16 : vector<16x128xf32> to vector<16x128xbf16>
    %33 = arith.truncf %20 : vector<16x128xf32> to vector<16x128xbf16>
    %cst_28 = arith.constant dense<0.000000e+00> : vector<16x16xf32>
    %34 = tpu.matmul %32, %33, %cst_28 {dimension_numbers = #tpu.dot_dimension_numbers<[1], [1], [0], [0], [0, 0, 1, 0], [], []>} : vector<16x128xbf16>, vector<16x128xbf16>, vector<16x16xf32> -> vector<16x16xf32>
    %35 = arith.addf %31, %34 : vector<16x16xf32>
    %c0_29 = arith.constant 0 : index
    %c0_30 = arith.constant 0 : index
    %36 = vector.load %arg22[%c0_29, %c0_30] : memref<16x16xf32, #tpu.memory_space<vmem>>, vector<16x16xf32>
    tpu.vector_store %arg22[%c0_29, %c0_30], %35 {strides = array<i32>} : memref<16x16xf32, #tpu.memory_space<vmem>>, vector<16x16xf32>,
    %c1_i32 = arith.constant 1 : i32
    %37 = arith.cmpi eq, %arg1, %c1_i32 : i32
    %38 = arith.extui %37 : i1 to i32
    %c0_i32_31 = arith.constant 0 : i32
    %39 = arith.cmpi ne, %38, %c0_i32_31 : i32
    scf.if %39 {
      %c0_32 = arith.constant 0 : index
      %c0_33 = arith.constant 0 : index
      %40 = vector.load %arg21[%c0_32, %c0_33] : memref<16x16xf32, #tpu.memory_space<vmem>>, vector<16x16xf32>
      %c0_34 = arith.constant 0 : index
      %c0_35 = arith.constant 0 : index
      %41 = vector.load %arg22[%c0_34, %c0_35] : memref<16x16xf32, #tpu.memory_space<vmem>>, vector<16x16xf32>
      %c0_36 = arith.constant 0 : index
      %c0_37 = arith.constant 0 : index
      %42 = vector.load %arg8[%c0_36, %c0_37] : memref<16x16xf32, #tpu.memory_space<vmem>>, vector<16x16xf32>
      %cst_38 = arith.constant dense<0.000000e+00> : vector<16x16xf32>
      %43 = tpu.matmul %40, %42, %cst_38 {dimension_numbers = #tpu.dot_dimension_numbers<[1], [1], [0], [0], [0, 0, 1, 0], [], []>} : vector<16x16xf32>, vector<16x16xf32>, vector<16x16xf32> -> vector<16x16xf32>
      %c0_39 = arith.constant 0 : index
      %c0_40 = arith.constant 0 : index
      %44 = vector.load %arg9[%c0_39, %c0_40] : memref<16x16xf32, #tpu.memory_space<vmem>>, vector<16x16xf32>
      %cst_41 = arith.constant dense<0.000000e+00> : vector<16x16xf32>
      %45 = tpu.matmul %41, %44, %cst_41 {dimension_numbers = #tpu.dot_dimension_numbers<[1], [1], [0], [0], [0, 0, 1, 0], [], []>} : vector<16x16xf32>, vector<16x16xf32>, vector<16x16xf32> -> vector<16x16xf32>
      %46 = arith.addf %43, %45 : vector<16x16xf32>
      %c0_42 = arith.constant 0 : index
      %c0_43 = arith.constant 0 : index
      %47 = vector.load %arg12[%c0_42, %c0_43] : memref<1x16xf32, #tpu.memory_space<vmem>>, vector<1x16xf32>
      %48 = vector.broadcast %47 : vector<1x16xf32> to vector<16x16xf32>
      %49 = arith.addf %46, %48 : vector<16x16xf32>
      %c0_44 = arith.constant 0 : index
      %c0_45 = arith.constant 0 : index
      %50 = vector.load %arg10[%c0_44, %c0_45] : memref<16x16xf32, #tpu.memory_space<vmem>>, vector<16x16xf32>
      %cst_46 = arith.constant dense<0.000000e+00> : vector<16x16xf32>
      %51 = tpu.matmul %40, %50, %cst_46 {dimension_numbers = #tpu.dot_dimension_numbers<[1], [1], [0], [0], [0, 0, 1, 0], [], []>} : vector<16x16xf32>, vector<16x16xf32>, vector<16x16xf32> -> vector<16x16xf32>
      %c0_47 = arith.constant 0 : index
      %c0_48 = arith.constant 0 : index
      %52 = vector.load %arg11[%c0_47, %c0_48] : memref<16x16xf32, #tpu.memory_space<vmem>>, vector<16x16xf32>
      %cst_49 = arith.constant dense<0.000000e+00> : vector<16x16xf32>
      %53 = tpu.matmul %41, %52, %cst_49 {dimension_numbers = #tpu.dot_dimension_numbers<[1], [1], [0], [0], [0, 0, 1, 0], [], []>} : vector<16x16xf32>, vector<16x16xf32>, vector<16x16xf32> -> vector<16x16xf32>
      %54 = arith.addf %51, %53 : vector<16x16xf32>
      %c0_50 = arith.constant 0 : index
      %c0_51 = arith.constant 0 : index
      %55 = vector.load %arg13[%c0_50, %c0_51] : memref<1x16xf32, #tpu.memory_space<vmem>>, vector<1x16xf32>
      %56 = vector.broadcast %55 : vector<1x16xf32> to vector<16x16xf32>
      %57 = arith.addf %54, %56 : vector<16x16xf32>
      %58 = arith.addf %49, %40 : vector<16x16xf32>
      %cst_52 = arith.constant 0.000000e+00 : f32
      %59 = vector.broadcast %cst_52 : f32 to vector<16x16xf32>
      %60 = arith.maximumf %58, %59 : vector<16x16xf32>
      %61 = arith.addf %57, %41 : vector<16x16xf32>
      %cst_53 = arith.constant 0.000000e+00 : f32
      %62 = vector.broadcast %cst_53 : f32 to vector<16x16xf32>
      %63 = arith.maximumf %61, %62 : vector<16x16xf32>
      %c0_54 = arith.constant 0 : index
      %c0_55 = arith.constant 0 : index
      %64 = vector.load %arg14[%c0_54, %c0_55] : memref<16x16xf32, #tpu.memory_space<vmem>>, vector<16x16xf32>
      %cst_56 = arith.constant dense<0.000000e+00> : vector<16x16xf32>
      %65 = tpu.matmul %64, %60, %cst_56 {dimension_numbers = #tpu.dot_dimension_numbers<[1], [0], [0], [1], [0, 0, 1, 1], [], []>} : vector<16x16xf32>, vector<16x16xf32>, vector<16x16xf32> -> vector<16x16xf32>
      %cst_57 = arith.constant dense<0.000000e+00> : vector<16x16xf32>
      %66 = tpu.matmul %64, %63, %cst_57 {dimension_numbers = #tpu.dot_dimension_numbers<[1], [0], [0], [1], [0, 0, 1, 1], [], []>} : vector<16x16xf32>, vector<16x16xf32>, vector<16x16xf32> -> vector<16x16xf32>
      %c0_58 = arith.constant 0 : index
      %c0_59 = arith.constant 0 : index
      %67 = vector.load %arg15[%c0_58, %c0_59] : memref<16x16xf32, #tpu.memory_space<vmem>>, vector<16x16xf32>
      %cst_60 = arith.constant dense<0.000000e+00> : vector<16x16xf32>
      %68 = tpu.matmul %65, %67, %cst_60 {dimension_numbers = #tpu.dot_dimension_numbers<[1], [1], [0], [0], [0, 0, 1, 0], [], []>} : vector<16x16xf32>, vector<16x16xf32>, vector<16x16xf32> -> vector<16x16xf32>
      %c0_61 = arith.constant 0 : index
      %c0_62 = arith.constant 0 : index
      %69 = vector.load %arg16[%c0_61, %c0_62] : memref<16x16xf32, #tpu.memory_space<vmem>>, vector<16x16xf32>
      %cst_63 = arith.constant dense<0.000000e+00> : vector<16x16xf32>
      %70 = tpu.matmul %66, %69, %cst_63 {dimension_numbers = #tpu.dot_dimension_numbers<[1], [1], [0], [0], [0, 0, 1, 0], [], []>} : vector<16x16xf32>, vector<16x16xf32>, vector<16x16xf32> -> vector<16x16xf32>
      %71 = arith.addf %68, %70 : vector<16x16xf32>
      %c0_64 = arith.constant 0 : index
      %c0_65 = arith.constant 0 : index
      %72 = vector.load %arg17[%c0_64, %c0_65] : memref<1x16xf32, #tpu.memory_space<vmem>>, vector<1x16xf32>
      %73 = vector.broadcast %72 : vector<1x16xf32> to vector<16x16xf32>
      %74 = arith.addf %71, %73 : vector<16x16xf32>
      %c0_66 = arith.constant 0 : index
      %c0_67 = arith.constant 0 : index
      %75 = vector.load %arg18[%c0_66, %c0_67] : memref<16x16xf32, #tpu.memory_space<vmem>>, vector<16x16xf32>
      %cst_68 = arith.constant dense<0.000000e+00> : vector<16x16xf32>
      %76 = tpu.matmul %75, %74, %cst_68 {dimension_numbers = #tpu.dot_dimension_numbers<[1], [0], [0], [1], [0, 0, 1, 1], [], []>} : vector<16x16xf32>, vector<16x16xf32>, vector<16x16xf32> -> vector<16x16xf32>
      %c0_69 = arith.constant 0 : index
      %c0_70 = arith.constant 0 : index
      %77 = vector.load %arg19[%c0_69, %c0_70] : memref<16x1xf32, #tpu.memory_space<vmem>>, vector<16x1xf32>
      %78 = vector.broadcast %77 : vector<16x1xf32> to vector<16x16xf32>
      %79 = arith.mulf %76, %78 : vector<16x16xf32>
      %c0_71 = arith.constant 0 : index
      %c0_72 = arith.constant 0 : index
      %c0_73 = arith.constant 0 : index
      %80 = vector.load %arg20[%c0_71, %c0_72, %c0_73] : memref<1x16x16xf32, #tpu.memory_space<vmem>>, vector<1x16x16xf32>
      %81 = vector.shape_cast %80 : vector<1x16x16xf32> to vector<16x16xf32>
      %82 = vector.shape_cast %79 : vector<16x16xf32> to vector<1x16x16xf32>
      tpu.vector_store %arg20[%c0_71, %c0_72, %c0_73], %82 {strides = array<i32>} : memref<1x16x16xf32, #tpu.memory_space<vmem>>, vector<1x16x16xf32>,
    } else {
    }
    return
  }
  func.func @transform_0(%arg0: i32, %arg1: i32) -> (i32, i32, i32) {
    %c0_i32 = arith.constant 0 : i32
    %c0_i32_0 = arith.constant 0 : i32
    return %arg0, %c0_i32, %arg1 : i32, i32, i32
  }
  func.func @transform_1(%arg0: i32, %arg1: i32) -> (i32, i32, i32) {
    %c0_i32 = arith.constant 0 : i32
    %c0_i32_0 = arith.constant 0 : i32
    return %arg0, %c0_i32, %arg1 : i32, i32, i32
  }
  func.func @transform_2(%arg0: i32, %arg1: i32) -> (i32, i32) {
    %c0_i32 = arith.constant 0 : i32
    %c0_i32_0 = arith.constant 0 : i32
    %c0_i32_1 = arith.constant 0 : i32
    return %c0_i32, %c0_i32_0 : i32, i32
  }
  func.func @transform_3(%arg0: i32, %arg1: i32) -> (i32, i32) {
    %c0_i32 = arith.constant 0 : i32
    %c0_i32_0 = arith.constant 0 : i32
    %c0_i32_1 = arith.constant 0 : i32
    return %c0_i32, %c0_i32_0 : i32, i32
  }
  func.func @transform_4(%arg0: i32, %arg1: i32) -> (i32, i32) {
    %c0_i32 = arith.constant 0 : i32
    %c0_i32_0 = arith.constant 0 : i32
    %c0_i32_1 = arith.constant 0 : i32
    return %c0_i32, %c0_i32_0 : i32, i32
  }
  func.func @transform_5(%arg0: i32, %arg1: i32) -> (i32, i32) {
    %c0_i32 = arith.constant 0 : i32
    %c0_i32_0 = arith.constant 0 : i32
    %c0_i32_1 = arith.constant 0 : i32
    return %c0_i32, %c0_i32_0 : i32, i32
  }
  func.func @transform_6(%arg0: i32, %arg1: i32) -> (i32, i32) {
    %c0_i32 = arith.constant 0 : i32
    %c0_i32_0 = arith.constant 0 : i32
    %c0_i32_1 = arith.constant 0 : i32
    return %c0_i32, %c0_i32_0 : i32, i32
  }
  func.func @transform_7(%arg0: i32, %arg1: i32) -> (i32, i32) {
    %c0_i32 = arith.constant 0 : i32
    %c0_i32_0 = arith.constant 0 : i32
    %c0_i32_1 = arith.constant 0 : i32
    return %c0_i32, %c0_i32_0 : i32, i32
  }
  func.func @transform_8(%arg0: i32, %arg1: i32) -> (i32, i32) {
    %c0_i32 = arith.constant 0 : i32
    %c0_i32_0 = arith.constant 0 : i32
    %c0_i32_1 = arith.constant 0 : i32
    return %c0_i32, %c0_i32_0 : i32, i32
  }
  func.func @transform_9(%arg0: i32, %arg1: i32) -> (i32, i32) {
    %c0_i32 = arith.constant 0 : i32
    %c0_i32_0 = arith.constant 0 : i32
    %c0_i32_1 = arith.constant 0 : i32
    return %c0_i32, %c0_i32_0 : i32, i32
  }
  func.func @transform_10(%arg0: i32, %arg1: i32) -> (i32, i32) {
    %c0_i32 = arith.constant 0 : i32
    %c0_i32_0 = arith.constant 0 : i32
    %c0_i32_1 = arith.constant 0 : i32
    return %c0_i32, %c0_i32_0 : i32, i32
  }
  func.func @transform_11(%arg0: i32, %arg1: i32) -> (i32, i32) {
    %c0_i32 = arith.constant 0 : i32
    %c0_i32_0 = arith.constant 0 : i32
    %c0_i32_1 = arith.constant 0 : i32
    return %c0_i32, %c0_i32_0 : i32, i32
  }
  func.func @transform_12(%arg0: i32, %arg1: i32) -> (i32, i32) {
    %c0_i32 = arith.constant 0 : i32
    %c0_i32_0 = arith.constant 0 : i32
    %c0_i32_1 = arith.constant 0 : i32
    return %c0_i32, %c0_i32_0 : i32, i32
  }
  func.func @transform_13(%arg0: i32, %arg1: i32) -> (i32, i32) {
    %c0_i32 = arith.constant 0 : i32
    %c0_i32_0 = arith.constant 0 : i32
    %c0_i32_1 = arith.constant 0 : i32
    return %c0_i32, %c0_i32_0 : i32, i32
  }
  func.func @transform_14(%arg0: i32, %arg1: i32) -> (i32, i32) {
    %c0_i32 = arith.constant 0 : i32
    %c0_i32_0 = arith.constant 0 : i32
    %c0_i32_1 = arith.constant 0 : i32
    return %c0_i32, %c0_i32_0 : i32, i32
  }
  func.func @transform_15(%arg0: i32, %arg1: i32) -> (i32, i32) {
    %c0_i32 = arith.constant 0 : i32
    %c0_i32_0 = arith.constant 0 : i32
    %c0_i32_1 = arith.constant 0 : i32
    return %c0_i32, %c0_i32_0 : i32, i32
  }
  func.func @transform_16(%arg0: i32, %arg1: i32) -> (i32, i32) {
    %c0_i32 = arith.constant 0 : i32
    %c0_i32_0 = arith.constant 0 : i32
    %c0_i32_1 = arith.constant 0 : i32
    return %c0_i32, %c0_i32_0 : i32, i32
  }
  func.func @transform_17(%arg0: i32, %arg1: i32) -> (i32, i32) {
    %c0_i32 = arith.constant 0 : i32
    %c0_i32_0 = arith.constant 0 : i32
    %c0_i32_1 = arith.constant 0 : i32
    return %c0_i32, %c0_i32_0 : i32, i32
  }
  func.func @transform_18(%arg0: i32, %arg1: i32) -> (i32, i32, i32) {
    %c0_i32 = arith.constant 0 : i32
    %c0_i32_0 = arith.constant 0 : i32
    %c0_i32_1 = arith.constant 0 : i32
    return %arg0, %c0_i32, %c0_i32_0 : i32, i32, i32
  }
}

</mosaic_0001>

<llo_original>
// kernel: tpu_custom_call.1
$region0: #{tpu_custom_call.1}
  #allocation0 [shape = 'u32[]', space=smem, size = 0x4, offset = 0x4, fixed_abs, tag = 'smem constant byte address 0x4 - core index']
  #allocation1 [shape = 'u32[144,128]{1,0:T(1,128)}', space=vmem, size = 0x12000, scoped, tag = 'internal scratch']
  #allocation2 [shape = 'f32[16,16]{1,0:T(8,128)}', space=vmem, size = 0x2000, scoped, tag = 'scratch operand']
  #allocation3 [shape = 'f32[16,16]{1,0:T(8,128)}', space=vmem, size = 0x2000, scoped, tag = 'scratch operand']
  %s0 = inlined_call_operand.vmem [shape: bf16[2,16,256], index: 0, kind: input, shape index: {}]
  %s1 = inlined_call_operand.hbm [shape: bf16[2,16,256], index: 1, kind: input, shape index: {}]
  %s2 = inlined_call_operand.hbm [shape: bf16[16,16], index: 2, kind: input, shape index: {}]
  %s3 = inlined_call_operand.vmem [shape: f32[16,1], index: 3, kind: input, shape index: {}]
  %s4 = inlined_call_operand.hbm [shape: bf16[16,16], index: 4, kind: input, shape index: {}]
  %s5 = inlined_call_operand.vmem [shape: f32[16,1], index: 5, kind: input, shape index: {}]
  %s6 = inlined_call_operand.vmem [shape: f32[16,16], index: 6, kind: input, shape index: {}]
  %s7 = inlined_call_operand.vmem [shape: f32[16,16], index: 7, kind: input, shape index: {}]
  %s8 = inlined_call_operand.vmem [shape: f32[16,16], index: 8, kind: input, shape index: {}]
  %s9 = inlined_call_operand.hbm [shape: f32[16,16], index: 9, kind: input, shape index: {}]
  %s10 = inlined_call_operand.hbm [shape: f32[1,16], index: 10, kind: input, shape index: {}]
  %s11 = inlined_call_operand.hbm [shape: f32[1,16], index: 11, kind: input, shape index: {}]
  %s12 = inlined_call_operand.vmem [shape: f32[16,16], index: 12, kind: input, shape index: {}]
  %s13 = inlined_call_operand.hbm [shape: f32[16,16], index: 13, kind: input, shape index: {}]
  %s14 = inlined_call_operand.hbm [shape: f32[16,16], index: 14, kind: input, shape index: {}]
  %s15 = inlined_call_operand.vmem [shape: f32[1,16], index: 15, kind: input, shape index: {}]
  %s16 = inlined_call_operand.hbm [shape: f32[16,16], index: 16, kind: input, shape index: {}]
  %s17 = inlined_call_operand.vmem [shape: f32[16,1], index: 17, kind: input, shape index: {}]
  %s18 = inlined_call_operand.hbm [shape: f32[2,16,16], index: 18, kind: output, shape index: {}]
  %s19 = sld [smem:[#allocation0]]
  $region190: #{tpu_custom_call.1} parent=0
    _
  %s21 = ssub.s32 1, %s19
  %s22 = scalar_select 0, %s21, %s19
  $region1: #{tpu_custom_call.1} parent=0
    #allocation4 [shape = 'u8[8192]{0}', space=vmem, size = 0x2000, scoped, tag = 'input window, operand 0']
    #allocation5 [shape = 'u8[8192]{0}', space=vmem, size = 0x2000, scoped, tag = 'input window, operand 1']
    #allocation6 [shape = 's32[2]{0}', space=sflag, size = 0x8, scoped, tag = 'scoped memory for tpu_custom_call.1']
    #allocation7 [shape = 's32[2]{0}', space=sflag, size = 0x8, scoped, tag = 'scoped memory for tpu_custom_call.1']
    #allocation8 [shape = 'u8[4096]{0}', space=vmem, size = 0x1000, scoped, tag = 'input window, operand 2, single buffered']
    #allocation9 [shape = 's32[1]{0}', space=sflag, size = 0x4, scoped, tag = 'scoped memory for tpu_custom_call.1']
    #allocation10 [shape = 'u8[4096]{0}', space=vmem, size = 0x1000, scoped, tag = 'input window, operand 4, single buffered']
    #allocation11 [shape = 'u8[8192]{0}', space=vmem, size = 0x2000, scoped, tag = 'input window, operand 9, single buffered']
    #allocation12 [shape = 's32[1]{0}', space=sflag, size = 0x4, scoped, tag = 'scoped memory for tpu_custom_call.1']
    #allocation13 [shape = 'u8[512]{0}', space=vmem, size = 0x400, scoped, tag = 'input window, operand 10, single buffered']
    #allocation14 [shape = 'u8[512]{0}', space=vmem, size = 0x400, scoped, tag = 'input window, operand 11, single buffered']
    #allocation15 [shape = 's32[1]{0}', space=sflag, size = 0x4, scoped, tag = 'scoped memory for tpu_custom_call.1']
    #allocation16 [shape = 'u8[8192]{0}', space=vmem, size = 0x2000, scoped, tag = 'input window, operand 13, single buffered']
    #allocation17 [shape = 'u8[8192]{0}', space=vmem, size = 0x2000, scoped, tag = 'input window, operand 14, single buffered']
    #allocation18 [shape = 's32[1]{0}', space=sflag, size = 0x4, scoped, tag = 'scoped memory for tpu_custom_call.1']
    #allocation19 [shape = 'u8[8192]{0}', space=vmem, size = 0x2000, scoped, tag = 'input window, operand 16, single buffered']
    #allocation20 [shape = 'u8[16384]{0}', space=vmem, size = 0x4000, scoped, tag = 'output window, operand 0']
    %23 = vsyncpa [#allocation6], 0
    %s24 = scalar_lea.sflag [#allocation6], 1
    %25 = vsyncpa %s24, 0
    %26 = vsyncpa [#allocation9], 0
    %27 = vsyncpa [#allocation12], 0
    %28 = vsyncpa [#allocation15], 0
    %29 = vsyncpa [#allocation18], 0
    %30 = vsyncpa [#allocation7], 0
    %s31 = scalar_lea.sflag [#allocation7], 1
    %32 = vsyncpa %s31, 0
    loop: start=0, step=1, limit=6
    $region2: #{tpu_custom_call.1} parent=1 // loop_pre_header
      _
    $region3: #{tpu_custom_call.1} parent=1 // loop_header
      %s34 = sphi 0, %s38
      %p35 = scmp.ge.s32.totalorder %s34, 6
      %s41 = sphi 0, %s53
      %s42 = sphi 0, %s49
      %s43 = sphi 0, %s41
      %s44 = sphi 0, %s42
      %s45 = sphi 0, %s43
      %s46 = sphi 0, %s44
      %s58 = sphi 0, %s60
      %s61 = sphi 0, %s58
      %s62 = sphi 0, %s61
      %s78 = sphi 0, %s62
      %s86 = sphi 0, %s88
      %s89 = sphi 0, %s86
      %s90 = sphi 0, %s89
      %s106 = sphi 0, %s90
      %s110 = sphi 0, %s110
      %s112 = sphi 0, %s110
      %s113 = sphi 0, %s112
      %s127 = sphi 0, %s113
      %s131 = sphi 0, %s131
      %s133 = sphi 0, %s131
      %s134 = sphi 0, %s133
      %s148 = sphi 0, %s134
      %s152 = sphi 0, %s152
      %s154 = sphi 0, %s152
      %s155 = sphi 0, %s154
      %s169 = sphi 0, %s155
      %s173 = sphi 0, %s173
      %s175 = sphi 0, %s173
      %s176 = sphi 0, %s175
      %s190 = sphi 0, %s176
      %s194 = sphi 0, %s194
      %s196 = sphi 0, %s194
      %s197 = sphi 0, %s196
      %s211 = sphi 0, %s197
      %s215 = sphi 0, %s215
      %s217 = sphi 0, %s215
      %s218 = sphi 0, %s217
      %s232 = sphi 0, %s218
      %s236 = sphi 0, %s236
      %s238 = sphi 0, %s236
      %s239 = sphi 0, %s238
      %s253 = sphi 0, %s239
      %s257 = sphi 0, %s257
      %s259 = sphi 0, %s257
      %s260 = sphi 0, %s259
      %s274 = sphi 0, %s260
      %s278 = sphi 0, %s278
      %s280 = sphi 0, %s278
      %s281 = sphi 0, %s280
      %s295 = sphi 0, %s281
      %s299 = sphi 0, %s299
      %s301 = sphi 0, %s299
      %s302 = sphi 0, %s301
      %s316 = sphi 0, %s302
      %s320 = sphi 0, %s320
      %s322 = sphi 0, %s320
      %s323 = sphi 0, %s322
      %s337 = sphi 0, %s323
      %s341 = sphi 0, %s341
      %s343 = sphi 0, %s341
      %s344 = sphi 0, %s343
      %s358 = sphi 0, %s344
      %s362 = sphi 0, %s362
      %s364 = sphi 0, %s362
      %s365 = sphi 0, %s364
      %s379 = sphi 0, %s365
      %s383 = sphi 0, %s383
      %s385 = sphi 0, %s383
      %s386 = sphi 0, %s385
      %s400 = sphi 0, %s386
      %s404 = sphi 0, %s404
      %s406 = sphi 0, %s404
      %s407 = sphi 0, %s406
      %s421 = sphi 0, %s407
      %s425 = sphi 0, %s425
      %s427 = sphi 0, %s425
      %s428 = sphi 0, %s427
      %s442 = sphi 0, %s428
      %s448 = sphi 0, %s450
      %s451 = sphi 0, %s448
      %s452 = sphi 0, %s451
      %s468 = sphi 0, %s452
    $region4: #{tpu_custom_call.1} parent=1 // loop_header_branch
      %37 = sbr.rel (%p35) target = $region8
    $region5: #{tpu_custom_call.1} parent=1 // loop_body
      %s39 = ssub.s32 %s34, 1
      %s40 = ssub.s32 %s34, 2
      %s47 = sadd.s32 1, %s42
      %p48 = scmp.ge.s32.totalorder %s47, 2
      %s49 = scalar_select %p48, 0, %s47
      %s50 = sadd.s32 1, %s41
      %s51 = scalar_select %p48, %s50, %s41
      %p52 = scmp.ge.s32.totalorder %s51, 2
      %s53 = scalar_select %p52, 0, %s51
      %s54 = ssub.s32 %s41, %s53
      %s55 = ssub.s32 %s42, %s49
      %s56 = sor.u32 %s54, %s55
      %p57 = scmp.eq.s32.totalorder %s56, 0
      %s59 = sadd.s32 %s58, 1
      %s60 = scalar_select %p57, %s58, %s59
      %p63 = pneg %p57
      %p64 = scmp.eq.s32.totalorder %s34, 3
      %p65 = por %p63, %p64
      %p66 = scmp.ne.s32.totalorder %s58, %s61
      %p67 = scmp.eq.s32.totalorder %s34, 0
      %p68 = por %p66, %p67
      %p69 = scmp.ne.s32.totalorder %s58, %s61
      %p70 = scmp.eq.s32.totalorder %s39, 3
      %p71 = por %p69, %p70
      %p72 = scmp.ne.s32.totalorder %s61, %s62
      %p73 = scmp.eq.s32.totalorder %s39, 0
      %p74 = por %p72, %p73
      %p75 = scmp.ne.s32.totalorder %s61, %s62
      %p76 = scmp.eq.s32.totalorder %s40, 3
      %p77 = por %p75, %p76
      %p79 = scmp.ne.s32.totalorder %s62, %s78
      %p80 = scmp.eq.s32.totalorder %s40, 0
      %p81 = por %p79, %p80
      %s82 = ssub.s32 %s41, %s53
      %s83 = ssub.s32 %s42, %s49
      %s84 = sor.u32 %s82, %s83
      %p85 = scmp.eq.s32.totalorder %s84, 0
      %s87 = sadd.s32 %s86, 1
      %s88 = scalar_select %p85, %s86, %s87
      %p91 = pneg %p85
      %p92 = scmp.eq.s32.totalorder %s34, 3
      %p93 = por %p91, %p92
      %p94 = scmp.ne.s32.totalorder %s86, %s89
      %p95 = scmp.eq.s32.totalorder %s34, 0
      %p96 = por %p94, %p95
      %p97 = scmp.ne.s32.totalorder %s86, %s89
      %p98 = scmp.eq.s32.totalorder %s39, 3
      %p99 = por %p97, %p98
      %p100 = scmp.ne.s32.totalorder %s89, %s90
      %p101 = scmp.eq.s32.totalorder %s39, 0
      %p102 = por %p100, %p101
      %p103 = scmp.ne.s32.totalorder %s89, %s90
      %p104 = scmp.eq.s32.totalorder %s40, 3
      %p105 = por %p103, %p104
      %p107 = scmp.ne.s32.totalorder %s90, %s106
      %p108 = scmp.eq.s32.totalorder %s40, 0
      %p109 = por %p107, %p108
      %s111 = sadd.s32 %s110, 1
      %p114 = scmp.eq.s32.totalorder %s34, 3
      %p115 = scmp.ne.s32.totalorder %s110, %s112
      %p116 = scmp.eq.s32.totalorder %s34, 0
      %p117 = por %p115, %p116
      %p118 = scmp.ne.s32.totalorder %s110, %s112
      %p119 = scmp.eq.s32.totalorder %s39, 3
      %p120 = por %p118, %p119
      %p121 = scmp.ne.s32.totalorder %s112, %s113
      %p122 = scmp.eq.s32.totalorder %s39, 0
      %p123 = por %p121, %p122
      %p124 = scmp.ne.s32.totalorder %s112, %s113
      %p125 = scmp.eq.s32.totalorder %s40, 3
      %p126 = por %p124, %p125
      %p128 = scmp.ne.s32.totalorder %s113, %s127
      %p129 = scmp.eq.s32.totalorder %s40, 0
      %p130 = por %p128, %p129
      %s132 = sadd.s32 %s131, 1
      %p135 = scmp.eq.s32.totalorder %s34, 3
      %p136 = scmp.ne.s32.totalorder %s131, %s133
      %p137 = scmp.eq.s32.totalorder %s34, 0
      %p138 = por %p136, %p137
      %p139 = scmp.ne.s32.totalorder %s131, %s133
      %p140 = scmp.eq.s32.totalorder %s39, 3
      %p141 = por %p139, %p140
      %p142 = scmp.ne.s32.totalorder %s133, %s134
      %p143 = scmp.eq.s32.totalorder %s39, 0
      %p144 = por %p142, %p143
      %p145 = scmp.ne.s32.totalorder %s133, %s134
      %p146 = scmp.eq.s32.totalorder %s40, 3
      %p147 = por %p145, %p146
      %p149 = scmp.ne.s32.totalorder %s134, %s148
      %p150 = scmp.eq.s32.totalorder %s40, 0
      %p151 = por %p149, %p150
      %s153 = sadd.s32 %s152, 1
      %p156 = scmp.eq.s32.totalorder %s34, 3
      %p157 = scmp.ne.s32.totalorder %s152, %s154
      %p158 = scmp.eq.s32.totalorder %s34, 0
      %p159 = por %p157, %p158
      %p160 = scmp.ne.s32.totalorder %s152, %s154
      %p161 = scmp.eq.s32.totalorder %s39, 3
      %p162 = por %p160, %p161
      %p163 = scmp.ne.s32.totalorder %s154, %s155
      %p164 = scmp.eq.s32.totalorder %s39, 0
      %p165 = por %p163, %p164
      %p166 = scmp.ne.s32.totalorder %s154, %s155
      %p167 = scmp.eq.s32.totalorder %s40, 3
      %p168 = por %p166, %p167
      %p170 = scmp.ne.s32.totalorder %s155, %s169
      %p171 = scmp.eq.s32.totalorder %s40, 0
      %p172 = por %p170, %p171
      %s174 = sadd.s32 %s173, 1
      %p177 = scmp.eq.s32.totalorder %s34, 3
      %p178 = scmp.ne.s32.totalorder %s173, %s175
      %p179 = scmp.eq.s32.totalorder %s34, 0
      %p180 = por %p178, %p179
      %p181 = scmp.ne.s32.totalorder %s173, %s175
      %p182 = scmp.eq.s32.totalorder %s39, 3
      %p183 = por %p181, %p182
      %p184 = scmp.ne.s32.totalorder %s175, %s176
      %p185 = scmp.eq.s32.totalorder %s39, 0
      %p186 = por %p184, %p185
      %p187 = scmp.ne.s32.totalorder %s175, %s176
      %p188 = scmp.eq.s32.totalorder %s40, 3
      %p189 = por %p187, %p188
      %p191 = scmp.ne.s32.totalorder %s176, %s190
      %p192 = scmp.eq.s32.totalorder %s40, 0
      %p193 = por %p191, %p192
      %s195 = sadd.s32 %s194, 1
      %p198 = scmp.eq.s32.totalorder %s34, 3
      %p199 = scmp.ne.s32.totalorder %s194, %s196
      %p200 = scmp.eq.s32.totalorder %s34, 0
      %p201 = por %p199, %p200
      %p202 = scmp.ne.s32.totalorder %s194, %s196
      %p203 = scmp.eq.s32.totalorder %s39, 3
      %p204 = por %p202, %p203
      %p205 = scmp.ne.s32.totalorder %s196, %s197
      %p206 = scmp.eq.s32.totalorder %s39, 0
      %p207 = por %p205, %p206
      %p208 = scmp.ne.s32.totalorder %s196, %s197
      %p209 = scmp.eq.s32.totalorder %s40, 3
      %p210 = por %p208, %p209
      %p212 = scmp.ne.s32.totalorder %s197, %s211
      %p213 = scmp.eq.s32.totalorder %s40, 0
      %p214 = por %p212, %p213
      %s216 = sadd.s32 %s215, 1
      %p219 = scmp.eq.s32.totalorder %s34, 3
      %p220 = scmp.ne.s32.totalorder %s215, %s217
      %p221 = scmp.eq.s32.totalorder %s34, 0
      %p222 = por %p220, %p221
      %p223 = scmp.ne.s32.totalorder %s215, %s217
      %p224 = scmp.eq.s32.totalorder %s39, 3
      %p225 = por %p223, %p224
      %p226 = scmp.ne.s32.totalorder %s217, %s218
      %p227 = scmp.eq.s32.totalorder %s39, 0
      %p228 = por %p226, %p227
      %p229 = scmp.ne.s32.totalorder %s217, %s218
      %p230 = scmp.eq.s32.totalorder %s40, 3
      %p231 = por %p229, %p230
      %p233 = scmp.ne.s32.totalorder %s218, %s232
      %p234 = scmp.eq.s32.totalorder %s40, 0
      %p235 = por %p233, %p234
      %s237 = sadd.s32 %s236, 1
      %p240 = scmp.eq.s32.totalorder %s34, 3
      %p241 = scmp.ne.s32.totalorder %s236, %s238
      %p242 = scmp.eq.s32.totalorder %s34, 0
      %p243 = por %p241, %p242
      %p244 = scmp.ne.s32.totalorder %s236, %s238
      %p245 = scmp.eq.s32.totalorder %s39, 3
      %p246 = por %p244, %p245
      %p247 = scmp.ne.s32.totalorder %s238, %s239
      %p248 = scmp.eq.s32.totalorder %s39, 0
      %p249 = por %p247, %p248
      %p250 = scmp.ne.s32.totalorder %s238, %s239
      %p251 = scmp.eq.s32.totalorder %s40, 3
      %p252 = por %p250, %p251
      %p254 = scmp.ne.s32.totalorder %s239, %s253
      %p255 = scmp.eq.s32.totalorder %s40, 0
      %p256 = por %p254, %p255
      %s258 = sadd.s32 %s257, 1
      %p261 = scmp.eq.s32.totalorder %s34, 3
      %p262 = scmp.ne.s32.totalorder %s257, %s259
      %p263 = scmp.eq.s32.totalorder %s34, 0
      %p264 = por %p262, %p263
      %p265 = scmp.ne.s32.totalorder %s257, %s259
      %p266 = scmp.eq.s32.totalorder %s39, 3
      %p267 = por %p265, %p266
      %p268 = scmp.ne.s32.totalorder %s259, %s260
      %p269 = scmp.eq.s32.totalorder %s39, 0
      %p270 = por %p268, %p269
      %p271 = scmp.ne.s32.totalorder %s259, %s260
      %p272 = scmp.eq.s32.totalorder %s40, 3
      %p273 = por %p271, %p272
      %p275 = scmp.ne.s32.totalorder %s260, %s274
      %p276 = scmp.eq.s32.totalorder %s40, 0
      %p277 = por %p275, %p276
      %s279 = sadd.s32 %s278, 1
      %p282 = scmp.eq.s32.totalorder %s34, 3
      %p283 = scmp.ne.s32.totalorder %s278, %s280
      %p284 = scmp.eq.s32.totalorder %s34, 0
      %p285 = por %p283, %p284
      %p286 = scmp.ne.s32.totalorder %s278, %s280
      %p287 = scmp.eq.s32.totalorder %s39, 3
      %p288 = por %p286, %p287
      %p289 = scmp.ne.s32.totalorder %s280, %s281
      %p290 = scmp.eq.s32.totalorder %s39, 0
      %p291 = por %p289, %p290
      %p292 = scmp.ne.s32.totalorder %s280, %s281
      %p293 = scmp.eq.s32.totalorder %s40, 3
      %p294 = por %p292, %p293
      %p296 = scmp.ne.s32.totalorder %s281, %s295
      %p297 = scmp.eq.s32.totalorder %s40, 0
      %p298 = por %p296, %p297
      %s300 = sadd.s32 %s299, 1
      %p303 = scmp.eq.s32.totalorder %s34, 3
      %p304 = scmp.ne.s32.totalorder %s299, %s301
      %p305 = scmp.eq.s32.totalorder %s34, 0
      %p306 = por %p304, %p305
      %p307 = scmp.ne.s32.totalorder %s299, %s301
      %p308 = scmp.eq.s32.totalorder %s39, 3
      %p309 = por %p307, %p308
      %p310 = scmp.ne.s32.totalorder %s301, %s302
      %p311 = scmp.eq.s32.totalorder %s39, 0
      %p312 = por %p310, %p311
      %p313 = scmp.ne.s32.totalorder %s301, %s302
      %p314 = scmp.eq.s32.totalorder %s40, 3
      %p315 = por %p313, %p314
      %p317 = scmp.ne.s32.totalorder %s302, %s316
      %p318 = scmp.eq.s32.totalorder %s40, 0
      %p319 = por %p317, %p318
      %s321 = sadd.s32 %s320, 1
      %p324 = scmp.eq.s32.totalorder %s34, 3
      %p325 = scmp.ne.s32.totalorder %s320, %s322
      %p326 = scmp.eq.s32.totalorder %s34, 0
      %p327 = por %p325, %p326
      %p328 = scmp.ne.s32.totalorder %s320, %s322
      %p329 = scmp.eq.s32.totalorder %s39, 3
      %p330 = por %p328, %p329
      %p331 = scmp.ne.s32.totalorder %s322, %s323
      %p332 = scmp.eq.s32.totalorder %s39, 0
      %p333 = por %p331, %p332
      %p334 = scmp.ne.s32.totalorder %s322, %s323
      %p335 = scmp.eq.s32.totalorder %s40, 3
      %p336 = por %p334, %p335
      %p338 = scmp.ne.s32.totalorder %s323, %s337
      %p339 = scmp.eq.s32.totalorder %s40, 0
      %p340 = por %p338, %p339
      %s342 = sadd.s32 %s341, 1
      %p345 = scmp.eq.s32.totalorder %s34, 3
      %p346 = scmp.ne.s32.totalorder %s341, %s343
      %p347 = scmp.eq.s32.totalorder %s34, 0
      %p348 = por %p346, %p347
      %p349 = scmp.ne.s32.totalorder %s341, %s343
      %p350 = scmp.eq.s32.totalorder %s39, 3
      %p351 = por %p349, %p350
      %p352 = scmp.ne.s32.totalorder %s343, %s344
      %p353 = scmp.eq.s32.totalorder %s39, 0
      %p354 = por %p352, %p353
      %p355 = scmp.ne.s32.totalorder %s343, %s344
      %p356 = scmp.eq.s32.totalorder %s40, 3
      %p357 = por %p355, %p356
      %p359 = scmp.ne.s32.totalorder %s344, %s358
      %p360 = scmp.eq.s32.totalorder %s40, 0
      %p361 = por %p359, %p360
      %s363 = sadd.s32 %s362, 1
      %p366 = scmp.eq.s32.totalorder %s34, 3
      %p367 = scmp.ne.s32.totalorder %s362, %s364
      %p368 = scmp.eq.s32.totalorder %s34, 0
      %p369 = por %p367, %p368
      %p370 = scmp.ne.s32.totalorder %s362, %s364
      %p371 = scmp.eq.s32.totalorder %s39, 3
      %p372 = por %p370, %p371
      %p373 = scmp.ne.s32.totalorder %s364, %s365
      %p374 = scmp.eq.s32.totalorder %s39, 0
      %p375 = por %p373, %p374
      %p376 = scmp.ne.s32.totalorder %s364, %s365
      %p377 = scmp.eq.s32.totalorder %s40, 3
      %p378 = por %p376, %p377
      %p380 = scmp.ne.s32.totalorder %s365, %s379
      %p381 = scmp.eq.s32.totalorder %s40, 0
      %p382 = por %p380, %p381
      %s384 = sadd.s32 %s383, 1
      %p387 = scmp.eq.s32.totalorder %s34, 3
      %p388 = scmp.ne.s32.totalorder %s383, %s385
      %p389 = scmp.eq.s32.totalorder %s34, 0
      %p390 = por %p388, %p389
      %p391 = scmp.ne.s32.totalorder %s383, %s385
      %p392 = scmp.eq.s32.totalorder %s39, 3
      %p393 = por %p391, %p392
      %p394 = scmp.ne.s32.totalorder %s385, %s386
      %p395 = scmp.eq.s32.totalorder %s39, 0
      %p396 = por %p394, %p395
      %p397 = scmp.ne.s32.totalorder %s385, %s386
      %p398 = scmp.eq.s32.totalorder %s40, 3
      %p399 = por %p397, %p398
      %p401 = scmp.ne.s32.totalorder %s386, %s400
      %p402 = scmp.eq.s32.totalorder %s40, 0
      %p403 = por %p401, %p402
      %s405 = sadd.s32 %s404, 1
      %p408 = scmp.eq.s32.totalorder %s34, 3
      %p409 = scmp.ne.s32.totalorder %s404, %s406
      %p410 = scmp.eq.s32.totalorder %s34, 0
      %p411 = por %p409, %p410
      %p412 = scmp.ne.s32.totalorder %s404, %s406
      %p413 = scmp.eq.s32.totalorder %s39, 3
      %p414 = por %p412, %p413
      %p415 = scmp.ne.s32.totalorder %s406, %s407
      %p416 = scmp.eq.s32.totalorder %s39, 0
      %p417 = por %p415, %p416
      %p418 = scmp.ne.s32.totalorder %s406, %s407
      %p419 = scmp.eq.s32.totalorder %s40, 3
      %p420 = por %p418, %p419
      %p422 = scmp.ne.s32.totalorder %s407, %s421
      %p423 = scmp.eq.s32.totalorder %s40, 0
      %p424 = por %p422, %p423
      %s426 = sadd.s32 %s425, 1
      %p429 = scmp.eq.s32.totalorder %s34, 3
      %p430 = scmp.ne.s32.totalorder %s425, %s427
      %p431 = scmp.eq.s32.totalorder %s34, 0
      %p432 = por %p430, %p431
      %p433 = scmp.ne.s32.totalorder %s425, %s427
      %p434 = scmp.eq.s32.totalorder %s39, 3
      %p435 = por %p433, %p434
      %p436 = scmp.ne.s32.totalorder %s427, %s428
      %p437 = scmp.eq.s32.totalorder %s39, 0
      %p438 = por %p436, %p437
      %p439 = scmp.ne.s32.totalorder %s427, %s428
      %p440 = scmp.eq.s32.totalorder %s40, 3
      %p441 = por %p439, %p440
      %p443 = scmp.ne.s32.totalorder %s428, %s442
      %p444 = scmp.eq.s32.totalorder %s40, 0
      %p445 = por %p443, %p444
      %s446 = ssub.s32 %s41, %s53
      %p447 = scmp.eq.s32.totalorder %s446, 0
      %s449 = sadd.s32 %s448, 1
      %s450 = scalar_select %p447, %s448, %s449
      %p453 = pneg %p447
      %p454 = scmp.eq.s32.totalorder %s34, 3
      %p455 = por %p453, %p454
      %p456 = scmp.ne.s32.totalorder %s448, %s451
      %p457 = scmp.eq.s32.totalorder %s34, 0
      %p458 = por %p456, %p457
      %p459 = scmp.ne.s32.totalorder %s448, %s451
      %p460 = scmp.eq.s32.totalorder %s39, 3
      %p461 = por %p459, %p460
      %p462 = scmp.ne.s32.totalorder %s451, %s452
      %p463 = scmp.eq.s32.totalorder %s39, 0
      %p464 = por %p462, %p463
      %p465 = scmp.ne.s32.totalorder %s451, %s452
      %p466 = scmp.eq.s32.totalorder %s40, 3
      %p467 = por %p465, %p466
      %p469 = scmp.ne.s32.totalorder %s452, %s468
      %p470 = scmp.eq.s32.totalorder %s40, 0
      %p471 = por %p469, %p470
      %p472 = scmp.le.s32.totalorder 1, %s34
      %p473 = scmp.lt.s32.totalorder %s34, 5
      %p474 = pnand %p472, %p473
      %p475 = pneg %p474
      // Predicated region
      $region9: #{tpu_custom_call.1} parent=5 // pred_check
        _
      $region10: #{tpu_custom_call.1} parent=5 // pred_check_branch
        %477 = sbr.rel (%p474) target = $region12
      $region11: #{tpu_custom_call.1} parent=5 // pred_region
        %s478 = ssub.s32 %s34, 1
        // Predicated region
        $region13: #{tpu_custom_call.1} parent=11 // pred_check
          %p479 = pneg %p123
        $region14: #{tpu_custom_call.1} parent=11 // pred_check_branch
          %481 = sbr.rel (%p479) target = $region16
        $region15: #{tpu_custom_call.1} parent=11 // pred_region
          %s483 = ssub.s32 128, 128
          %484 = vsyncadd [#allocation9], %s483
          %s485 = sshll.u32 [#allocation8], 4
          %s486 = int_to_ptr.vmem [resolvable:$true] %s485
          %491 = dma.hbm_to_vmem [thread:$0]  %s2, 128, %s486, [#allocation9], 64, 64, 4
        $region16: #{tpu_custom_call.1} parent=11 // pred_fallthru
          _
        // Predicated region
        $region17: #{tpu_custom_call.1} parent=11 // pred_check
          %p492 = pneg %p144
        $region18: #{tpu_custom_call.1} parent=11 // pred_check_branch
          %494 = sbr.rel (%p492) target = $region20
        $region19: #{tpu_custom_call.1} parent=11 // pred_region
          _
        $region20: #{tpu_custom_call.1} parent=11 // pred_fallthru
          _
        // Predicated region
        $region21: #{tpu_custom_call.1} parent=11 // pred_check
          %p495 = pneg %p165
        $region22: #{tpu_custom_call.1} parent=11 // pred_check_branch
          %497 = sbr.rel (%p495) target = $region24
        $region23: #{tpu_custom_call.1} parent=11 // pred_region
          %s499 = ssub.s32 128, 128
          %500 = vsyncadd [#allocation9], %s499
          %s501 = sshll.u32 [#allocation10], 4
          %s502 = int_to_ptr.vmem [resolvable:$true] %s501
          %507 = dma.hbm_to_vmem [thread:$0]  %s4, 128, %s502, [#allocation9], 64, 64, 4
        $region24: #{tpu_custom_call.1} parent=11 // pred_fallthru
          _
        // Predicated region
        $region25: #{tpu_custom_call.1} parent=11 // pred_check
          %p508 = pneg %p186
        $region26: #{tpu_custom_call.1} parent=11 // pred_check_branch
          %510 = sbr.rel (%p508) target = $region28
        $region27: #{tpu_custom_call.1} parent=11 // pred_region
          _
        $region28: #{tpu_custom_call.1} parent=11 // pred_fallthru
          _
        // Predicated region
        $region29: #{tpu_custom_call.1} parent=11 // pred_check
          %p511 = pneg %p207
        $region30: #{tpu_custom_call.1} parent=11 // pred_check_branch
          %513 = sbr.rel (%p511) target = $region32
        $region31: #{tpu_custom_call.1} parent=11 // pred_region
          _
        $region32: #{tpu_custom_call.1} parent=11 // pred_fallthru
          _
        // Predicated region
        $region33: #{tpu_custom_call.1} parent=11 // pred_check
          %p514 = pneg %p228
        $region34: #{tpu_custom_call.1} parent=11 // pred_check_branch
          %516 = sbr.rel (%p514) target = $region36
        $region35: #{tpu_custom_call.1} parent=11 // pred_region
          _
        $region36: #{tpu_custom_call.1} parent=11 // pred_fallthru
          _
        // Predicated region
        $region37: #{tpu_custom_call.1} parent=11 // pred_check
          %p517 = pneg %p249
        $region38: #{tpu_custom_call.1} parent=11 // pred_check_branch
          %519 = sbr.rel (%p517) target = $region40
        $region39: #{tpu_custom_call.1} parent=11 // pred_region
          _
        $region40: #{tpu_custom_call.1} parent=11 // pred_fallthru
          _
        // Predicated region
        $region41: #{tpu_custom_call.1} parent=11 // pred_check
          %p520 = pneg %p270
        $region42: #{tpu_custom_call.1} parent=11 // pred_check_branch
          %522 = sbr.rel (%p520) target = $region44
        $region43: #{tpu_custom_call.1} parent=11 // pred_region
          %s524 = ssub.s32 256, 256
          %525 = vsyncadd [#allocation12], %s524
          %s526 = sshll.u32 [#allocation11], 4
          %s527 = int_to_ptr.vmem [resolvable:$true] %s526
          %532 = dma.hbm_to_vmem [thread:$0]  %s9, 256, %s527, [#allocation12], 128, 128, 8
        $region44: #{tpu_custom_call.1} parent=11 // pred_fallthru
          _
        // Predicated region
        $region45: #{tpu_custom_call.1} parent=11 // pred_check
          %p533 = pneg %p291
        $region46: #{tpu_custom_call.1} parent=11 // pred_check_branch
          %535 = sbr.rel (%p533) target = $region48
        $region47: #{tpu_custom_call.1} parent=11 // pred_region
          %s537 = ssub.s32 16, 16
          %538 = vsyncadd [#allocation12], %s537
          %s540 = sshll.u32 [#allocation13], 4
          %s541 = int_to_ptr.vmem [resolvable:$true] %s540
          %543 = dma.hbm_to_vmem [thread:$0]  %s10, 16, %s541, [#allocation12]
        $region48: #{tpu_custom_call.1} parent=11 // pred_fallthru
          _
        // Predicated region
        $region49: #{tpu_custom_call.1} parent=11 // pred_check
          %p544 = pneg %p312
        $region50: #{tpu_custom_call.1} parent=11 // pred_check_branch
          %546 = sbr.rel (%p544) target = $region52
        $region51: #{tpu_custom_call.1} parent=11 // pred_region
          %s548 = ssub.s32 16, 16
          %549 = vsyncadd [#allocation15], %s548
          %s551 = sshll.u32 [#allocation14], 4
          %s552 = int_to_ptr.vmem [resolvable:$true] %s551
          %554 = dma.hbm_to_vmem [thread:$0]  %s11, 16, %s552, [#allocation15]
        $region52: #{tpu_custom_call.1} parent=11 // pred_fallthru
          _
        // Predicated region
        $region53: #{tpu_custom_call.1} parent=11 // pred_check
          %p555 = pneg %p333
        $region54: #{tpu_custom_call.1} parent=11 // pred_check_branch
          %557 = sbr.rel (%p555) target = $region56
        $region55: #{tpu_custom_call.1} parent=11 // pred_region
          _
        $region56: #{tpu_custom_call.1} parent=11 // pred_fallthru
          _
        // Predicated region
        $region57: #{tpu_custom_call.1} parent=11 // pred_check
          %p558 = pneg %p354
        $region58: #{tpu_custom_call.1} parent=11 // pred_check_branch
          %560 = sbr.rel (%p558) target = $region60
        $region59: #{tpu_custom_call.1} parent=11 // pred_region
          %s562 = ssub.s32 256, 256
          %563 = vsyncadd [#allocation15], %s562
          %s564 = sshll.u32 [#allocation16], 4
          %s565 = int_to_ptr.vmem [resolvable:$true] %s564
          %570 = dma.hbm_to_vmem [thread:$0]  %s13, 256, %s565, [#allocation15], 128, 128, 8
        $region60: #{tpu_custom_call.1} parent=11 // pred_fallthru
          _
        // Predicated region
        $region61: #{tpu_custom_call.1} parent=11 // pred_check
          %p571 = pneg %p375
        $region62: #{tpu_custom_call.1} parent=11 // pred_check_branch
          %573 = sbr.rel (%p571) target = $region64
        $region63: #{tpu_custom_call.1} parent=11 // pred_region
          %s575 = ssub.s32 256, 256
          %576 = vsyncadd [#allocation18], %s575
          %s577 = sshll.u32 [#allocation17], 4
          %s578 = int_to_ptr.vmem [resolvable:$true] %s577
          %583 = dma.hbm_to_vmem [thread:$0]  %s14, 256, %s578, [#allocation18], 128, 128, 8
        $region64: #{tpu_custom_call.1} parent=11 // pred_fallthru
          _
        // Predicated region
        $region65: #{tpu_custom_call.1} parent=11 // pred_check
          %p584 = pneg %p396
        $region66: #{tpu_custom_call.1} parent=11 // pred_check_branch
          %586 = sbr.rel (%p584) target = $region68
        $region67: #{tpu_custom_call.1} parent=11 // pred_region
          _
        $region68: #{tpu_custom_call.1} parent=11 // pred_fallthru
          _
        // Predicated region
        $region69: #{tpu_custom_call.1} parent=11 // pred_check
          %p587 = pneg %p417
        $region70: #{tpu_custom_call.1} parent=11 // pred_check_branch
          %589 = sbr.rel (%p587) target = $region72
        $region71: #{tpu_custom_call.1} parent=11 // pred_region
          %s591 = ssub.s32 256, 256
          %592 = vsyncadd [#allocation18], %s591
          %s593 = sshll.u32 [#allocation19], 4
          %s594 = int_to_ptr.vmem [resolvable:$true] %s593
          %599 = dma.hbm_to_vmem [thread:$0]  %s16, 256, %s594, [#allocation18], 128, 128, 8
        $region72: #{tpu_custom_call.1} parent=11 // pred_fallthru
          _
        // Predicated region
        $region73: #{tpu_custom_call.1} parent=11 // pred_check
          %p600 = pneg %p438
        $region74: #{tpu_custom_call.1} parent=11 // pred_check_branch
          %602 = sbr.rel (%p600) target = $region76
        $region75: #{tpu_custom_call.1} parent=11 // pred_region
          _
        $region76: #{tpu_custom_call.1} parent=11 // pred_fallthru
          _
      $region12: #{tpu_custom_call.1} parent=5 // pred_fallthru
        _
      %p603 = scmp.lt.s32.totalorder %s34, 4
      // Predicated region
      $region77: #{tpu_custom_call.1} parent=5 // pred_check
        %p604 = pneg %p603
      $region78: #{tpu_custom_call.1} parent=5 // pred_check_branch
        %606 = sbr.rel (%p604) target = $region80
      $region79: #{tpu_custom_call.1} parent=5 // pred_region
        // Predicated region
        $region81: #{tpu_custom_call.1} parent=79 // pred_check
          %p607 = pneg %p68
        $region82: #{tpu_custom_call.1} parent=79 // pred_check_branch
          %609 = sbr.rel (%p607) target = $region84
        $region83: #{tpu_custom_call.1} parent=79 // pred_region
          %s610 = sand.u32 %s58, 1
          %s611 = sand.u32 %s58, 1
          %s612 = smul.addr %s611, 8
          %s613 = scalar_lea.vmem [#allocation4], %s612
          %s614 = smul.addr %s41, 4
          %s615 = sadd.s32 %s42, %s614
          %s616 = smul.addr %s615, 4
          %s617 = scalar_lea.vmem %s0, %s616
          // Predicated region
          $region85: #{tpu_custom_call.1} parent=83 // pred_check
            _
          $region86: #{tpu_custom_call.1} parent=83 // pred_check_branch
            %619 = sbr.rel (0) target = $region88
          $region87: #{tpu_custom_call.1} parent=83 // pred_region
            // Predicated region
            $region89: #{tpu_custom_call.1} parent=87 // pred_check
              _
            $region90: #{tpu_custom_call.1} parent=87 // pred_check_branch
              %621 = sbr.rel target = $region92
            $region91: #{tpu_custom_call.1} parent=87 // pred_region
              // Predicated region
              $region104: #{tpu_custom_call.1} parent=91 // pred_check
                _
              $region105: #{tpu_custom_call.1} parent=91 // pred_check_branch
                %638 = sbr.rel (0) target = $region107
              $region106: #{tpu_custom_call.1} parent=91 // pred_region
                loop: start=0, step=1, limit=1
                $region108: #{tpu_custom_call.1} parent=106 // loop_pre_header
                  _
                $region109: #{tpu_custom_call.1} parent=106 // loop_header
                  %s640 = sphi 0, %s644
                  %p641 = scmp.ge.s32.totalorder %s640, 1
                  %s645 = sphi %s617, %s617
                  %s646 = sphi %s613, %s613
                $region110: #{tpu_custom_call.1} parent=106 // loop_header_branch
                  %643 = sbr.rel (%p641) target = $region114
                $region111: #{tpu_custom_call.1} parent=106 // loop_body
                  _
                $region112: #{tpu_custom_call.1} parent=106 // loop_footer
                  %s644 = sadd.s32 1, %s640
                $region113: #{tpu_custom_call.1} parent=106 // loop_footer_branch
                  %639 = sbr.rel target = $region109
                $region114: #{tpu_custom_call.1} parent=106 // loop_exit
                  _
                loop: start=0, step=1, limit=1
                $region115: #{tpu_custom_call.1} parent=106 // loop_pre_header
                  _
                $region116: #{tpu_custom_call.1} parent=106 // loop_header
                  %s649 = sphi 0, %s653
                  %p650 = scmp.ge.s32.totalorder %s649, 1
                  %s654 = sphi %s617, %s617
                  %s655 = sphi %s613, %s613
                $region117: #{tpu_custom_call.1} parent=106 // loop_header_branch
                  %652 = sbr.rel (%p650) target = $region121
                $region118: #{tpu_custom_call.1} parent=106 // loop_body
                  %v656 = vld [vmem:[%s654] sm:$0xf]
                  %657 = vst [vmem:[%s655] sm:$0xf] %v656
                  %v658 = vld [vmem:[%s654 + $0x8] sm:$0xf]
                  %659 = vst [vmem:[%s655 + $0x4] sm:$0xf] %v658
                $region119: #{tpu_custom_call.1} parent=106 // loop_footer
                  %s653 = sadd.s32 1, %s649
                $region120: #{tpu_custom_call.1} parent=106 // loop_footer_branch
                  %648 = sbr.rel target = $region116
                $region121: #{tpu_custom_call.1} parent=106 // loop_exit
                  _
              $region107: #{tpu_custom_call.1} parent=91 // pred_fallthru
                _
            $region92: #{tpu_custom_call.1} parent=87 // pred_fallthru
              _
            // Predicated region
            $region93: #{tpu_custom_call.1} parent=87 // pred_check
              _
            $region94: #{tpu_custom_call.1} parent=87 // pred_check_branch
              %623 = sbr.rel (0) target = $region96
            $region95: #{tpu_custom_call.1} parent=87 // pred_region
              loop: start=0, step=1, limit=1
              $region97: #{tpu_custom_call.1} parent=95 // loop_pre_header
                _
              $region98: #{tpu_custom_call.1} parent=95 // loop_header
                %s626 = sphi 0, %s630
                %p627 = scmp.ge.s32.totalorder %s626, 1
                %s631 = sphi %s617, %s617
                %s632 = sphi %s613, %s613
              $region99: #{tpu_custom_call.1} parent=95 // loop_header_branch
                %629 = sbr.rel (%p627) target = $region103
              $region100: #{tpu_custom_call.1} parent=95 // loop_body
                %v633 = vld [vmem:[%s631] sm:$0xf]
                %634 = vst [vmem:[%s632] sm:$0xf] %v633
                %v635 = vld [vmem:[%s631 + $0x8] sm:$0xf]
                %636 = vst [vmem:[%s632 + $0x4] sm:$0xf] %v635
              $region101: #{tpu_custom_call.1} parent=95 // loop_footer
                %s630 = sadd.s32 1, %s626
              $region102: #{tpu_custom_call.1} parent=95 // loop_footer_branch
                %625 = sbr.rel target = $region98
              $region103: #{tpu_custom_call.1} parent=95 // loop_exit
                _
            $region96: #{tpu_custom_call.1} parent=87 // pred_fallthru
              _
          $region88: #{tpu_custom_call.1} parent=83 // pred_fallthru
            _
          %660 = vnop
        $region84: #{tpu_custom_call.1} parent=79 // pred_fallthru
          _
        // Predicated region
        $region122: #{tpu_custom_call.1} parent=79 // pred_check
          %p661 = pneg %p96
        $region123: #{tpu_custom_call.1} parent=79 // pred_check_branch
          %663 = sbr.rel (%p661) target = $region125
        $region124: #{tpu_custom_call.1} parent=79 // pred_region
          %s664 = sand.u32 %s86, 1
          %s665 = scalar_lea.sflag [#allocation6], %s664
          %s666 = sand.u32 %s86, 1
          %s667 = smul.addr %s666, 8
          %s668 = scalar_lea.vmem [#allocation5], %s667
          %s670 = ssub.s32 128, 128
          %671 = vsyncadd %s665, %s670
          %s672 = smul.addr %s41, 4
          %s673 = sadd.s32 %s42, %s672
          %s674 = smul.addr %s673, 64
          %s675 = scalar_lea.hbm %s1, %s674
          %s676 = sshll.u32 %s668, 4
          %s677 = int_to_ptr.vmem [resolvable:$true] %s676
          %682 = dma.hbm_to_vmem [thread:$0]  %s675, 128, %s677, %s665, 128, 64, 4
        $region125: #{tpu_custom_call.1} parent=79 // pred_fallthru
          _
      $region80: #{tpu_custom_call.1} parent=5 // pred_fallthru
        _
      %p683 = scmp.le.s32.totalorder 1, %s34
      %p684 = scmp.lt.s32.totalorder %s34, 5
      %p685 = pnand %p683, %p684
      %p686 = pneg %p685
      // Predicated region
      $region126: #{tpu_custom_call.1} parent=5 // pred_check
        _
      $region127: #{tpu_custom_call.1} parent=5 // pred_check_branch
        %688 = sbr.rel (%p685) target = $region129
      $region128: #{tpu_custom_call.1} parent=5 // pred_region
        %s689 = ssub.s32 %s34, 1
        %s690 = sand.u32 %s61, 1
        %s691 = sand.u32 %s61, 1
        %s692 = smul.addr %s691, 8
        %s693 = scalar_lea.vmem [#allocation4], %s692
        // Predicated region
        $region130: #{tpu_custom_call.1} parent=128 // pred_check
          %p694 = pneg %p74
        $region131: #{tpu_custom_call.1} parent=128 // pred_check_branch
          %696 = sbr.rel (%p694) target = $region133
        $region132: #{tpu_custom_call.1} parent=128 // pred_region
          _
        $region133: #{tpu_custom_call.1} parent=128 // pred_fallthru
          _
        %s697 = sand.u32 %s89, 1
        %s698 = scalar_lea.sflag [#allocation6], %s697
        %s699 = sand.u32 %s89, 1
        %s700 = smul.addr %s699, 8
        %s701 = scalar_lea.vmem [#allocation5], %s700
        // Predicated region
        $region134: #{tpu_custom_call.1} parent=128 // pred_check
          %p702 = pneg %p102
        $region135: #{tpu_custom_call.1} parent=128 // pred_check_branch
          %704 = sbr.rel (%p702) target = $region137
        $region136: #{tpu_custom_call.1} parent=128 // pred_region
          %705 = dma.done %s698, 128
        $region137: #{tpu_custom_call.1} parent=128 // pred_fallthru
          _
        // Predicated region
        $region138: #{tpu_custom_call.1} parent=128 // pred_check
          %p706 = pneg %p123
        $region139: #{tpu_custom_call.1} parent=128 // pred_check_branch
          %708 = sbr.rel (%p706) target = $region141
        $region140: #{tpu_custom_call.1} parent=128 // pred_region
          %709 = dma.done [#allocation9], 128
        $region141: #{tpu_custom_call.1} parent=128 // pred_fallthru
          _
        // Predicated region
        $region142: #{tpu_custom_call.1} parent=128 // pred_check
          %p710 = pneg %p165
        $region143: #{tpu_custom_call.1} parent=128 // pred_check_branch
          %712 = sbr.rel (%p710) target = $region145
        $region144: #{tpu_custom_call.1} parent=128 // pred_region
          %713 = dma.done [#allocation9], 128
        $region145: #{tpu_custom_call.1} parent=128 // pred_fallthru
          _
        // Predicated region
        $region146: #{tpu_custom_call.1} parent=128 // pred_check
          %p714 = pneg %p270
        $region147: #{tpu_custom_call.1} parent=128 // pred_check_branch
          %716 = sbr.rel (%p714) target = $region149
        $region148: #{tpu_custom_call.1} parent=128 // pred_region
          %717 = dma.done [#allocation12], 256
        $region149: #{tpu_custom_call.1} parent=128 // pred_fallthru
          _
        // Predicated region
        $region150: #{tpu_custom_call.1} parent=128 // pred_check
          %p718 = pneg %p291
        $region151: #{tpu_custom_call.1} parent=128 // pred_check_branch
          %720 = sbr.rel (%p718) target = $region153
        $region152: #{tpu_custom_call.1} parent=128 // pred_region
          %721 = dma.done [#allocation12], 16
        $region153: #{tpu_custom_call.1} parent=128 // pred_fallthru
          _
        // Predicated region
        $region154: #{tpu_custom_call.1} parent=128 // pred_check
          %p722 = pneg %p312
        $region155: #{tpu_custom_call.1} parent=128 // pred_check_branch
          %724 = sbr.rel (%p722) target = $region157
        $region156: #{tpu_custom_call.1} parent=128 // pred_region
          %725 = dma.done [#allocation15], 16
        $region157: #{tpu_custom_call.1} parent=128 // pred_fallthru
          _
        // Predicated region
        $region158: #{tpu_custom_call.1} parent=128 // pred_check
          %p726 = pneg %p354
        $region159: #{tpu_custom_call.1} parent=128 // pred_check_branch
          %728 = sbr.rel (%p726) target = $region161
        $region160: #{tpu_custom_call.1} parent=128 // pred_region
          %729 = dma.done [#allocation15], 256
        $region161: #{tpu_custom_call.1} parent=128 // pred_fallthru
          _
        // Predicated region
        $region162: #{tpu_custom_call.1} parent=128 // pred_check
          %p730 = pneg %p375
        $region163: #{tpu_custom_call.1} parent=128 // pred_check_branch
          %732 = sbr.rel (%p730) target = $region165
        $region164: #{tpu_custom_call.1} parent=128 // pred_region
          %733 = dma.done [#allocation18], 256
        $region165: #{tpu_custom_call.1} parent=128 // pred_fallthru
          _
        // Predicated region
        $region166: #{tpu_custom_call.1} parent=128 // pred_check
          %p734 = pneg %p417
        $region167: #{tpu_custom_call.1} parent=128 // pred_check_branch
          %736 = sbr.rel (%p734) target = $region169
        $region168: #{tpu_custom_call.1} parent=128 // pred_region
          %737 = dma.done [#allocation18], 256
        $region169: #{tpu_custom_call.1} parent=128 // pred_fallthru
          _
        %s738 = sand.u32 %s61, 1
        %s739 = sand.u32 %s61, 1
        %s740 = smul.addr %s739, 8
        %s741 = scalar_lea.vmem [#allocation4], %s740
        %p742 = pneg %p74
        %p743 = pneg %p71
        %s744 = sand.u32 %s89, 1
        %s745 = scalar_lea.sflag [#allocation6], %s744
        %s746 = sand.u32 %s89, 1
        %s747 = smul.addr %s746, 8
        %s748 = scalar_lea.vmem [#allocation5], %s747
        %p749 = pneg %p102
        %p750 = pneg %p99
        %p751 = pneg %p123
        %p752 = pneg %p120
        %p753 = pneg %p144
        %p754 = pneg %p141
        %p755 = pneg %p165
        %p756 = pneg %p162
        %p757 = pneg %p186
        %p758 = pneg %p183
        %p759 = pneg %p207
        %p760 = pneg %p204
        %p761 = pneg %p228
        %p762 = pneg %p225
        %p763 = pneg %p249
        %p764 = pneg %p246
        %p765 = pneg %p270
        %p766 = pneg %p267
        %p767 = pneg %p291
        %p768 = pneg %p288
        %p769 = pneg %p312
        %p770 = pneg %p309
        %p771 = pneg %p333
        %p772 = pneg %p330
        %p773 = pneg %p354
        %p774 = pneg %p351
        %p775 = pneg %p375
        %p776 = pneg %p372
        %p777 = pneg %p396
        %p778 = pneg %p393
        %p779 = pneg %p417
        %p780 = pneg %p414
        %p781 = pneg %p438
        %p782 = pneg %p435
        %p783 = pneg %p464
        %p784 = pneg %p461
        %s785 = sand.u32 %s451, 1
        %s786 = scalar_lea.sflag [#allocation7], %s785
        %s787 = sand.u32 %s451, 1
        %s788 = smul.addr %s787, 16
        %s789 = scalar_lea.vmem [#allocation20], %s788
        %p791 = scmp.eq.s32.totalorder %s44, 0
        // Predicated region
        $region170: #{tpu_custom_call.1} parent=128 // pred_check
          %p792 = pneg %p791
        $region171: #{tpu_custom_call.1} parent=128 // pred_check_branch
          %794 = sbr.rel (%p792) target = $region173
        $region172: #{tpu_custom_call.1} parent=128 // pred_region
          %vm795 = vcmask 130048
          %796 = vst.msk [vmem:[#allocation2] sm:$0xff] %vm795, 0.0
          %797 = vst.msk [vmem:[#allocation2 + $0x8] sm:$0xff] %vm795, 0.0
          %798 = vst.msk [vmem:[#allocation3] sm:$0xff] %vm795, 0.0
          %799 = vst.msk [vmem:[#allocation3 + $0x8] sm:$0xff] %vm795, 0.0
        $region173: #{tpu_custom_call.1} parent=128 // pred_fallthru
          _
        %v800 = vld [vmem:[%s693] sm:$0xf]
        %v801 = vld [vmem:[%s693 + $0x4] sm:$0xf]
        %v802 = vld [vmem:[%s701] sm:$0xf]
        %v803 = vld [vmem:[%s701 + $0x4] sm:$0xf]
        %v804 = vld [vmem:[#allocation8] sm:$0xf]
        %v805 = vld [vmem:[#allocation8 + $0x4] sm:$0xf]
        %v806 = vld [vmem:[#allocation10] sm:$0xf]
        %v807 = vld [vmem:[#allocation10 + $0x4] sm:$0xf]
        %v808 = vld [vmem:[%s3] sm:$0xff]
        %v809 = vld [vmem:[%s3 + $0x8] sm:$0xff]
        %811 = vset.pattern.permute.xlu0 0
        %812 = vperm.xlu0 %811, %v808
        %v813 = vpop.permute.xlu0 %812
        %816 = vset.pattern.permute.xlu0 0
        %817 = vperm.xlu0 %816, %v809
        %v818 = vpop.permute.xlu0 %817
        %v822 = vunpack.c.l.b16 %v804
        %v823 = vunpack.c.l.b16 %v805
        %v824 = vpack.c.b16 %v823, %v822
        %v827 = vunpack.c.l.b16 %v800
        %v828 = vunpack.c.l.b16 %v801
        %v829 = vpack.c.b16 %v828, %v827
        %vm831 = vcmask 130048
        %v833 = vsel %vm831, %v824, 0
        %835 = vmatprep.subr.bf16.mxu0 0
        %836 = vmatpush1.bf16.msra.mxu0 %v829
        %837 = vmatprep.subr.bf16.mxu0 0
        %838 = vmatpush1.bf16.msra.mxu0 0
        %839 = vmatprep.subr.bf16.mxu0 0
        %840 = vmatpush1.bf16.msra.mxu0 0
        %841 = vmatprep.subr.bf16.mxu0 0
        %842 = vmatpush1.bf16.msra.mxu0 0
        %843 = vmatprep.subr.bf16.mxu0 0
        %844 = vmatpush1.bf16.msra.mxu0 0
        %845 = vmatprep.subr.bf16.mxu0 0
        %846 = vmatpush1.bf16.msra.mxu0 0
        %847 = vmatprep.subr.bf16.mxu0 0
        %848 = vmatpush1.bf16.msra.mxu0 0
        %849 = vmatprep.subr.bf16.mxu0 0
        %850 = vmatpush1.bf16.msra.mxu0 0
        %851 = vmatprep.subr.bf16.mxu0 0
        %852 = vmatpush1.bf16.msra.mxu0 0
        %853 = vmatprep.subr.bf16.mxu0 0
        %854 = vmatpush1.bf16.msra.mxu0 0
        %855 = vmatprep.subr.bf16.mxu0 0
        %856 = vmatpush1.bf16.msra.mxu0 0
        %857 = vmatprep.subr.bf16.mxu0 0
        %858 = vmatpush1.bf16.msra.mxu0 0
        %859 = vmatprep.subr.bf16.mxu0 0
        %860 = vmatpush1.bf16.msra.mxu0 0
        %861 = vmatprep.subr.bf16.mxu0 0
        %862 = vmatpush1.bf16.msra.mxu0 0
        %863 = vmatprep.subr.bf16.mxu0 0
        %864 = vmatpush1.bf16.msra.mxu0 0
        %865 = vmatprep.subr.bf16.mxu0 0
        %866 = vmatpush1.bf16.msra.mxu0 0
        %867 = vmatprep.mubr.bf16.mxu0 0
        %868 = vmatmul.mubr.bf16.gmra.mrb[0].mxu0 %v833
        %v869 = vpop.f32.mrb[0].mxu0
        %v870 = vadd.f32 %v813, %v869
        %v871 = vpop.f32.mrb[0].mxu0
        %v872 = vpop.f32.mrb[0].mxu0
        %v873 = vadd.f32 %v818, %v872
        %v874 = vpop.f32.mrb[0].mxu0
        %875 = vdwg.mxu0
        %v878 = vunpack.c.l.b16 %v802
        %v879 = vunpack.c.l.b16 %v803
        %v880 = vpack.c.b16 %v879, %v878
        %882 = vmatprep.subr.bf16.mxu0 0
        %883 = vmatpush1.bf16.msra.mxu0 %v880
        %884 = vmatprep.subr.bf16.mxu0 0
        %885 = vmatpush1.bf16.msra.mxu0 0
        %886 = vmatprep.subr.bf16.mxu0 0
        %887 = vmatpush1.bf16.msra.mxu0 0
        %888 = vmatprep.subr.bf16.mxu0 0
        %889 = vmatpush1.bf16.msra.mxu0 0
        %890 = vmatprep.subr.bf16.mxu0 0
        %891 = vmatpush1.bf16.msra.mxu0 0
        %892 = vmatprep.subr.bf16.mxu0 0
        %893 = vmatpush1.bf16.msra.mxu0 0
        %894 = vmatprep.subr.bf16.mxu0 0
        %895 = vmatpush1.bf16.msra.mxu0 0
        %896 = vmatprep.subr.bf16.mxu0 0
        %897 = vmatpush1.bf16.msra.mxu0 0
        %898 = vmatprep.subr.bf16.mxu0 0
        %899 = vmatpush1.bf16.msra.mxu0 0
        %900 = vmatprep.subr.bf16.mxu0 0
        %901 = vmatpush1.bf16.msra.mxu0 0
        %902 = vmatprep.subr.bf16.mxu0 0
        %903 = vmatpush1.bf16.msra.mxu0 0
        %904 = vmatprep.subr.bf16.mxu0 0
        %905 = vmatpush1.bf16.msra.mxu0 0
        %906 = vmatprep.subr.bf16.mxu0 0
        %907 = vmatpush1.bf16.msra.mxu0 0
        %908 = vmatprep.subr.bf16.mxu0 0
        %909 = vmatpush1.bf16.msra.mxu0 0
        %910 = vmatprep.subr.bf16.mxu0 0
        %911 = vmatpush1.bf16.msra.mxu0 0
        %912 = vmatprep.subr.bf16.mxu0 0
        %913 = vmatpush1.bf16.msra.mxu0 0
        %914 = vmatprep.mubr.bf16.mxu0 0
        %915 = vmatmul.mubr.bf16.gmra.mrb[0].mxu0 %v833
        %v916 = vpop.f32.mrb[0].mxu0
        %v917 = vadd.f32 %v813, %v916
        %v918 = vpop.f32.mrb[0].mxu0
        %v919 = vpop.f32.mrb[0].mxu0
        %v920 = vadd.f32 %v818, %v919
        %v921 = vpop.f32.mrb[0].mxu0
        %922 = vdwg.mxu0
        %v923 = vld [vmem:[%s5] sm:$0xff]
        %v924 = vld [vmem:[%s5 + $0x8] sm:$0xff]
        %926 = vset.pattern.permute.xlu0 0
        %927 = vperm.xlu0 %926, %v923
        %v928 = vpop.permute.xlu0 %927
        %931 = vset.pattern.permute.xlu0 0
        %932 = vperm.xlu0 %931, %v924
        %v933 = vpop.permute.xlu0 %932
        %v937 = vunpack.c.l.b16 %v806
        %v938 = vunpack.c.l.b16 %v807
        %v939 = vpack.c.b16 %v938, %v937
        %v941 = vsel %vm831, %v939, 0
        %943 = vmatprep.subr.bf16.mxu0 0
        %944 = vmatpush1.bf16.msra.mxu0 %v829
        %945 = vmatprep.subr.bf16.mxu0 0
        %946 = vmatpush1.bf16.msra.mxu0 0
        %947 = vmatprep.subr.bf16.mxu0 0
        %948 = vmatpush1.bf16.msra.mxu0 0
        %949 = vmatprep.subr.bf16.mxu0 0
        %950 = vmatpush1.bf16.msra.mxu0 0
        %951 = vmatprep.subr.bf16.mxu0 0
        %952 = vmatpush1.bf16.msra.mxu0 0
        %953 = vmatprep.subr.bf16.mxu0 0
        %954 = vmatpush1.bf16.msra.mxu0 0
        %955 = vmatprep.subr.bf16.mxu0 0
        %956 = vmatpush1.bf16.msra.mxu0 0
        %957 = vmatprep.subr.bf16.mxu0 0
        %958 = vmatpush1.bf16.msra.mxu0 0
        %959 = vmatprep.subr.bf16.mxu0 0
        %960 = vmatpush1.bf16.msra.mxu0 0
        %961 = vmatprep.subr.bf16.mxu0 0
        %962 = vmatpush1.bf16.msra.mxu0 0
        %963 = vmatprep.subr.bf16.mxu0 0
        %964 = vmatpush1.bf16.msra.mxu0 0
        %965 = vmatprep.subr.bf16.mxu0 0
        %966 = vmatpush1.bf16.msra.mxu0 0
        %967 = vmatprep.subr.bf16.mxu0 0
        %968 = vmatpush1.bf16.msra.mxu0 0
        %969 = vmatprep.subr.bf16.mxu0 0
        %970 = vmatpush1.bf16.msra.mxu0 0
        %971 = vmatprep.subr.bf16.mxu0 0
        %972 = vmatpush1.bf16.msra.mxu0 0
        %973 = vmatprep.subr.bf16.mxu0 0
        %974 = vmatpush1.bf16.msra.mxu0 0
        %975 = vmatprep.mubr.bf16.mxu0 0
        %976 = vmatmul.mubr.bf16.gmra.mrb[0].mxu0 %v941
        %v977 = vpop.f32.mrb[0].mxu0
        %v978 = vadd.f32 %v928, %v977
        %v979 = vpop.f32.mrb[0].mxu0
        %v980 = vpop.f32.mrb[0].mxu0
        %v981 = vadd.f32 %v933, %v980
        %v982 = vpop.f32.mrb[0].mxu0
        %983 = vdwg.mxu0
        %984 = vmatprep.subr.bf16.mxu0 0
        %985 = vmatpush1.bf16.msra.mxu0 %v880
        %986 = vmatprep.subr.bf16.mxu0 0
        %987 = vmatpush1.bf16.msra.mxu0 0
        %988 = vmatprep.subr.bf16.mxu0 0
        %989 = vmatpush1.bf16.msra.mxu0 0
        %990 = vmatprep.subr.bf16.mxu0 0
        %991 = vmatpush1.bf16.msra.mxu0 0
        %992 = vmatprep.subr.bf16.mxu0 0
        %993 = vmatpush1.bf16.msra.mxu0 0
        %994 = vmatprep.subr.bf16.mxu0 0
        %995 = vmatpush1.bf16.msra.mxu0 0
        %996 = vmatprep.subr.bf16.mxu0 0
        %997 = vmatpush1.bf16.msra.mxu0 0
        %998 = vmatprep.subr.bf16.mxu0 0
        %999 = vmatpush1.bf16.msra.mxu0 0
        %1000 = vmatprep.subr.bf16.mxu0 0
        %1001 = vmatpush1.bf16.msra.mxu0 0
        %1002 = vmatprep.subr.bf16.mxu0 0
        %1003 = vmatpush1.bf16.msra.mxu0 0
        %1004 = vmatprep.subr.bf16.mxu0 0
        %1005 = vmatpush1.bf16.msra.mxu0 0
        %1006 = vmatprep.subr.bf16.mxu0 0
        %1007 = vmatpush1.bf16.msra.mxu0 0
        %1008 = vmatprep.subr.bf16.mxu0 0
        %1009 = vmatpush1.bf16.msra.mxu0 0
        %1010 = vmatprep.subr.bf16.mxu0 0
        %1011 = vmatpush1.bf16.msra.mxu0 0
        %1012 = vmatprep.subr.bf16.mxu0 0
        %1013 = vmatpush1.bf16.msra.mxu0 0
        %1014 = vmatprep.subr.bf16.mxu0 0
        %1015 = vmatpush1.bf16.msra.mxu0 0
        %1016 = vmatprep.mubr.bf16.mxu0 0
        %1017 = vmatmul.mubr.bf16.gmra.mrb[0].mxu0 %v941
        %v1018 = vpop.f32.mrb[0].mxu0
        %v1019 = vadd.f32 %v928, %v1018
        %v1020 = vpop.f32.mrb[0].mxu0
        %v1021 = vpop.f32.mrb[0].mxu0
        %v1022 = vadd.f32 %v933, %v1021
        %v1023 = vpop.f32.mrb[0].mxu0
        %1024 = vdwg.mxu0
        %v1025 = vld [vmem:[#allocation2] sm:$0xff]
        %v1026 = vld [vmem:[#allocation2 + $0x8] sm:$0xff]
        %v1027 = vpack.c.bf16 %v873, %v870
        %v1028 = vpack.c.bf16 %v1022, %v1019
        %1029 = vmatprep.subr.bf16.mxu0 0
        %1030 = vmatpush1.bf16.xpose.msra.mxu0 %v1028
        %1031 = vmatprep.subr.bf16.mxu0 0
        %1032 = vmatpush1.bf16.xpose.msra.mxu0 0
        %1033 = vmatprep.subr.bf16.mxu0 0
        %1034 = vmatpush1.bf16.xpose.msra.mxu0 0
        %1035 = vmatprep.subr.bf16.mxu0 0
        %1036 = vmatpush1.bf16.xpose.msra.mxu0 0
        %1037 = vmatprep.subr.bf16.mxu0 0
        %1038 = vmatpush1.bf16.xpose.msra.mxu0 0
        %1039 = vmatprep.subr.bf16.mxu0 0
        %1040 = vmatpush1.bf16.xpose.msra.mxu0 0
        %1041 = vmatprep.subr.bf16.mxu0 0
        %1042 = vmatpush1.bf16.xpose.msra.mxu0 0
        %1043 = vmatprep.subr.bf16.mxu0 0
        %1044 = vmatpush1.bf16.xpose.msra.mxu0 0
        %1045 = vmatprep.subr.bf16.mxu0 0
        %1046 = vmatpush1.bf16.xpose.msra.mxu0 0
        %1047 = vmatprep.subr.bf16.mxu0 0
        %1048 = vmatpush1.bf16.xpose.msra.mxu0 0
        %1049 = vmatprep.subr.bf16.mxu0 0
        %1050 = vmatpush1.bf16.xpose.msra.mxu0 0
        %1051 = vmatprep.subr.bf16.mxu0 0
        %1052 = vmatpush1.bf16.xpose.msra.mxu0 0
        %1053 = vmatprep.subr.bf16.mxu0 0
        %1054 = vmatpush1.bf16.xpose.msra.mxu0 0
        %1055 = vmatprep.subr.bf16.mxu0 0
        %1056 = vmatpush1.bf16.xpose.msra.mxu0 0
        %1057 = vmatprep.subr.bf16.mxu0 0
        %1058 = vmatpush1.bf16.xpose.msra.mxu0 0
        %1059 = vmatprep.subr.bf16.mxu0 0
        %1060 = vmatpush1.bf16.xpose.msra.mxu0 0
        %1061 = vmatprep.mubr.bf16.mxu0 0
        %1062 = vmatmul.mubr.bf16.gmra.mrb[0].mxu0 %v1027
        %v1063 = vpop.f32.mrb[0].mxu0
        %v1064 = vadd.f32 0.0, %v1063
        %v1065 = vpop.f32.mrb[0].mxu0
        %v1066 = vpop.f32.mrb[0].mxu0
        %v1067 = vadd.f32 0.0, %v1066
        %v1068 = vpop.f32.mrb[0].mxu0
        %1069 = vdwg.mxu0
        %v1070 = vadd.f32 %v1025, %v1064
        %v1071 = vadd.f32 %v1026, %v1067
        %1072 = vst.msk [vmem:[#allocation2] sm:$0xff] %vm831, %v1070
        %1073 = vst.msk [vmem:[#allocation2 + $0x8] sm:$0xff] %vm831, %v1071
        %v1074 = vld [vmem:[#allocation3] sm:$0xff]
        %v1075 = vld [vmem:[#allocation3 + $0x8] sm:$0xff]
        %v1076 = vpack.c.bf16 %v920, %v917
        %v1077 = vpack.c.bf16 %v981, %v978
        %1078 = vmatprep.subr.bf16.mxu0 0
        %1079 = vmatpush1.bf16.xpose.msra.mxu0 %v1077
        %1080 = vmatprep.subr.bf16.mxu0 0
        %1081 = vmatpush1.bf16.xpose.msra.mxu0 0
        %1082 = vmatprep.subr.bf16.mxu0 0
        %1083 = vmatpush1.bf16.xpose.msra.mxu0 0
        %1084 = vmatprep.subr.bf16.mxu0 0
        %1085 = vmatpush1.bf16.xpose.msra.mxu0 0
        %1086 = vmatprep.subr.bf16.mxu0 0
        %1087 = vmatpush1.bf16.xpose.msra.mxu0 0
        %1088 = vmatprep.subr.bf16.mxu0 0
        %1089 = vmatpush1.bf16.xpose.msra.mxu0 0
        %1090 = vmatprep.subr.bf16.mxu0 0
        %1091 = vmatpush1.bf16.xpose.msra.mxu0 0
        %1092 = vmatprep.subr.bf16.mxu0 0
        %1093 = vmatpush1.bf16.xpose.msra.mxu0 0
        %1094 = vmatprep.subr.bf16.mxu0 0
        %1095 = vmatpush1.bf16.xpose.msra.mxu0 0
        %1096 = vmatprep.subr.bf16.mxu0 0
        %1097 = vmatpush1.bf16.xpose.msra.mxu0 0
        %1098 = vmatprep.subr.bf16.mxu0 0
        %1099 = vmatpush1.bf16.xpose.msra.mxu0 0
        %1100 = vmatprep.subr.bf16.mxu0 0
        %1101 = vmatpush1.bf16.xpose.msra.mxu0 0
        %1102 = vmatprep.subr.bf16.mxu0 0
        %1103 = vmatpush1.bf16.xpose.msra.mxu0 0
        %1104 = vmatprep.subr.bf16.mxu0 0
        %1105 = vmatpush1.bf16.xpose.msra.mxu0 0
        %1106 = vmatprep.subr.bf16.mxu0 0
        %1107 = vmatpush1.bf16.xpose.msra.mxu0 0
        %1108 = vmatprep.subr.bf16.mxu0 0
        %1109 = vmatpush1.bf16.xpose.msra.mxu0 0
        %1110 = vmatprep.mubr.bf16.mxu0 0
        %1111 = vmatmul.mubr.bf16.gmra.mrb[0].mxu0 %v1076
        %v1112 = vpop.f32.mrb[0].mxu0
        %v1113 = vadd.f32 0.0, %v1112
        %v1114 = vpop.f32.mrb[0].mxu0
        %v1115 = vpop.f32.mrb[0].mxu0
        %v1116 = vadd.f32 0.0, %v1115
        %v1117 = vpop.f32.mrb[0].mxu0
        %1118 = vdwg.mxu0
        %v1119 = vadd.f32 %v1074, %v1113
        %v1120 = vadd.f32 %v1075, %v1116
        %1121 = vst.msk [vmem:[#allocation3] sm:$0xff] %vm831, %v1119
        %1122 = vst.msk [vmem:[#allocation3 + $0x8] sm:$0xff] %vm831, %v1120
        %p1123 = scmp.eq.s32.totalorder %s44, 1
        // Predicated region
        $region174: #{tpu_custom_call.1} parent=128 // pred_check
          %p1124 = pneg %p1123
        $region175: #{tpu_custom_call.1} parent=128 // pred_check_branch
          %1126 = sbr.rel (%p1124) target = $region177
        $region176: #{tpu_custom_call.1} parent=128 // pred_region
          %v1127 = vld [vmem:[#allocation2] sm:$0xff]
          %v1128 = vld [vmem:[#allocation2 + $0x8] sm:$0xff]
          %v1129 = vld [vmem:[#allocation3] sm:$0xff]
          %v1130 = vld [vmem:[#allocation3 + $0x8] sm:$0xff]
          %v1131 = vld [vmem:[%s6] sm:$0xff]
          %v1132 = vld [vmem:[%s6 + $0x8] sm:$0xff]
          %v1133 = vld [vmem:[%s7] sm:$0xff]
          %v1134 = vld [vmem:[%s7 + $0x8] sm:$0xff]
          %v1136 = vsel %vm831, %v1129, 0
          %v1139 = vsel %vm831, %v1130, 0
          %v1142 = vsel %vm831, %v1133, 0
          %v1145 = vsel %vm831, %v1134, 0
          %1147 = vmatprep.subr.mxu0 0.0
          %1148 = vmatpush1.xpose.msra.mxu0 %v1142
          %1149 = vmatprep.subr.mxu0 0.0
          %1150 = vmatpush1.xpose.msra.mxu0 %v1145
          %1151 = vmatprep.subr.mxu0 0.0
          %1152 = vmatpush1.xpose.msra.mxu0 0.0
          %1153 = vmatprep.subr.mxu0 0.0
          %1154 = vmatpush1.xpose.msra.mxu0 0.0
          %1155 = vmatprep.subr.mxu0 0.0
          %1156 = vmatpush1.xpose.msra.mxu0 0.0
          %1157 = vmatprep.subr.mxu0 0.0
          %1158 = vmatpush1.xpose.msra.mxu0 0.0
          %1159 = vmatprep.subr.mxu0 0.0
          %1160 = vmatpush1.xpose.msra.mxu0 0.0
          %1161 = vmatprep.subr.mxu0 0.0
          %1162 = vmatpush1.xpose.msra.mxu0 0.0
          %1163 = vmatprep.subr.mxu0 0.0
          %1164 = vmatpush1.xpose.msra.mxu0 0.0
          %1165 = vmatprep.subr.mxu0 0.0
          %1166 = vmatpush1.xpose.msra.mxu0 0.0
          %1167 = vmatprep.subr.mxu0 0.0
          %1168 = vmatpush1.xpose.msra.mxu0 0.0
          %1169 = vmatprep.subr.mxu0 0.0
          %1170 = vmatpush1.xpose.msra.mxu0 0.0
          %1171 = vmatprep.subr.mxu0 0.0
          %1172 = vmatpush1.xpose.msra.mxu0 0.0
          %1173 = vmatprep.subr.mxu0 0.0
          %1174 = vmatpush1.xpose.msra.mxu0 0.0
          %1175 = vmatprep.subr.mxu0 0.0
          %1176 = vmatpush1.xpose.msra.mxu0 0.0
          %1177 = vmatprep.subr.mxu0 0.0
          %1178 = vmatpush1.xpose.msra.mxu0 0.0
          %1179 = vmatprep.subr.mxu0 0.0
          %1180 = vmatpush1.xpose.msra.mxu0 0.0
          %1181 = vmatprep.subr.mxu0 0.0
          %1182 = vmatpush1.xpose.msra.mxu0 0.0
          %1183 = vmatprep.subr.mxu0 0.0
          %1184 = vmatpush1.xpose.msra.mxu0 0.0
          %1185 = vmatprep.subr.mxu0 0.0
          %1186 = vmatpush1.xpose.msra.mxu0 0.0
          %1187 = vmatprep.subr.mxu0 0.0
          %1188 = vmatpush1.xpose.msra.mxu0 0.0
          %1189 = vmatprep.subr.mxu0 0.0
          %1190 = vmatpush1.xpose.msra.mxu0 0.0
          %1191 = vmatprep.subr.mxu0 0.0
          %1192 = vmatpush1.xpose.msra.mxu0 0.0
          %1193 = vmatprep.subr.mxu0 0.0
          %1194 = vmatpush1.xpose.msra.mxu0 0.0
          %1195 = vmatprep.subr.mxu0 0.0
          %1196 = vmatpush1.xpose.msra.mxu0 0.0
          %1197 = vmatprep.subr.mxu0 0.0
          %1198 = vmatpush1.xpose.msra.mxu0 0.0
          %1199 = vmatprep.subr.mxu0 0.0
          %1200 = vmatpush1.xpose.msra.mxu0 0.0
          %1201 = vmatprep.subr.mxu0 0.0
          %1202 = vmatpush1.xpose.msra.mxu0 0.0
          %1203 = vmatprep.subr.mxu0 0.0
          %1204 = vmatpush1.xpose.msra.mxu0 0.0
          %1205 = vmatprep.subr.mxu0 0.0
          %1206 = vmatpush1.xpose.msra.mxu0 0.0
          %1207 = vmatprep.subr.mxu0 0.0
          %1208 = vmatpush1.xpose.msra.mxu0 0.0
          %1209 = vmatprep.subr.mxu0 0.0
          %1210 = vmatpush1.xpose.msra.mxu0 0.0
          %1211 = vmatprep.mubr.f32.mxu0 0.0
          %1212 = vmatmul.mubr.f32.gmra.mrb[0].mxu0 %v1136
          %v1213 = vpop.f32.mrb[0].mxu0
          %v1214 = vadd.f32 0.0, %v1213
          %v1215 = vpop.f32.mrb[0].mxu0
          %1216 = vmatprep.mubr.f32.mxu0 0.0
          %1217 = vmatmul.mubr.f32.gmra.mrb[0].mxu0 %v1139
          %v1218 = vpop.f32.mrb[0].mxu0
          %v1219 = vadd.f32 0.0, %v1218
          %v1220 = vpop.f32.mrb[0].mxu0
          %1221 = vdwg.mxu0
          %v1223 = vsel %vm831, %v1127, 0
          %v1226 = vsel %vm831, %v1128, 0
          %v1229 = vsel %vm831, %v1131, 0
          %v1232 = vsel %vm831, %v1132, 0
          %1234 = vmatprep.subr.mxu0 0.0
          %1235 = vmatpush1.xpose.msra.mxu0 %v1229
          %1236 = vmatprep.subr.mxu0 0.0
          %1237 = vmatpush1.xpose.msra.mxu0 %v1232
          %1238 = vmatprep.subr.mxu0 0.0
          %1239 = vmatpush1.xpose.msra.mxu0 0.0
          %1240 = vmatprep.subr.mxu0 0.0
          %1241 = vmatpush1.xpose.msra.mxu0 0.0
          %1242 = vmatprep.subr.mxu0 0.0
          %1243 = vmatpush1.xpose.msra.mxu0 0.0
          %1244 = vmatprep.subr.mxu0 0.0
          %1245 = vmatpush1.xpose.msra.mxu0 0.0
          %1246 = vmatprep.subr.mxu0 0.0
          %1247 = vmatpush1.xpose.msra.mxu0 0.0
          %1248 = vmatprep.subr.mxu0 0.0
          %1249 = vmatpush1.xpose.msra.mxu0 0.0
          %1250 = vmatprep.subr.mxu0 0.0
          %1251 = vmatpush1.xpose.msra.mxu0 0.0
          %1252 = vmatprep.subr.mxu0 0.0
          %1253 = vmatpush1.xpose.msra.mxu0 0.0
          %1254 = vmatprep.subr.mxu0 0.0
          %1255 = vmatpush1.xpose.msra.mxu0 0.0
          %1256 = vmatprep.subr.mxu0 0.0
          %1257 = vmatpush1.xpose.msra.mxu0 0.0
          %1258 = vmatprep.subr.mxu0 0.0
          %1259 = vmatpush1.xpose.msra.mxu0 0.0
          %1260 = vmatprep.subr.mxu0 0.0
          %1261 = vmatpush1.xpose.msra.mxu0 0.0
          %1262 = vmatprep.subr.mxu0 0.0
          %1263 = vmatpush1.xpose.msra.mxu0 0.0
          %1264 = vmatprep.subr.mxu0 0.0
          %1265 = vmatpush1.xpose.msra.mxu0 0.0
          %1266 = vmatprep.subr.mxu0 0.0
          %1267 = vmatpush1.xpose.msra.mxu0 0.0
          %1268 = vmatprep.subr.mxu0 0.0
          %1269 = vmatpush1.xpose.msra.mxu0 0.0
          %1270 = vmatprep.subr.mxu0 0.0
          %1271 = vmatpush1.xpose.msra.mxu0 0.0
          %1272 = vmatprep.subr.mxu0 0.0
          %1273 = vmatpush1.xpose.msra.mxu0 0.0
          %1274 = vmatprep.subr.mxu0 0.0
          %1275 = vmatpush1.xpose.msra.mxu0 0.0
          %1276 = vmatprep.subr.mxu0 0.0
          %1277 = vmatpush1.xpose.msra.mxu0 0.0
          %1278 = vmatprep.subr.mxu0 0.0
          %1279 = vmatpush1.xpose.msra.mxu0 0.0
          %1280 = vmatprep.subr.mxu0 0.0
          %1281 = vmatpush1.xpose.msra.mxu0 0.0
          %1282 = vmatprep.subr.mxu0 0.0
          %1283 = vmatpush1.xpose.msra.mxu0 0.0
          %1284 = vmatprep.subr.mxu0 0.0
          %1285 = vmatpush1.xpose.msra.mxu0 0.0
          %1286 = vmatprep.subr.mxu0 0.0
          %1287 = vmatpush1.xpose.msra.mxu0 0.0
          %1288 = vmatprep.subr.mxu0 0.0
          %1289 = vmatpush1.xpose.msra.mxu0 0.0
          %1290 = vmatprep.subr.mxu0 0.0
          %1291 = vmatpush1.xpose.msra.mxu0 0.0
          %1292 = vmatprep.subr.mxu0 0.0
          %1293 = vmatpush1.xpose.msra.mxu0 0.0
          %1294 = vmatprep.subr.mxu0 0.0
          %1295 = vmatpush1.xpose.msra.mxu0 0.0
          %1296 = vmatprep.subr.mxu0 0.0
          %1297 = vmatpush1.xpose.msra.mxu0 0.0
          %1298 = vmatprep.mubr.f32.mxu0 0.0
          %1299 = vmatmul.mubr.f32.gmra.mrb[0].mxu0 %v1223
          %v1300 = vpop.f32.mrb[0].mxu0
          %v1301 = vadd.f32 %v1214, %v1300
          %v1302 = vpop.f32.mrb[0].mxu0
          %1303 = vmatprep.mubr.f32.mxu0 0.0
          %1304 = vmatmul.mubr.f32.gmra.mrb[0].mxu0 %v1226
          %v1305 = vpop.f32.mrb[0].mxu0
          %v1306 = vadd.f32 %v1219, %v1305
          %v1307 = vpop.f32.mrb[0].mxu0
          %1308 = vdwg.mxu0
          %v1309 = vld [vmem:[#allocation13] sm:$0x1]
          %v1311 = vlaneseq
          %v1312 = vshrl.u32 %v1311, 7
          %v1313 = vsub.s32 0, %v1312
          %v1314 = vrot.slane %v1309, %v1313
          %v1316 = vadd.f32 %v1301, %v1314
          %v1317 = vadd.f32 %v1306, %v1314
          %v1318 = vld [vmem:[%s8] sm:$0xff]
          %v1319 = vld [vmem:[%s8 + $0x8] sm:$0xff]
          %v1320 = vld [vmem:[#allocation11] sm:$0xff]
          %v1321 = vld [vmem:[#allocation11 + $0x8] sm:$0xff]
          %v1323 = vsel %vm831, %v1320, 0
          %v1326 = vsel %vm831, %v1321, 0
          %1328 = vmatprep.subr.mxu0 0.0
          %1329 = vmatpush1.xpose.msra.mxu0 %v1323
          %1330 = vmatprep.subr.mxu0 0.0
          %1331 = vmatpush1.xpose.msra.mxu0 %v1326
          %1332 = vmatprep.subr.mxu0 0.0
          %1333 = vmatpush1.xpose.msra.mxu0 0.0
          %1334 = vmatprep.subr.mxu0 0.0
          %1335 = vmatpush1.xpose.msra.mxu0 0.0
          %1336 = vmatprep.subr.mxu0 0.0
          %1337 = vmatpush1.xpose.msra.mxu0 0.0
          %1338 = vmatprep.subr.mxu0 0.0
          %1339 = vmatpush1.xpose.msra.mxu0 0.0
          %1340 = vmatprep.subr.mxu0 0.0
          %1341 = vmatpush1.xpose.msra.mxu0 0.0
          %1342 = vmatprep.subr.mxu0 0.0
          %1343 = vmatpush1.xpose.msra.mxu0 0.0
          %1344 = vmatprep.subr.mxu0 0.0
          %1345 = vmatpush1.xpose.msra.mxu0 0.0
          %1346 = vmatprep.subr.mxu0 0.0
          %1347 = vmatpush1.xpose.msra.mxu0 0.0
          %1348 = vmatprep.subr.mxu0 0.0
          %1349 = vmatpush1.xpose.msra.mxu0 0.0
          %1350 = vmatprep.subr.mxu0 0.0
          %1351 = vmatpush1.xpose.msra.mxu0 0.0
          %1352 = vmatprep.subr.mxu0 0.0
          %1353 = vmatpush1.xpose.msra.mxu0 0.0
          %1354 = vmatprep.subr.mxu0 0.0
          %1355 = vmatpush1.xpose.msra.mxu0 0.0
          %1356 = vmatprep.subr.mxu0 0.0
          %1357 = vmatpush1.xpose.msra.mxu0 0.0
          %1358 = vmatprep.subr.mxu0 0.0
          %1359 = vmatpush1.xpose.msra.mxu0 0.0
          %1360 = vmatprep.subr.mxu0 0.0
          %1361 = vmatpush1.xpose.msra.mxu0 0.0
          %1362 = vmatprep.subr.mxu0 0.0
          %1363 = vmatpush1.xpose.msra.mxu0 0.0
          %1364 = vmatprep.subr.mxu0 0.0
          %1365 = vmatpush1.xpose.msra.mxu0 0.0
          %1366 = vmatprep.subr.mxu0 0.0
          %1367 = vmatpush1.xpose.msra.mxu0 0.0
          %1368 = vmatprep.subr.mxu0 0.0
          %1369 = vmatpush1.xpose.msra.mxu0 0.0
          %1370 = vmatprep.subr.mxu0 0.0
          %1371 = vmatpush1.xpose.msra.mxu0 0.0
          %1372 = vmatprep.subr.mxu0 0.0
          %1373 = vmatpush1.xpose.msra.mxu0 0.0
          %1374 = vmatprep.subr.mxu0 0.0
          %1375 = vmatpush1.xpose.msra.mxu0 0.0
          %1376 = vmatprep.subr.mxu0 0.0
          %1377 = vmatpush1.xpose.msra.mxu0 0.0
          %1378 = vmatprep.subr.mxu0 0.0
          %1379 = vmatpush1.xpose.msra.mxu0 0.0
          %1380 = vmatprep.subr.mxu0 0.0
          %1381 = vmatpush1.xpose.msra.mxu0 0.0
          %1382 = vmatprep.subr.mxu0 0.0
          %1383 = vmatpush1.xpose.msra.mxu0 0.0
          %1384 = vmatprep.subr.mxu0 0.0
          %1385 = vmatpush1.xpose.msra.mxu0 0.0
          %1386 = vmatprep.subr.mxu0 0.0
          %1387 = vmatpush1.xpose.msra.mxu0 0.0
          %1388 = vmatprep.subr.mxu0 0.0
          %1389 = vmatpush1.xpose.msra.mxu0 0.0
          %1390 = vmatprep.subr.mxu0 0.0
          %1391 = vmatpush1.xpose.msra.mxu0 0.0
          %1392 = vmatprep.mubr.f32.mxu0 0.0
          %1393 = vmatmul.mubr.f32.gmra.mrb[0].mxu0 %v1136
          %v1394 = vpop.f32.mrb[0].mxu0
          %v1395 = vadd.f32 0.0, %v1394
          %v1396 = vpop.f32.mrb[0].mxu0
          %1397 = vmatprep.mubr.f32.mxu0 0.0
          %1398 = vmatmul.mubr.f32.gmra.mrb[0].mxu0 %v1139
          %v1399 = vpop.f32.mrb[0].mxu0
          %v1400 = vadd.f32 0.0, %v1399
          %v1401 = vpop.f32.mrb[0].mxu0
          %1402 = vdwg.mxu0
          %v1404 = vsel %vm831, %v1318, 0
          %v1407 = vsel %vm831, %v1319, 0
          %1409 = vmatprep.subr.mxu0 0.0
          %1410 = vmatpush1.xpose.msra.mxu0 %v1404
          %1411 = vmatprep.subr.mxu0 0.0
          %1412 = vmatpush1.xpose.msra.mxu0 %v1407
          %1413 = vmatprep.subr.mxu0 0.0
          %1414 = vmatpush1.xpose.msra.mxu0 0.0
          %1415 = vmatprep.subr.mxu0 0.0
          %1416 = vmatpush1.xpose.msra.mxu0 0.0
          %1417 = vmatprep.subr.mxu0 0.0
          %1418 = vmatpush1.xpose.msra.mxu0 0.0
          %1419 = vmatprep.subr.mxu0 0.0
          %1420 = vmatpush1.xpose.msra.mxu0 0.0
          %1421 = vmatprep.subr.mxu0 0.0
          %1422 = vmatpush1.xpose.msra.mxu0 0.0
          %1423 = vmatprep.subr.mxu0 0.0
          %1424 = vmatpush1.xpose.msra.mxu0 0.0
          %1425 = vmatprep.subr.mxu0 0.0
          %1426 = vmatpush1.xpose.msra.mxu0 0.0
          %1427 = vmatprep.subr.mxu0 0.0
          %1428 = vmatpush1.xpose.msra.mxu0 0.0
          %1429 = vmatprep.subr.mxu0 0.0
          %1430 = vmatpush1.xpose.msra.mxu0 0.0
          %1431 = vmatprep.subr.mxu0 0.0
          %1432 = vmatpush1.xpose.msra.mxu0 0.0
          %1433 = vmatprep.subr.mxu0 0.0
          %1434 = vmatpush1.xpose.msra.mxu0 0.0
          %1435 = vmatprep.subr.mxu0 0.0
          %1436 = vmatpush1.xpose.msra.mxu0 0.0
          %1437 = vmatprep.subr.mxu0 0.0
          %1438 = vmatpush1.xpose.msra.mxu0 0.0
          %1439 = vmatprep.subr.mxu0 0.0
          %1440 = vmatpush1.xpose.msra.mxu0 0.0
          %1441 = vmatprep.subr.mxu0 0.0
          %1442 = vmatpush1.xpose.msra.mxu0 0.0
          %1443 = vmatprep.subr.mxu0 0.0
          %1444 = vmatpush1.xpose.msra.mxu0 0.0
          %1445 = vmatprep.subr.mxu0 0.0
          %1446 = vmatpush1.xpose.msra.mxu0 0.0
          %1447 = vmatprep.subr.mxu0 0.0
          %1448 = vmatpush1.xpose.msra.mxu0 0.0
          %1449 = vmatprep.subr.mxu0 0.0
          %1450 = vmatpush1.xpose.msra.mxu0 0.0
          %1451 = vmatprep.subr.mxu0 0.0
          %1452 = vmatpush1.xpose.msra.mxu0 0.0
          %1453 = vmatprep.subr.mxu0 0.0
          %1454 = vmatpush1.xpose.msra.mxu0 0.0
          %1455 = vmatprep.subr.mxu0 0.0
          %1456 = vmatpush1.xpose.msra.mxu0 0.0
          %1457 = vmatprep.subr.mxu0 0.0
          %1458 = vmatpush1.xpose.msra.mxu0 0.0
          %1459 = vmatprep.subr.mxu0 0.0
          %1460 = vmatpush1.xpose.msra.mxu0 0.0
          %1461 = vmatprep.subr.mxu0 0.0
          %1462 = vmatpush1.xpose.msra.mxu0 0.0
          %1463 = vmatprep.subr.mxu0 0.0
          %1464 = vmatpush1.xpose.msra.mxu0 0.0
          %1465 = vmatprep.subr.mxu0 0.0
          %1466 = vmatpush1.xpose.msra.mxu0 0.0
          %1467 = vmatprep.subr.mxu0 0.0
          %1468 = vmatpush1.xpose.msra.mxu0 0.0
          %1469 = vmatprep.subr.mxu0 0.0
          %1470 = vmatpush1.xpose.msra.mxu0 0.0
          %1471 = vmatprep.subr.mxu0 0.0
          %1472 = vmatpush1.xpose.msra.mxu0 0.0
          %1473 = vmatprep.mubr.f32.mxu0 0.0
          %1474 = vmatmul.mubr.f32.gmra.mrb[0].mxu0 %v1223
          %v1475 = vpop.f32.mrb[0].mxu0
          %v1476 = vadd.f32 %v1395, %v1475
          %v1477 = vpop.f32.mrb[0].mxu0
          %1478 = vmatprep.mubr.f32.mxu0 0.0
          %1479 = vmatmul.mubr.f32.gmra.mrb[0].mxu0 %v1226
          %v1480 = vpop.f32.mrb[0].mxu0
          %v1481 = vadd.f32 %v1400, %v1480
          %v1482 = vpop.f32.mrb[0].mxu0
          %1483 = vdwg.mxu0
          %v1484 = vld [vmem:[#allocation14] sm:$0x1]
          %v1486 = vlaneseq
          %v1487 = vshrl.u32 %v1486, 7
          %v1488 = vsub.s32 0, %v1487
          %v1489 = vrot.slane %v1484, %v1488
          %v1491 = vadd.f32 %v1476, %v1489
          %v1492 = vadd.f32 %v1481, %v1489
          %v1493 = vadd.f32 %v1316, %v1127
          %v1494 = vadd.f32 %v1317, %v1128
          %v1495 = vmax.f32 %v1493, 0.0
          %v1496 = vmax.f32 %v1494, 0.0
          %v1497 = vadd.f32 %v1491, %v1129
          %v1498 = vadd.f32 %v1492, %v1130
          %v1499 = vmax.f32 %v1497, 0.0
          %v1500 = vmax.f32 %v1498, 0.0
          %v1501 = vld [vmem:[%s12] sm:$0xff]
          %v1502 = vld [vmem:[%s12 + $0x8] sm:$0xff]
          %v1504 = vsel %vm831, %v1501, 0
          %v1507 = vsel %vm831, %v1502, 0
          %1509 = vmatprep.subr.mxu0 0.0
          %1510 = vmatpush1.msra.mxu0 %v1495
          %1511 = vmatprep.subr.mxu0 0.0
          %1512 = vmatpush1.msra.mxu0 %v1496
          %1513 = vmatprep.subr.mxu0 0.0
          %1514 = vmatpush1.msra.mxu0 0.0
          %1515 = vmatprep.subr.mxu0 0.0
          %1516 = vmatpush1.msra.mxu0 0.0
          %1517 = vmatprep.subr.mxu0 0.0
          %1518 = vmatpush1.msra.mxu0 0.0
          %1519 = vmatprep.subr.mxu0 0.0
          %1520 = vmatpush1.msra.mxu0 0.0
          %1521 = vmatprep.subr.mxu0 0.0
          %1522 = vmatpush1.msra.mxu0 0.0
          %1523 = vmatprep.subr.mxu0 0.0
          %1524 = vmatpush1.msra.mxu0 0.0
          %1525 = vmatprep.subr.mxu0 0.0
          %1526 = vmatpush1.msra.mxu0 0.0
          %1527 = vmatprep.subr.mxu0 0.0
          %1528 = vmatpush1.msra.mxu0 0.0
          %1529 = vmatprep.subr.mxu0 0.0
          %1530 = vmatpush1.msra.mxu0 0.0
          %1531 = vmatprep.subr.mxu0 0.0
          %1532 = vmatpush1.msra.mxu0 0.0
          %1533 = vmatprep.subr.mxu0 0.0
          %1534 = vmatpush1.msra.mxu0 0.0
          %1535 = vmatprep.subr.mxu0 0.0
          %1536 = vmatpush1.msra.mxu0 0.0
          %1537 = vmatprep.subr.mxu0 0.0
          %1538 = vmatpush1.msra.mxu0 0.0
          %1539 = vmatprep.subr.mxu0 0.0
          %1540 = vmatpush1.msra.mxu0 0.0
          %1541 = vmatprep.subr.mxu0 0.0
          %1542 = vmatpush1.msra.mxu0 0.0
          %1543 = vmatprep.subr.mxu0 0.0
          %1544 = vmatpush1.msra.mxu0 0.0
          %1545 = vmatprep.subr.mxu0 0.0
          %1546 = vmatpush1.msra.mxu0 0.0
          %1547 = vmatprep.subr.mxu0 0.0
          %1548 = vmatpush1.msra.mxu0 0.0
          %1549 = vmatprep.subr.mxu0 0.0
          %1550 = vmatpush1.msra.mxu0 0.0
          %1551 = vmatprep.subr.mxu0 0.0
          %1552 = vmatpush1.msra.mxu0 0.0
          %1553 = vmatprep.subr.mxu0 0.0
          %1554 = vmatpush1.msra.mxu0 0.0
          %1555 = vmatprep.subr.mxu0 0.0
          %1556 = vmatpush1.msra.mxu0 0.0
          %1557 = vmatprep.subr.mxu0 0.0
          %1558 = vmatpush1.msra.mxu0 0.0
          %1559 = vmatprep.subr.mxu0 0.0
          %1560 = vmatpush1.msra.mxu0 0.0
          %1561 = vmatprep.subr.mxu0 0.0
          %1562 = vmatpush1.msra.mxu0 0.0
          %1563 = vmatprep.subr.mxu0 0.0
          %1564 = vmatpush1.msra.mxu0 0.0
          %1565 = vmatprep.subr.mxu0 0.0
          %1566 = vmatpush1.msra.mxu0 0.0
          %1567 = vmatprep.subr.mxu0 0.0
          %1568 = vmatpush1.msra.mxu0 0.0
          %1569 = vmatprep.subr.mxu0 0.0
          %1570 = vmatpush1.msra.mxu0 0.0
          %1571 = vmatprep.subr.mxu0 0.0
          %1572 = vmatpush1.msra.mxu0 0.0
          %1573 = vmatprep.mubr.f32.mxu0 0.0
          %1574 = vmatmul.mubr.f32.gmra.mrb[0].mxu0 %v1504
          %v1575 = vpop.f32.mrb[0].mxu0
          %v1576 = vadd.f32 0.0, %v1575
          %v1577 = vpop.f32.mrb[0].mxu0
          %1578 = vmatprep.mubr.f32.mxu0 0.0
          %1579 = vmatmul.mubr.f32.gmra.mrb[0].mxu0 %v1507
          %v1580 = vpop.f32.mrb[0].mxu0
          %v1581 = vadd.f32 0.0, %v1580
          %v1582 = vpop.f32.mrb[0].mxu0
          %1583 = vdwg.mxu0
          %1584 = vmatprep.subr.mxu0 0.0
          %1585 = vmatpush1.msra.mxu0 %v1499
          %1586 = vmatprep.subr.mxu0 0.0
          %1587 = vmatpush1.msra.mxu0 %v1500
          %1588 = vmatprep.subr.mxu0 0.0
          %1589 = vmatpush1.msra.mxu0 0.0
          %1590 = vmatprep.subr.mxu0 0.0
          %1591 = vmatpush1.msra.mxu0 0.0
          %1592 = vmatprep.subr.mxu0 0.0
          %1593 = vmatpush1.msra.mxu0 0.0
          %1594 = vmatprep.subr.mxu0 0.0
          %1595 = vmatpush1.msra.mxu0 0.0
          %1596 = vmatprep.subr.mxu0 0.0
          %1597 = vmatpush1.msra.mxu0 0.0
          %1598 = vmatprep.subr.mxu0 0.0
          %1599 = vmatpush1.msra.mxu0 0.0
          %1600 = vmatprep.subr.mxu0 0.0
          %1601 = vmatpush1.msra.mxu0 0.0
          %1602 = vmatprep.subr.mxu0 0.0
          %1603 = vmatpush1.msra.mxu0 0.0
          %1604 = vmatprep.subr.mxu0 0.0
          %1605 = vmatpush1.msra.mxu0 0.0
          %1606 = vmatprep.subr.mxu0 0.0
          %1607 = vmatpush1.msra.mxu0 0.0
          %1608 = vmatprep.subr.mxu0 0.0
          %1609 = vmatpush1.msra.mxu0 0.0
          %1610 = vmatprep.subr.mxu0 0.0
          %1611 = vmatpush1.msra.mxu0 0.0
          %1612 = vmatprep.subr.mxu0 0.0
          %1613 = vmatpush1.msra.mxu0 0.0
          %1614 = vmatprep.subr.mxu0 0.0
          %1615 = vmatpush1.msra.mxu0 0.0
          %1616 = vmatprep.subr.mxu0 0.0
          %1617 = vmatpush1.msra.mxu0 0.0
          %1618 = vmatprep.subr.mxu0 0.0
          %1619 = vmatpush1.msra.mxu0 0.0
          %1620 = vmatprep.subr.mxu0 0.0
          %1621 = vmatpush1.msra.mxu0 0.0
          %1622 = vmatprep.subr.mxu0 0.0
          %1623 = vmatpush1.msra.mxu0 0.0
          %1624 = vmatprep.subr.mxu0 0.0
          %1625 = vmatpush1.msra.mxu0 0.0
          %1626 = vmatprep.subr.mxu0 0.0
          %1627 = vmatpush1.msra.mxu0 0.0
          %1628 = vmatprep.subr.mxu0 0.0
          %1629 = vmatpush1.msra.mxu0 0.0
          %1630 = vmatprep.subr.mxu0 0.0
          %1631 = vmatpush1.msra.mxu0 0.0
          %1632 = vmatprep.subr.mxu0 0.0
          %1633 = vmatpush1.msra.mxu0 0.0
          %1634 = vmatprep.subr.mxu0 0.0
          %1635 = vmatpush1.msra.mxu0 0.0
          %1636 = vmatprep.subr.mxu0 0.0
          %1637 = vmatpush1.msra.mxu0 0.0
          %1638 = vmatprep.subr.mxu0 0.0
          %1639 = vmatpush1.msra.mxu0 0.0
          %1640 = vmatprep.subr.mxu0 0.0
          %1641 = vmatpush1.msra.mxu0 0.0
          %1642 = vmatprep.subr.mxu0 0.0
          %1643 = vmatpush1.msra.mxu0 0.0
          %1644 = vmatprep.subr.mxu0 0.0
          %1645 = vmatpush1.msra.mxu0 0.0
          %1646 = vmatprep.subr.mxu0 0.0
          %1647 = vmatpush1.msra.mxu0 0.0
          %1648 = vmatprep.mubr.f32.mxu0 0.0
          %1649 = vmatmul.mubr.f32.gmra.mrb[0].mxu0 %v1504
          %v1650 = vpop.f32.mrb[0].mxu0
          %v1651 = vadd.f32 0.0, %v1650
          %v1652 = vpop.f32.mrb[0].mxu0
          %1653 = vmatprep.mubr.f32.mxu0 0.0
          %1654 = vmatmul.mubr.f32.gmra.mrb[0].mxu0 %v1507
          %v1655 = vpop.f32.mrb[0].mxu0
          %v1656 = vadd.f32 0.0, %v1655
          %v1657 = vpop.f32.mrb[0].mxu0
          %1658 = vdwg.mxu0
          %v1659 = vld [vmem:[#allocation16] sm:$0xff]
          %v1660 = vld [vmem:[#allocation16 + $0x8] sm:$0xff]
          %v1661 = vld [vmem:[#allocation17] sm:$0xff]
          %v1662 = vld [vmem:[#allocation17 + $0x8] sm:$0xff]
          %v1664 = vsel %vm831, %v1651, 0
          %v1667 = vsel %vm831, %v1656, 0
          %v1670 = vsel %vm831, %v1661, 0
          %v1673 = vsel %vm831, %v1662, 0
          %1675 = vmatprep.subr.mxu0 0.0
          %1676 = vmatpush1.xpose.msra.mxu0 %v1670
          %1677 = vmatprep.subr.mxu0 0.0
          %1678 = vmatpush1.xpose.msra.mxu0 %v1673
          %1679 = vmatprep.subr.mxu0 0.0
          %1680 = vmatpush1.xpose.msra.mxu0 0.0
          %1681 = vmatprep.subr.mxu0 0.0
          %1682 = vmatpush1.xpose.msra.mxu0 0.0
          %1683 = vmatprep.subr.mxu0 0.0
          %1684 = vmatpush1.xpose.msra.mxu0 0.0
          %1685 = vmatprep.subr.mxu0 0.0
          %1686 = vmatpush1.xpose.msra.mxu0 0.0
          %1687 = vmatprep.subr.mxu0 0.0
          %1688 = vmatpush1.xpose.msra.mxu0 0.0
          %1689 = vmatprep.subr.mxu0 0.0
          %1690 = vmatpush1.xpose.msra.mxu0 0.0
          %1691 = vmatprep.subr.mxu0 0.0
          %1692 = vmatpush1.xpose.msra.mxu0 0.0
          %1693 = vmatprep.subr.mxu0 0.0
          %1694 = vmatpush1.xpose.msra.mxu0 0.0
          %1695 = vmatprep.subr.mxu0 0.0
          %1696 = vmatpush1.xpose.msra.mxu0 0.0
          %1697 = vmatprep.subr.mxu0 0.0
          %1698 = vmatpush1.xpose.msra.mxu0 0.0
          %1699 = vmatprep.subr.mxu0 0.0
          %1700 = vmatpush1.xpose.msra.mxu0 0.0
          %1701 = vmatprep.subr.mxu0 0.0
          %1702 = vmatpush1.xpose.msra.mxu0 0.0
          %1703 = vmatprep.subr.mxu0 0.0
          %1704 = vmatpush1.xpose.msra.mxu0 0.0
          %1705 = vmatprep.subr.mxu0 0.0
          %1706 = vmatpush1.xpose.msra.mxu0 0.0
          %1707 = vmatprep.subr.mxu0 0.0
          %1708 = vmatpush1.xpose.msra.mxu0 0.0
          %1709 = vmatprep.subr.mxu0 0.0
          %1710 = vmatpush1.xpose.msra.mxu0 0.0
          %1711 = vmatprep.subr.mxu0 0.0
          %1712 = vmatpush1.xpose.msra.mxu0 0.0
          %1713 = vmatprep.subr.mxu0 0.0
          %1714 = vmatpush1.xpose.msra.mxu0 0.0
          %1715 = vmatprep.subr.mxu0 0.0
          %1716 = vmatpush1.xpose.msra.mxu0 0.0
          %1717 = vmatprep.subr.mxu0 0.0
          %1718 = vmatpush1.xpose.msra.mxu0 0.0
          %1719 = vmatprep.subr.mxu0 0.0
          %1720 = vmatpush1.xpose.msra.mxu0 0.0
          %1721 = vmatprep.subr.mxu0 0.0
          %1722 = vmatpush1.xpose.msra.mxu0 0.0
          %1723 = vmatprep.subr.mxu0 0.0
          %1724 = vmatpush1.xpose.msra.mxu0 0.0
          %1725 = vmatprep.subr.mxu0 0.0
          %1726 = vmatpush1.xpose.msra.mxu0 0.0
          %1727 = vmatprep.subr.mxu0 0.0
          %1728 = vmatpush1.xpose.msra.mxu0 0.0
          %1729 = vmatprep.subr.mxu0 0.0
          %1730 = vmatpush1.xpose.msra.mxu0 0.0
          %1731 = vmatprep.subr.mxu0 0.0
          %1732 = vmatpush1.xpose.msra.mxu0 0.0
          %1733 = vmatprep.subr.mxu0 0.0
          %1734 = vmatpush1.xpose.msra.mxu0 0.0
          %1735 = vmatprep.subr.mxu0 0.0
          %1736 = vmatpush1.xpose.msra.mxu0 0.0
          %1737 = vmatprep.subr.mxu0 0.0
          %1738 = vmatpush1.xpose.msra.mxu0 0.0
          %1739 = vmatprep.mubr.f32.mxu0 0.0
          %1740 = vmatmul.mubr.f32.gmra.mrb[0].mxu0 %v1664
          %v1741 = vpop.f32.mrb[0].mxu0
          %v1742 = vadd.f32 0.0, %v1741
          %v1743 = vpop.f32.mrb[0].mxu0
          %1744 = vmatprep.mubr.f32.mxu0 0.0
          %1745 = vmatmul.mubr.f32.gmra.mrb[0].mxu0 %v1667
          %v1746 = vpop.f32.mrb[0].mxu0
          %v1747 = vadd.f32 0.0, %v1746
          %v1748 = vpop.f32.mrb[0].mxu0
          %1749 = vdwg.mxu0
          %v1751 = vsel %vm831, %v1576, 0
          %v1754 = vsel %vm831, %v1581, 0
          %v1757 = vsel %vm831, %v1659, 0
          %v1760 = vsel %vm831, %v1660, 0
          %1762 = vmatprep.subr.mxu0 0.0
          %1763 = vmatpush1.xpose.msra.mxu0 %v1757
          %1764 = vmatprep.subr.mxu0 0.0
          %1765 = vmatpush1.xpose.msra.mxu0 %v1760
          %1766 = vmatprep.subr.mxu0 0.0
          %1767 = vmatpush1.xpose.msra.mxu0 0.0
          %1768 = vmatprep.subr.mxu0 0.0
          %1769 = vmatpush1.xpose.msra.mxu0 0.0
          %1770 = vmatprep.subr.mxu0 0.0
          %1771 = vmatpush1.xpose.msra.mxu0 0.0
          %1772 = vmatprep.subr.mxu0 0.0
          %1773 = vmatpush1.xpose.msra.mxu0 0.0
          %1774 = vmatprep.subr.mxu0 0.0
          %1775 = vmatpush1.xpose.msra.mxu0 0.0
          %1776 = vmatprep.subr.mxu0 0.0
          %1777 = vmatpush1.xpose.msra.mxu0 0.0
          %1778 = vmatprep.subr.mxu0 0.0
          %1779 = vmatpush1.xpose.msra.mxu0 0.0
          %1780 = vmatprep.subr.mxu0 0.0
          %1781 = vmatpush1.xpose.msra.mxu0 0.0
          %1782 = vmatprep.subr.mxu0 0.0
          %1783 = vmatpush1.xpose.msra.mxu0 0.0
          %1784 = vmatprep.subr.mxu0 0.0
          %1785 = vmatpush1.xpose.msra.mxu0 0.0
          %1786 = vmatprep.subr.mxu0 0.0
          %1787 = vmatpush1.xpose.msra.mxu0 0.0
          %1788 = vmatprep.subr.mxu0 0.0
          %1789 = vmatpush1.xpose.msra.mxu0 0.0
          %1790 = vmatprep.subr.mxu0 0.0
          %1791 = vmatpush1.xpose.msra.mxu0 0.0
          %1792 = vmatprep.subr.mxu0 0.0
          %1793 = vmatpush1.xpose.msra.mxu0 0.0
          %1794 = vmatprep.subr.mxu0 0.0
          %1795 = vmatpush1.xpose.msra.mxu0 0.0
          %1796 = vmatprep.subr.mxu0 0.0
          %1797 = vmatpush1.xpose.msra.mxu0 0.0
          %1798 = vmatprep.subr.mxu0 0.0
          %1799 = vmatpush1.xpose.msra.mxu0 0.0
          %1800 = vmatprep.subr.mxu0 0.0
          %1801 = vmatpush1.xpose.msra.mxu0 0.0
          %1802 = vmatprep.subr.mxu0 0.0
          %1803 = vmatpush1.xpose.msra.mxu0 0.0
          %1804 = vmatprep.subr.mxu0 0.0
          %1805 = vmatpush1.xpose.msra.mxu0 0.0
          %1806 = vmatprep.subr.mxu0 0.0
          %1807 = vmatpush1.xpose.msra.mxu0 0.0
          %1808 = vmatprep.subr.mxu0 0.0
          %1809 = vmatpush1.xpose.msra.mxu0 0.0
          %1810 = vmatprep.subr.mxu0 0.0
          %1811 = vmatpush1.xpose.msra.mxu0 0.0
          %1812 = vmatprep.subr.mxu0 0.0
          %1813 = vmatpush1.xpose.msra.mxu0 0.0
          %1814 = vmatprep.subr.mxu0 0.0
          %1815 = vmatpush1.xpose.msra.mxu0 0.0
          %1816 = vmatprep.subr.mxu0 0.0
          %1817 = vmatpush1.xpose.msra.mxu0 0.0
          %1818 = vmatprep.subr.mxu0 0.0
          %1819 = vmatpush1.xpose.msra.mxu0 0.0
          %1820 = vmatprep.subr.mxu0 0.0
          %1821 = vmatpush1.xpose.msra.mxu0 0.0
          %1822 = vmatprep.subr.mxu0 0.0
          %1823 = vmatpush1.xpose.msra.mxu0 0.0
          %1824 = vmatprep.subr.mxu0 0.0
          %1825 = vmatpush1.xpose.msra.mxu0 0.0
          %1826 = vmatprep.mubr.f32.mxu0 0.0
          %1827 = vmatmul.mubr.f32.gmra.mrb[0].mxu0 %v1751
          %v1828 = vpop.f32.mrb[0].mxu0
          %v1829 = vadd.f32 %v1742, %v1828
          %v1830 = vpop.f32.mrb[0].mxu0
          %1831 = vmatprep.mubr.f32.mxu0 0.0
          %1832 = vmatmul.mubr.f32.gmra.mrb[0].mxu0 %v1754
          %v1833 = vpop.f32.mrb[0].mxu0
          %v1834 = vadd.f32 %v1747, %v1833
          %v1835 = vpop.f32.mrb[0].mxu0
          %1836 = vdwg.mxu0
          %v1837 = vld [vmem:[%s15] sm:$0x1]
          %v1839 = vlaneseq
          %v1840 = vshrl.u32 %v1839, 7
          %v1841 = vsub.s32 0, %v1840
          %v1842 = vrot.slane %v1837, %v1841
          %v1844 = vadd.f32 %v1829, %v1842
          %v1845 = vadd.f32 %v1834, %v1842
          %v1846 = vld [vmem:[#allocation19] sm:$0xff]
          %v1847 = vld [vmem:[#allocation19 + $0x8] sm:$0xff]
          %v1849 = vsel %vm831, %v1846, 0
          %v1852 = vsel %vm831, %v1847, 0
          %1854 = vmatprep.subr.mxu0 0.0
          %1855 = vmatpush1.msra.mxu0 %v1844
          %1856 = vmatprep.subr.mxu0 0.0
          %1857 = vmatpush1.msra.mxu0 %v1845
          %1858 = vmatprep.subr.mxu0 0.0
          %1859 = vmatpush1.msra.mxu0 0.0
          %1860 = vmatprep.subr.mxu0 0.0
          %1861 = vmatpush1.msra.mxu0 0.0
          %1862 = vmatprep.subr.mxu0 0.0
          %1863 = vmatpush1.msra.mxu0 0.0
          %1864 = vmatprep.subr.mxu0 0.0
          %1865 = vmatpush1.msra.mxu0 0.0
          %1866 = vmatprep.subr.mxu0 0.0
          %1867 = vmatpush1.msra.mxu0 0.0
          %1868 = vmatprep.subr.mxu0 0.0
          %1869 = vmatpush1.msra.mxu0 0.0
          %1870 = vmatprep.subr.mxu0 0.0
          %1871 = vmatpush1.msra.mxu0 0.0
          %1872 = vmatprep.subr.mxu0 0.0
          %1873 = vmatpush1.msra.mxu0 0.0
          %1874 = vmatprep.subr.mxu0 0.0
          %1875 = vmatpush1.msra.mxu0 0.0
          %1876 = vmatprep.subr.mxu0 0.0
          %1877 = vmatpush1.msra.mxu0 0.0
          %1878 = vmatprep.subr.mxu0 0.0
          %1879 = vmatpush1.msra.mxu0 0.0
          %1880 = vmatprep.subr.mxu0 0.0
          %1881 = vmatpush1.msra.mxu0 0.0
          %1882 = vmatprep.subr.mxu0 0.0
          %1883 = vmatpush1.msra.mxu0 0.0
          %1884 = vmatprep.subr.mxu0 0.0
          %1885 = vmatpush1.msra.mxu0 0.0
          %1886 = vmatprep.subr.mxu0 0.0
          %1887 = vmatpush1.msra.mxu0 0.0
          %1888 = vmatprep.subr.mxu0 0.0
          %1889 = vmatpush1.msra.mxu0 0.0
          %1890 = vmatprep.subr.mxu0 0.0
          %1891 = vmatpush1.msra.mxu0 0.0
          %1892 = vmatprep.subr.mxu0 0.0
          %1893 = vmatpush1.msra.mxu0 0.0
          %1894 = vmatprep.subr.mxu0 0.0
          %1895 = vmatpush1.msra.mxu0 0.0
          %1896 = vmatprep.subr.mxu0 0.0
          %1897 = vmatpush1.msra.mxu0 0.0
          %1898 = vmatprep.subr.mxu0 0.0
          %1899 = vmatpush1.msra.mxu0 0.0
          %1900 = vmatprep.subr.mxu0 0.0
          %1901 = vmatpush1.msra.mxu0 0.0
          %1902 = vmatprep.subr.mxu0 0.0
          %1903 = vmatpush1.msra.mxu0 0.0
          %1904 = vmatprep.subr.mxu0 0.0
          %1905 = vmatpush1.msra.mxu0 0.0
          %1906 = vmatprep.subr.mxu0 0.0
          %1907 = vmatpush1.msra.mxu0 0.0
          %1908 = vmatprep.subr.mxu0 0.0
          %1909 = vmatpush1.msra.mxu0 0.0
          %1910 = vmatprep.subr.mxu0 0.0
          %1911 = vmatpush1.msra.mxu0 0.0
          %1912 = vmatprep.subr.mxu0 0.0
          %1913 = vmatpush1.msra.mxu0 0.0
          %1914 = vmatprep.subr.mxu0 0.0
          %1915 = vmatpush1.msra.mxu0 0.0
          %1916 = vmatprep.subr.mxu0 0.0
          %1917 = vmatpush1.msra.mxu0 0.0
          %1918 = vmatprep.mubr.f32.mxu0 0.0
          %1919 = vmatmul.mubr.f32.gmra.mrb[0].mxu0 %v1849
          %v1920 = vpop.f32.mrb[0].mxu0
          %v1921 = vadd.f32 0.0, %v1920
          %v1922 = vpop.f32.mrb[0].mxu0
          %1923 = vmatprep.mubr.f32.mxu0 0.0
          %1924 = vmatmul.mubr.f32.gmra.mrb[0].mxu0 %v1852
          %v1925 = vpop.f32.mrb[0].mxu0
          %v1926 = vadd.f32 0.0, %v1925
          %v1927 = vpop.f32.mrb[0].mxu0
          %1928 = vdwg.mxu0
          %v1929 = vld [vmem:[%s17] sm:$0xff]
          %v1930 = vld [vmem:[%s17 + $0x8] sm:$0xff]
          %1932 = vset.pattern.permute.xlu0 0
          %1933 = vperm.xlu0 %1932, %v1929
          %v1934 = vpop.permute.xlu0 %1933
          %1937 = vset.pattern.permute.xlu0 0
          %1938 = vperm.xlu0 %1937, %v1930
          %v1939 = vpop.permute.xlu0 %1938
          %v1941 = vmul.f32 %v1921, %v1934
          %v1942 = vmul.f32 %v1926, %v1939
          %1943 = vst.msk [vmem:[%s789] sm:$0xff] %vm831, %v1941
          %1944 = vst.msk [vmem:[%s789 + $0x8] sm:$0xff] %vm831, %v1942
        $region177: #{tpu_custom_call.1} parent=128 // pred_fallthru
          _
        %s1945 = sand.u32 %s451, 1
        %s1946 = scalar_lea.sflag [#allocation7], %s1945
        %s1947 = sand.u32 %s451, 1
        %s1948 = smul.addr %s1947, 16
        %s1949 = scalar_lea.vmem [#allocation20], %s1948
        // Predicated region
        $region178: #{tpu_custom_call.1} parent=128 // pred_check
          %p1950 = pneg %p461
        $region179: #{tpu_custom_call.1} parent=128 // pred_check_branch
          %1952 = sbr.rel (%p1950) target = $region181
        $region180: #{tpu_custom_call.1} parent=128 // pred_region
          %s1954 = ssub.s32 256, 256
          %1955 = vsyncadd %s1946, %s1954
          %s1956 = smul.addr %s43, 2
          %s1957 = smul.addr %s1956, 128
          %s1958 = scalar_lea.hbm %s18, %s1957
          %s1959 = sshll.u32 %s1949, 4
          %s1960 = int_to_ptr.vmem [resolvable:$true] %s1959
          %1965 = dma.vmem_to_hbm [thread:$0]  %s1960, 256, %s1958, %s1946, 128, 128, 8
        $region181: #{tpu_custom_call.1} parent=128 // pred_fallthru
          _
      $region129: #{tpu_custom_call.1} parent=5 // pred_fallthru
        _
      %p1966 = scmp.le.s32.totalorder 2, %s34
      // Predicated region
      $region182: #{tpu_custom_call.1} parent=5 // pred_check
        %p1967 = pneg %p1966
      $region183: #{tpu_custom_call.1} parent=5 // pred_check_branch
        %1969 = sbr.rel (%p1967) target = $region185
      $region184: #{tpu_custom_call.1} parent=5 // pred_region
        %s1970 = ssub.s32 %s34, 2
        // Predicated region
        $region186: #{tpu_custom_call.1} parent=184 // pred_check
          %p1971 = pneg %p467
        $region187: #{tpu_custom_call.1} parent=184 // pred_check_branch
          %1973 = sbr.rel (%p1971) target = $region189
        $region188: #{tpu_custom_call.1} parent=184 // pred_region
          %s1974 = sand.u32 %s452, 1
          %s1975 = scalar_lea.sflag [#allocation7], %s1974
          %s1976 = sand.u32 %s452, 1
          %s1977 = smul.addr %s1976, 16
          %s1978 = scalar_lea.vmem [#allocation20], %s1977
          %1979 = dma.done %s1975, 256
        $region189: #{tpu_custom_call.1} parent=184 // pred_fallthru
          _
      $region185: #{tpu_custom_call.1} parent=5 // pred_fallthru
        _
    $region6: #{tpu_custom_call.1} parent=1 // loop_footer
      %s38 = sadd.s32 1, %s34
    $region7: #{tpu_custom_call.1} parent=1 // loop_footer_branch
      %33 = sbr.rel target = $region3
    $region8: #{tpu_custom_call.1} parent=1 // loop_exit
      _
    %1980 = vsyncpa [#allocation6], 1
    %s1981 = scalar_lea.sflag [#allocation6], 1
    %1982 = vsyncpa %s1981, 1
    %1983 = vsyncpa [#allocation9], 1
    %1984 = vsyncpa [#allocation12], 1
    %1985 = vsyncpa [#allocation15], 1
    %1986 = vsyncpa [#allocation18], 1
    %1987 = vsyncpa [#allocation7], 1
    %s1988 = scalar_lea.sflag [#allocation7], 1
    %1989 = vsyncpa %s1988, 1

// kernel: tpu_custom_call.1
$region0: #{tpu_custom_call.1}
  #allocation0 [shape = 'u32[]', space=smem, size = 0x4, offset = 0x4, fixed_abs, tag = 'smem constant byte address 0x4 - core index']
  #allocation1 [shape = 'u32[144,128]{1,0:T(1,128)}', space=vmem, size = 0x12000, scoped, tag = 'internal scratch']
  #allocation2 [shape = 'f32[16,16]{1,0:T(8,128)}', space=vmem, size = 0x2000, scoped, tag = 'scratch operand']
  #allocation3 [shape = 'f32[16,16]{1,0:T(8,128)}', space=vmem, size = 0x2000, scoped, tag = 'scratch operand']
  %s0 = inlined_call_operand.vmem [shape: bf16[2,16,256], index: 0, kind: input, shape index: {}]
  %s1 = inlined_call_operand.hbm [shape: bf16[2,16,256], index: 1, kind: input, shape index: {}]
  %s2 = inlined_call_operand.hbm [shape: bf16[16,16], index: 2, kind: input, shape index: {}]
  %s3 = inlined_call_operand.vmem [shape: f32[16,1], index: 3, kind: input, shape index: {}]
  %s4 = inlined_call_operand.hbm [shape: bf16[16,16], index: 4, kind: input, shape index: {}]
  %s5 = inlined_call_operand.vmem [shape: f32[16,1], index: 5, kind: input, shape index: {}]
  %s6 = inlined_call_operand.vmem [shape: f32[16,16], index: 6, kind: input, shape index: {}]
  %s7 = inlined_call_operand.vmem [shape: f32[16,16], index: 7, kind: input, shape index: {}]
  %s8 = inlined_call_operand.vmem [shape: f32[16,16], index: 8, kind: input, shape index: {}]
  %s9 = inlined_call_operand.hbm [shape: f32[16,16], index: 9, kind: input, shape index: {}]
  %s10 = inlined_call_operand.hbm [shape: f32[1,16], index: 10, kind: input, shape index: {}]
  %s11 = inlined_call_operand.hbm [shape: f32[1,16], index: 11, kind: input, shape index: {}]
  %s12 = inlined_call_operand.vmem [shape: f32[16,16], index: 12, kind: input, shape index: {}]
  %s13 = inlined_call_operand.hbm [shape: f32[16,16], index: 13, kind: input, shape index: {}]
  %s14 = inlined_call_operand.hbm [shape: f32[16,16], index: 14, kind: input, shape index: {}]
  %s15 = inlined_call_operand.vmem [shape: f32[1,16], index: 15, kind: input, shape index: {}]
  %s16 = inlined_call_operand.hbm [shape: f32[16,16], index: 16, kind: input, shape index: {}]
  %s17 = inlined_call_operand.vmem [shape: f32[16,1], index: 17, kind: input, shape index: {}]
  %s18 = inlined_call_operand.hbm [shape: f32[2,16,16], index: 18, kind: output, shape index: {}]
  %s19 = sld [smem:[#allocation0]]
  $region190: #{tpu_custom_call.1} parent=0
    _
  %s21 = ssub.s32 1, %s19
  %s22 = scalar_select 0, %s21, %s19
  $region1: #{tpu_custom_call.1} parent=0
    #allocation4 [shape = 'u8[8192]{0}', space=vmem, size = 0x2000, scoped, tag = 'input window, operand 0']
    #allocation5 [shape = 'u8[8192]{0}', space=vmem, size = 0x2000, scoped, tag = 'input window, operand 1']
    #allocation6 [shape = 's32[2]{0}', space=sflag, size = 0x8, scoped, tag = 'scoped memory for tpu_custom_call.1']
    #allocation7 [shape = 's32[2]{0}', space=sflag, size = 0x8, scoped, tag = 'scoped memory for tpu_custom_call.1']
    #allocation8 [shape = 'u8[4096]{0}', space=vmem, size = 0x1000, scoped, tag = 'input window, operand 2, single buffered']
    #allocation9 [shape = 's32[1]{0}', space=sflag, size = 0x4, scoped, tag = 'scoped memory for tpu_custom_call.1']
    #allocation10 [shape = 'u8[4096]{0}', space=vmem, size = 0x1000, scoped, tag = 'input window, operand 4, single buffered']
    #allocation11 [shape = 'u8[8192]{0}', space=vmem, size = 0x2000, scoped, tag = 'input window, operand 9, single buffered']
    #allocation12 [shape = 's32[1]{0}', space=sflag, size = 0x4, scoped, tag = 'scoped memory for tpu_custom_call.1']
    #allocation13 [shape = 'u8[512]{0}', space=vmem, size = 0x400, scoped, tag = 'input window, operand 10, single buffered']
    #allocation14 [shape = 'u8[512]{0}', space=vmem, size = 0x400, scoped, tag = 'input window, operand 11, single buffered']
    #allocation15 [shape = 's32[1]{0}', space=sflag, size = 0x4, scoped, tag = 'scoped memory for tpu_custom_call.1']
    #allocation16 [shape = 'u8[8192]{0}', space=vmem, size = 0x2000, scoped, tag = 'input window, operand 13, single buffered']
    #allocation17 [shape = 'u8[8192]{0}', space=vmem, size = 0x2000, scoped, tag = 'input window, operand 14, single buffered']
    #allocation18 [shape = 's32[1]{0}', space=sflag, size = 0x4, scoped, tag = 'scoped memory for tpu_custom_call.1']
    #allocation19 [shape = 'u8[8192]{0}', space=vmem, size = 0x2000, scoped, tag = 'input window, operand 16, single buffered']
    #allocation20 [shape = 'u8[16384]{0}', space=vmem, size = 0x4000, scoped, tag = 'output window, operand 0']
    %23 = vsyncpa [#allocation6], 0
    %s24 = scalar_lea.sflag [#allocation6], 1
    %25 = vsyncpa %s24, 0
    %26 = vsyncpa [#allocation9], 0
    %27 = vsyncpa [#allocation12], 0
    %28 = vsyncpa [#allocation15], 0
    %29 = vsyncpa [#allocation18], 0
    %30 = vsyncpa [#allocation7], 0
    %s31 = scalar_lea.sflag [#allocation7], 1
    %32 = vsyncpa %s31, 0
    loop: start=0, step=1, limit=6
    $region2: #{tpu_custom_call.1} parent=1 // loop_pre_header
      _
    $region3: #{tpu_custom_call.1} parent=1 // loop_header
      %s34 = sphi 0, %s38
      %p35 = scmp.ge.s32.totalorder %s34, 6
      %s41 = sphi 0, %s53
      %s42 = sphi 0, %s49
      %s43 = sphi 0, %s41
      %s44 = sphi 0, %s42
      %s45 = sphi 0, %s43
      %s46 = sphi 0, %s44
      %s58 = sphi 0, %s60
      %s61 = sphi 0, %s58
      %s62 = sphi 0, %s61
      %s78 = sphi 0, %s62
      %s86 = sphi 0, %s88
      %s89 = sphi 0, %s86
      %s90 = sphi 0, %s89
      %s106 = sphi 0, %s90
      %s110 = sphi 0, %s110
      %s112 = sphi 0, %s110
      %s113 = sphi 0, %s112
      %s127 = sphi 0, %s113
      %s131 = sphi 0, %s131
      %s133 = sphi 0, %s131
      %s134 = sphi 0, %s133
      %s148 = sphi 0, %s134
      %s152 = sphi 0, %s152
      %s154 = sphi 0, %s152
      %s155 = sphi 0, %s154
      %s169 = sphi 0, %s155
      %s173 = sphi 0, %s173
      %s175 = sphi 0, %s173
      %s176 = sphi 0, %s175
      %s190 = sphi 0, %s176
      %s194 = sphi 0, %s194
      %s196 = sphi 0, %s194
      %s197 = sphi 0, %s196
      %s211 = sphi 0, %s197
      %s215 = sphi 0, %s215
      %s217 = sphi 0, %s215
      %s218 = sphi 0, %s217
      %s232 = sphi 0, %s218
      %s236 = sphi 0, %s236
      %s238 = sphi 0, %s236
      %s239 = sphi 0, %s238
      %s253 = sphi 0, %s239
      %s257 = sphi 0, %s257
      %s259 = sphi 0, %s257
      %s260 = sphi 0, %s259
      %s274 = sphi 0, %s260
      %s278 = sphi 0, %s278
      %s280 = sphi 0, %s278
      %s281 = sphi 0, %s280
      %s295 = sphi 0, %s281
      %s299 = sphi 0, %s299
      %s301 = sphi 0, %s299
      %s302 = sphi 0, %s301
      %s316 = sphi 0, %s302
      %s320 = sphi 0, %s320
      %s322 = sphi 0, %s320
      %s323 = sphi 0, %s322
      %s337 = sphi 0, %s323
      %s341 = sphi 0, %s341
      %s343 = sphi 0, %s341
      %s344 = sphi 0, %s343
      %s358 = sphi 0, %s344
      %s362 = sphi 0, %s362
      %s364 = sphi 0, %s362
      %s365 = sphi 0, %s364
      %s379 = sphi 0, %s365
      %s383 = sphi 0, %s383
      %s385 = sphi 0, %s383
      %s386 = sphi 0, %s385
      %s400 = sphi 0, %s386
      %s404 = sphi 0, %s404
      %s406 = sphi 0, %s404
      %s407 = sphi 0, %s406
      %s421 = sphi 0, %s407
      %s425 = sphi 0, %s425
      %s427 = sphi 0, %s425
      %s428 = sphi 0, %s427
      %s442 = sphi 0, %s428
      %s448 = sphi 0, %s450
      %s451 = sphi 0, %s448
      %s452 = sphi 0, %s451
      %s468 = sphi 0, %s452
    $region4: #{tpu_custom_call.1} parent=1 // loop_header_branch
      %37 = sbr.rel (%p35) target = $region8
    $region5: #{tpu_custom_call.1} parent=1 // loop_body
      %s39 = ssub.s32 %s34, 1
      %s40 = ssub.s32 %s34, 2
      %s47 = sadd.s32 1, %s42
      %p48 = scmp.ge.s32.totalorder %s47, 2
      %s49 = scalar_select %p48, 0, %s47
      %s50 = sadd.s32 1, %s41
      %s51 = scalar_select %p48, %s50, %s41
      %p52 = scmp.ge.s32.totalorder %s51, 2
      %s53 = scalar_select %p52, 0, %s51
      %s54 = ssub.s32 %s41, %s53
      %s55 = ssub.s32 %s42, %s49
      %s56 = sor.u32 %s54, %s55
      %p57 = scmp.eq.s32.totalorder %s56, 0
      %s59 = sadd.s32 %s58, 1
      %s60 = scalar_select %p57, %s58, %s59
      %p63 = pneg %p57
      %p64 = scmp.eq.s32.totalorder %s34, 3
      %p65 = por %p63, %p64
      %p66 = scmp.ne.s32.totalorder %s58, %s61
      %p67 = scmp.eq.s32.totalorder %s34, 0
      %p68 = por %p66, %p67
      %p69 = scmp.ne.s32.totalorder %s58, %s61
      %p70 = scmp.eq.s32.totalorder %s39, 3
      %p71 = por %p69, %p70
      %p72 = scmp.ne.s32.totalorder %s61, %s62
      %p73 = scmp.eq.s32.totalorder %s39, 0
      %p74 = por %p72, %p73
      %p75 = scmp.ne.s32.totalorder %s61, %s62
      %p76 = scmp.eq.s32.totalorder %s40, 3
      %p77 = por %p75, %p76
      %p79 = scmp.ne.s32.totalorder %s62, %s78
      %p80 = scmp.eq.s32.totalorder %s40, 0
      %p81 = por %p79, %p80
      %s82 = ssub.s32 %s41, %s53
      %s83 = ssub.s32 %s42, %s49
      %s84 = sor.u32 %s82, %s83
      %p85 = scmp.eq.s32.totalorder %s84, 0
      %s87 = sadd.s32 %s86, 1
      %s88 = scalar_select %p85, %s86, %s87
      %p91 = pneg %p85
      %p92 = scmp.eq.s32.totalorder %s34, 3
      %p93 = por %p91, %p92
      %p94 = scmp.ne.s32.totalorder %s86, %s89
      %p95 = scmp.eq.s32.totalorder %s34, 0
      %p96 = por %p94, %p95
      %p97 = scmp.ne.s32.totalorder %s86, %s89
      %p98 = scmp.eq.s32.totalorder %s39, 3
      %p99 = por %p97, %p98
      %p100 = scmp.ne.s32.totalorder %s89, %s90
      %p101 = scmp.eq.s32.totalorder %s39, 0
      %p102 = por %p100, %p101
      %p103 = scmp.ne.s32.totalorder %s89, %s90
      %p104 = scmp.eq.s32.totalorder %s40, 3
      %p105 = por %p103, %p104
      %p107 = scmp.ne.s32.totalorder %s90, %s106
      %p108 = scmp.eq.s32.totalorder %s40, 0
      %p109 = por %p107, %p108
      %s111 = sadd.s32 %s110, 1
      %p114 = scmp.eq.s32.totalorder %s34, 3
      %p115 = scmp.ne.s32.totalorder %s110, %s112
      %p116 = scmp.eq.s32.totalorder %s34, 0
      %p117 = por %p115, %p116
      %p118 = scmp.ne.s32.totalorder %s110, %s112
      %p119 = scmp.eq.s32.totalorder %s39, 3
      %p120 = por %p118, %p119
      %p121 = scmp.ne.s32.totalorder %s112, %s113
      %p122 = scmp.eq.s32.totalorder %s39, 0
      %p123 = por %p121, %p122
      %p124 = scmp.ne.s32.totalorder %s112, %s113
      %p125 = scmp.eq.s32.totalorder %s40, 3
      %p126 = por %p124, %p125
      %p128 = scmp.ne.s32.totalorder %s113, %s127
      %p129 = scmp.eq.s32.totalorder %s40, 0
      %p130 = por %p128, %p129
      %s132 = sadd.s32 %s131, 1
      %p135 = scmp.eq.s32.totalorder %s34, 3
      %p136 = scmp.ne.s32.totalorder %s131, %s133
      %p137 = scmp.eq.s32.totalorder %s34, 0
      %p138 = por %p136, %p137
      %p139 = scmp.ne.s32.totalorder %s131, %s133
      %p140 = scmp.eq.s32.totalorder %s39, 3
      %p141 = por %p139, %p140
      %p142 = scmp.ne.s32.totalorder %s133, %s134
      %p143 = scmp.eq.s32.totalorder %s39, 0
      %p144 = por %p142, %p143
      %p145 = scmp.ne.s32.totalorder %s133, %s134
      %p146 = scmp.eq.s32.totalorder %s40, 3
      %p147 = por %p145, %p146
      %p149 = scmp.ne.s32.totalorder %s134, %s148
      %p150 = scmp.eq.s32.totalorder %s40, 0
      %p151 = por %p149, %p150
      %s153 = sadd.s32 %s152, 1
      %p156 = scmp.eq.s32.totalorder %s34, 3
      %p157 = scmp.ne.s32.totalorder %s152, %s154
      %p158 = scmp.eq.s32.totalorder %s34, 0
      %p159 = por %p157, %p158
      %p160 = scmp.ne.s32.totalorder %s152, %s154
      %p161 = scmp.eq.s32.totalorder %s39, 3
      %p162 = por %p160, %p161
      %p163 = scmp.ne.s32.totalorder %s154, %s155
      %p164 = scmp.eq.s32.totalorder %s39, 0
      %p165 = por %p163, %p164
      %p166 = scmp.ne.s32.totalorder %s154, %s155
      %p167 = scmp.eq.s32.totalorder %s40, 3
      %p168 = por %p166, %p167
      %p170 = scmp.ne.s32.totalorder %s155, %s169
      %p171 = scmp.eq.s32.totalorder %s40, 0
      %p172 = por %p170, %p171
      %s174 = sadd.s32 %s173, 1
      %p177 = scmp.eq.s32.totalorder %s34, 3
      %p178 = scmp.ne.s32.totalorder %s173, %s175
      %p179 = scmp.eq.s32.totalorder %s34, 0
      %p180 = por %p178, %p179
      %p181 = scmp.ne.s32.totalorder %s173, %s175
      %p182 = scmp.eq.s32.totalorder %s39, 3
      %p183 = por %p181, %p182
      %p184 = scmp.ne.s32.totalorder %s175, %s176
      %p185 = scmp.eq.s32.totalorder %s39, 0
      %p186 = por %p184, %p185
      %p187 = scmp.ne.s32.totalorder %s175, %s176
      %p188 = scmp.eq.s32.totalorder %s40, 3
      %p189 = por %p187, %p188
      %p191 = scmp.ne.s32.totalorder %s176, %s190
      %p192 = scmp.eq.s32.totalorder %s40, 0
      %p193 = por %p191, %p192
      %s195 = sadd.s32 %s194, 1
      %p198 = scmp.eq.s32.totalorder %s34, 3
      %p199 = scmp.ne.s32.totalorder %s194, %s196
      %p200 = scmp.eq.s32.totalorder %s34, 0
      %p201 = por %p199, %p200
      %p202 = scmp.ne.s32.totalorder %s194, %s196
      %p203 = scmp.eq.s32.totalorder %s39, 3
      %p204 = por %p202, %p203
      %p205 = scmp.ne.s32.totalorder %s196, %s197
      %p206 = scmp.eq.s32.totalorder %s39, 0
      %p207 = por %p205, %p206
      %p208 = scmp.ne.s32.totalorder %s196, %s197
      %p209 = scmp.eq.s32.totalorder %s40, 3
      %p210 = por %p208, %p209
      %p212 = scmp.ne.s32.totalorder %s197, %s211
      %p213 = scmp.eq.s32.totalorder %s40, 0
      %p214 = por %p212, %p213
      %s216 = sadd.s32 %s215, 1
      %p219 = scmp.eq.s32.totalorder %s34, 3
      %p220 = scmp.ne.s32.totalorder %s215, %s217
      %p221 = scmp.eq.s32.totalorder %s34, 0
      %p222 = por %p220, %p221
      %p223 = scmp.ne.s32.totalorder %s215, %s217
      %p224 = scmp.eq.s32.totalorder %s39, 3
      %p225 = por %p223, %p224
      %p226 = scmp.ne.s32.totalorder %s217, %s218
      %p227 = scmp.eq.s32.totalorder %s39, 0
      %p228 = por %p226, %p227
      %p229 = scmp.ne.s32.totalorder %s217, %s218
      %p230 = scmp.eq.s32.totalorder %s40, 3
      %p231 = por %p229, %p230
      %p233 = scmp.ne.s32.totalorder %s218, %s232
      %p234 = scmp.eq.s32.totalorder %s40, 0
      %p235 = por %p233, %p234
      %s237 = sadd.s32 %s236, 1
      %p240 = scmp.eq.s32.totalorder %s34, 3
      %p241 = scmp.ne.s32.totalorder %s236, %s238
      %p242 = scmp.eq.s32.totalorder %s34, 0
      %p243 = por %p241, %p242
      %p244 = scmp.ne.s32.totalorder %s236, %s238
      %p245 = scmp.eq.s32.totalorder %s39, 3
      %p246 = por %p244, %p245
      %p247 = scmp.ne.s32.totalorder %s238, %s239
      %p248 = scmp.eq.s32.totalorder %s39, 0
      %p249 = por %p247, %p248
      %p250 = scmp.ne.s32.totalorder %s238, %s239
      %p251 = scmp.eq.s32.totalorder %s40, 3
      %p252 = por %p250, %p251
      %p254 = scmp.ne.s32.totalorder %s239, %s253
      %p255 = scmp.eq.s32.totalorder %s40, 0
      %p256 = por %p254, %p255
      %s258 = sadd.s32 %s257, 1
      %p261 = scmp.eq.s32.totalorder %s34, 3
      %p262 = scmp.ne.s32.totalorder %s257, %s259
      %p263 = scmp.eq.s32.totalorder %s34, 0
      %p264 = por %p262, %p263
      %p265 = scmp.ne.s32.totalorder %s257, %s259
      %p266 = scmp.eq.s32.totalorder %s39, 3
      %p267 = por %p265, %p266
      %p268 = scmp.ne.s32.totalorder %s259, %s260
      %p269 = scmp.eq.s32.totalorder %s39, 0
      %p270 = por %p268, %p269
      %p271 = scmp.ne.s32.totalorder %s259, %s260
      %p272 = scmp.eq.s32.totalorder %s40, 3
      %p273 = por %p271, %p272
      %p275 = scmp.ne.s32.totalorder %s260, %s274
      %p276 = scmp.eq.s32.totalorder %s40, 0
      %p277 = por %p275, %p276
      %s279 = sadd.s32 %s278, 1
      %p282 = scmp.eq.s32.totalorder %s34, 3
      %p283 = scmp.ne.s32.totalorder %s278, %s280
      %p284 = scmp.eq.s32.totalorder %s34, 0
      %p285 = por %p283, %p284
      %p286 = scmp.ne.s32.totalorder %s278, %s280
      %p287 = scmp.eq.s32.totalorder %s39, 3
      %p288 = por %p286, %p287
      %p289 = scmp.ne.s32.totalorder %s280, %s281
      %p290 = scmp.eq.s32.totalorder %s39, 0
      %p291 = por %p289, %p290
      %p292 = scmp.ne.s32.totalorder %s280, %s281
      %p293 = scmp.eq.s32.totalorder %s40, 3
      %p294 = por %p292, %p293
      %p296 = scmp.ne.s32.totalorder %s281, %s295
      %p297 = scmp.eq.s32.totalorder %s40, 0
      %p298 = por %p296, %p297
      %s300 = sadd.s32 %s299, 1
      %p303 = scmp.eq.s32.totalorder %s34, 3
      %p304 = scmp.ne.s32.totalorder %s299, %s301
      %p305 = scmp.eq.s32.totalorder %s34, 0
      %p306 = por %p304, %p305
      %p307 = scmp.ne.s32.totalorder %s299, %s301
      %p308 = scmp.eq.s32.totalorder %s39, 3
      %p309 = por %p307, %p308
      %p310 = scmp.ne.s32.totalorder %s301, %s302
      %p311 = scmp.eq.s32.totalorder %s39, 0
      %p312 = por %p310, %p311
      %p313 = scmp.ne.s32.totalorder %s301, %s302
      %p314 = scmp.eq.s32.totalorder %s40, 3
      %p315 = por %p313, %p314
      %p317 = scmp.ne.s32.totalorder %s302, %s316
      %p318 = scmp.eq.s32.totalorder %s40, 0
      %p319 = por %p317, %p318
      %s321 = sadd.s32 %s320, 1
      %p324 = scmp.eq.s32.totalorder %s34, 3
      %p325 = scmp.ne.s32.totalorder %s320, %s322
      %p326 = scmp.eq.s32.totalorder %s34, 0
      %p327 = por %p325, %p326
      %p328 = scmp.ne.s32.totalorder %s320, %s322
      %p329 = scmp.eq.s32.totalorder %s39, 3
      %p330 = por %p328, %p329
      %p331 = scmp.ne.s32.totalorder %s322, %s323
      %p332 = scmp.eq.s32.totalorder %s39, 0
      %p333 = por %p331, %p332
      %p334 = scmp.ne.s32.totalorder %s322, %s323
      %p335 = scmp.eq.s32.totalorder %s40, 3
      %p336 = por %p334, %p335
      %p338 = scmp.ne.s32.totalorder %s323, %s337
      %p339 = scmp.eq.s32.totalorder %s40, 0
      %p340 = por %p338, %p339
      %s342 = sadd.s32 %s341, 1
      %p345 = scmp.eq.s32.totalorder %s34, 3
      %p346 = scmp.ne.s32.totalorder %s341, %s343
      %p347 = scmp.eq.s32.totalorder %s34, 0
      %p348 = por %p346, %p347
      %p349 = scmp.ne.s32.totalorder %s341, %s343
      %p350 = scmp.eq.s32.totalorder %s39, 3
      %p351 = por %p349, %p350
      %p352 = scmp.ne.s32.totalorder %s343, %s344
      %p353 = scmp.eq.s32.totalorder %s39, 0
      %p354 = por %p352, %p353
      %p355 = scmp.ne.s32.totalorder %s343, %s344
      %p356 = scmp.eq.s32.totalorder %s40, 3
      %p357 = por %p355, %p356
      %p359 = scmp.ne.s32.totalorder %s344, %s358
      %p360 = scmp.eq.s32.totalorder %s40, 0
      %p361 = por %p359, %p360
      %s363 = sadd.s32 %s362, 1
      %p366 = scmp.eq.s32.totalorder %s34, 3
      %p367 = scmp.ne.s32.totalorder %s362, %s364
      %p368 = scmp.eq.s32.totalorder %s34, 0
      %p369 = por %p367, %p368
      %p370 = scmp.ne.s32.totalorder %s362, %s364
      %p371 = scmp.eq.s32.totalorder %s39, 3
      %p372 = por %p370, %p371
      %p373 = scmp.ne.s32.totalorder %s364, %s365
      %p374 = scmp.eq.s32.totalorder %s39, 0
      %p375 = por %p373, %p374
      %p376 = scmp.ne.s32.totalorder %s364, %s365
      %p377 = scmp.eq.s32.totalorder %s40, 3
      %p378 = por %p376, %p377
      %p380 = scmp.ne.s32.totalorder %s365, %s379
      %p381 = scmp.eq.s32.totalorder %s40, 0
      %p382 = por %p380, %p381
      %s384 = sadd.s32 %s383, 1
      %p387 = scmp.eq.s32.totalorder %s34, 3
      %p388 = scmp.ne.s32.totalorder %s383, %s385
      %p389 = scmp.eq.s32.totalorder %s34, 0
      %p390 = por %p388, %p389
      %p391 = scmp.ne.s32.totalorder %s383, %s385
      %p392 = scmp.eq.s32.totalorder %s39, 3
      %p393 = por %p391, %p392
      %p394 = scmp.ne.s32.totalorder %s385, %s386
      %p395 = scmp.eq.s32.totalorder %s39, 0
      %p396 = por %p394, %p395
      %p397 = scmp.ne.s32.totalorder %s385, %s386
      %p398 = scmp.eq.s32.totalorder %s40, 3
      %p399 = por %p397, %p398
      %p401 = scmp.ne.s32.totalorder %s386, %s400
      %p402 = scmp.eq.s32.totalorder %s40, 0
      %p403 = por %p401, %p402
      %s405 = sadd.s32 %s404, 1
      %p408 = scmp.eq.s32.totalorder %s34, 3
      %p409 = scmp.ne.s32.totalorder %s404, %s406
      %p410 = scmp.eq.s32.totalorder %s34, 0
      %p411 = por %p409, %p410
      %p412 = scmp.ne.s32.totalorder %s404, %s406
      %p413 = scmp.eq.s32.totalorder %s39, 3
      %p414 = por %p412, %p413
      %p415 = scmp.ne.s32.totalorder %s406, %s407
      %p416 = scmp.eq.s32.totalorder %s39, 0
      %p417 = por %p415, %p416
      %p418 = scmp.ne.s32.totalorder %s406, %s407
      %p419 = scmp.eq.s32.totalorder %s40, 3
      %p420 = por %p418, %p419
      %p422 = scmp.ne.s32.totalorder %s407, %s421
      %p423 = scmp.eq.s32.totalorder %s40, 0
      %p424 = por %p422, %p423
      %s426 = sadd.s32 %s425, 1
      %p429 = scmp.eq.s32.totalorder %s34, 3
      %p430 = scmp.ne.s32.totalorder %s425, %s427
      %p431 = scmp.eq.s32.totalorder %s34, 0
      %p432 = por %p430, %p431
      %p433 = scmp.ne.s32.totalorder %s425, %s427
      %p434 = scmp.eq.s32.totalorder %s39, 3
      %p435 = por %p433, %p434
      %p436 = scmp.ne.s32.totalorder %s427, %s428
      %p437 = scmp.eq.s32.totalorder %s39, 0
      %p438 = por %p436, %p437
      %p439 = scmp.ne.s32.totalorder %s427, %s428
      %p440 = scmp.eq.s32.totalorder %s40, 3
      %p441 = por %p439, %p440
      %p443 = scmp.ne.s32.totalorder %s428, %s442
      %p444 = scmp.eq.s32.totalorder %s40, 0
      %p445 = por %p443, %p444
      %s446 = ssub.s32 %s41, %s53
      %p447 = scmp.eq.s32.totalorder %s446, 0
      %s449 = sadd.s32 %s448, 1
      %s450 = scalar_select %p447, %s448, %s449
      %p453 = pneg %p447
      %p454 = scmp.eq.s32.totalorder %s34, 3
      %p455 = por %p453, %p454
      %p456 = scmp.ne.s32.totalorder %s448, %s451
      %p457 = scmp.eq.s32.totalorder %s34, 0
      %p458 = por %p456, %p457
      %p459 = scmp.ne.s32.totalorder %s448, %s451
      %p460 = scmp.eq.s32.totalorder %s39, 3
      %p461 = por %p459, %p460
      %p462 = scmp.ne.s32.totalorder %s451, %s452
      %p463 = scmp.eq.s32.totalorder %s39, 0
      %p464 = por %p462, %p463
      %p465 = scmp.ne.s32.totalorder %s451, %s452
      %p466 = scmp.eq.s32.totalorder %s40, 3
      %p467 = por %p465, %p466
      %p469 = scmp.ne.s32.totalorder %s452, %s468
      %p470 = scmp.eq.s32.totalorder %s40, 0
      %p471 = por %p469, %p470
      %p472 = scmp.le.s32.totalorder 1, %s34
      %p473 = scmp.lt.s32.totalorder %s34, 5
      %p474 = pnand %p472, %p473
      %p475 = pneg %p474
      // Predicated region
      $region9: #{tpu_custom_call.1} parent=5 // pred_check
        _
      $region10: #{tpu_custom_call.1} parent=5 // pred_check_branch
        %477 = sbr.rel (%p474) target = $region12
      $region11: #{tpu_custom_call.1} parent=5 // pred_region
        %s478 = ssub.s32 %s34, 1
        // Predicated region
        $region13: #{tpu_custom_call.1} parent=11 // pred_check
          %p479 = pneg %p123
        $region14: #{tpu_custom_call.1} parent=11 // pred_check_branch
          %481 = sbr.rel (%p479) target = $region16
        $region15: #{tpu_custom_call.1} parent=11 // pred_region
          %s483 = ssub.s32 128, 128
          %484 = vsyncadd [#allocation9], %s483
          %s485 = sshll.u32 [#allocation8], 4
          %s486 = int_to_ptr.vmem [resolvable:$true] %s485
          %491 = dma.hbm_to_vmem [thread:$0]  %s2, 128, %s486, [#allocation9], 64, 64, 4
        $region16: #{tpu_custom_call.1} parent=11 // pred_fallthru
          _
        // Predicated region
        $region17: #{tpu_custom_call.1} parent=11 // pred_check
          %p492 = pneg %p144
        $region18: #{tpu_custom_call.1} parent=11 // pred_check_branch
          %494 = sbr.rel (%p492) target = $region20
        $region19: #{tpu_custom_call.1} parent=11 // pred_region
          _
        $region20: #{tpu_custom_call.1} parent=11 // pred_fallthru
          _
        // Predicated region
        $region21: #{tpu_custom_call.1} parent=11 // pred_check
          %p495 = pneg %p165
        $region22: #{tpu_custom_call.1} parent=11 // pred_check_branch
          %497 = sbr.rel (%p495) target = $region24
        $region23: #{tpu_custom_call.1} parent=11 // pred_region
          %s499 = ssub.s32 128, 128
          %500 = vsyncadd [#allocation9], %s499
          %s501 = sshll.u32 [#allocation10], 4
          %s502 = int_to_ptr.vmem [resolvable:$true] %s501
          %507 = dma.hbm_to_vmem [thread:$0]  %s4, 128, %s502, [#allocation9], 64, 64, 4
        $region24: #{tpu_custom_call.1} parent=11 // pred_fallthru
          _
        // Predicated region
        $region25: #{tpu_custom_call.1} parent=11 // pred_check
          %p508 = pneg %p186
        $region26: #{tpu_custom_call.1} parent=11 // pred_check_branch
          %510 = sbr.rel (%p508) target = $region28
        $region27: #{tpu_custom_call.1} parent=11 // pred_region
          _
        $region28: #{tpu_custom_call.1} parent=11 // pred_fallthru
          _
        // Predicated region
        $region29: #{tpu_custom_call.1} parent=11 // pred_check
          %p511 = pneg %p207
        $region30: #{tpu_custom_call.1} parent=11 // pred_check_branch
          %513 = sbr.rel (%p511) target = $region32
        $region31: #{tpu_custom_call.1} parent=11 // pred_region
          _
        $region32: #{tpu_custom_call.1} parent=11 // pred_fallthru
          _
        // Predicated region
        $region33: #{tpu_custom_call.1} parent=11 // pred_check
          %p514 = pneg %p228
        $region34: #{tpu_custom_call.1} parent=11 // pred_check_branch
          %516 = sbr.rel (%p514) target = $region36
        $region35: #{tpu_custom_call.1} parent=11 // pred_region
          _
        $region36: #{tpu_custom_call.1} parent=11 // pred_fallthru
          _
        // Predicated region
        $region37: #{tpu_custom_call.1} parent=11 // pred_check
          %p517 = pneg %p249
        $region38: #{tpu_custom_call.1} parent=11 // pred_check_branch
          %519 = sbr.rel (%p517) target = $region40
        $region39: #{tpu_custom_call.1} parent=11 // pred_region
          _
        $region40: #{tpu_custom_call.1} parent=11 // pred_fallthru
          _
        // Predicated region
        $region41: #{tpu_custom_call.1} parent=11 // pred_check
          %p520 = pneg %p270
        $region42: #{tpu_custom_call.1} parent=11 // pred_check_branch
          %522 = sbr.rel (%p520) target = $region44
        $region43: #{tpu_custom_call.1} parent=11 // pred_region
          %s524 = ssub.s32 256, 256
          %525 = vsyncadd [#allocation12], %s524
          %s526 = sshll.u32 [#allocation11], 4
          %s527 = int_to_ptr.vmem [resolvable:$true] %s526
          %532 = dma.hbm_to_vmem [thread:$0]  %s9, 256, %s527, [#allocation12], 128, 128, 8
        $region44: #{tpu_custom_call.1} parent=11 // pred_fallthru
          _
        // Predicated region
        $region45: #{tpu_custom_call.1} parent=11 // pred_check
          %p533 = pneg %p291
        $region46: #{tpu_custom_call.1} parent=11 // pred_check_branch
          %535 = sbr.rel (%p533) target = $region48
        $region47: #{tpu_custom_call.1} parent=11 // pred_region
          %s537 = ssub.s32 16, 16
          %538 = vsyncadd [#allocation12], %s537
          %s540 = sshll.u32 [#allocation13], 4
          %s541 = int_to_ptr.vmem [resolvable:$true] %s540
          %543 = dma.hbm_to_vmem [thread:$0]  %s10, 16, %s541, [#allocation12]
        $region48: #{tpu_custom_call.1} parent=11 // pred_fallthru
          _
        // Predicated region
        $region49: #{tpu_custom_call.1} parent=11 // pred_check
          %p544 = pneg %p312
        $region50: #{tpu_custom_call.1} parent=11 // pred_check_branch
          %546 = sbr.rel (%p544) target = $region52
        $region51: #{tpu_custom_call.1} parent=11 // pred_region
          %s548 = ssub.s32 16, 16
          %549 = vsyncadd [#allocation15], %s548
          %s551 = sshll.u32 [#allocation14], 4
          %s552 = int_to_ptr.vmem [resolvable:$true] %s551
          %554 = dma.hbm_to_vmem [thread:$0]  %s11, 16, %s552, [#allocation15]
        $region52: #{tpu_custom_call.1} parent=11 // pred_fallthru
          _
        // Predicated region
        $region53: #{tpu_custom_call.1} parent=11 // pred_check
          %p555 = pneg %p333
        $region54: #{tpu_custom_call.1} parent=11 // pred_check_branch
          %557 = sbr.rel (%p555) target = $region56
        $region55: #{tpu_custom_call.1} parent=11 // pred_region
          _
        $region56: #{tpu_custom_call.1} parent=11 // pred_fallthru
          _
        // Predicated region
        $region57: #{tpu_custom_call.1} parent=11 // pred_check
          %p558 = pneg %p354
        $region58: #{tpu_custom_call.1} parent=11 // pred_check_branch
          %560 = sbr.rel (%p558) target = $region60
        $region59: #{tpu_custom_call.1} parent=11 // pred_region
          %s562 = ssub.s32 256, 256
          %563 = vsyncadd [#allocation15], %s562
          %s564 = sshll.u32 [#allocation16], 4
          %s565 = int_to_ptr.vmem [resolvable:$true] %s564
          %570 = dma.hbm_to_vmem [thread:$0]  %s13, 256, %s565, [#allocation15], 128, 128, 8
        $region60: #{tpu_custom_call.1} parent=11 // pred_fallthru
          _
        // Predicated region
        $region61: #{tpu_custom_call.1} parent=11 // pred_check
          %p571 = pneg %p375
        $region62: #{tpu_custom_call.1} parent=11 // pred_check_branch
          %573 = sbr.rel (%p571) target = $region64
        $region63: #{tpu_custom_call.1} parent=11 // pred_region
          %s575 = ssub.s32 256, 256
          %576 = vsyncadd [#allocation18], %s575
          %s577 = sshll.u32 [#allocation17], 4
          %s578 = int_to_ptr.vmem [resolvable:$true] %s577
          %583 = dma.hbm_to_vmem [thread:$0]  %s14, 256, %s578, [#allocation18], 128, 128, 8
        $region64: #{tpu_custom_call.1} parent=11 // pred_fallthru
          _
        // Predicated region
        $region65: #{tpu_custom_call.1} parent=11 // pred_check
          %p584 = pneg %p396
        $region66: #{tpu_custom_call.1} parent=11 // pred_check_branch
          %586 = sbr.rel (%p584) target = $region68
        $region67: #{tpu_custom_call.1} parent=11 // pred_region
          _
        $region68: #{tpu_custom_call.1} parent=11 // pred_fallthru
          _
        // Predicated region
        $region69: #{tpu_custom_call.1} parent=11 // pred_check
          %p587 = pneg %p417
        $region70: #{tpu_custom_call.1} parent=11 // pred_check_branch
          %589 = sbr.rel (%p587) target = $region72
        $region71: #{tpu_custom_call.1} parent=11 // pred_region
          %s591 = ssub.s32 256, 256
          %592 = vsyncadd [#allocation18], %s591
          %s593 = sshll.u32 [#allocation19], 4
          %s594 = int_to_ptr.vmem [resolvable:$true] %s593
          %599 = dma.hbm_to_vmem [thread:$0]  %s16, 256, %s594, [#allocation18], 128, 128, 8
        $region72: #{tpu_custom_call.1} parent=11 // pred_fallthru
          _
        // Predicated region
        $region73: #{tpu_custom_call.1} parent=11 // pred_check
          %p600 = pneg %p438
        $region74: #{tpu_custom_call.1} parent=11 // pred_check_branch
          %602 = sbr.rel (%p600) target = $region76
        $region75: #{tpu_custom_call.1} parent=11 // pred_region
          _
        $region76: #{tpu_custom_call.1} parent=11 // pred_fallthru
          _
      $region12: #{tpu_custom_call.1} parent=5 // pred_fallthru
        _
      %p603 = scmp.lt.s32.totalorder %s34, 4
      // Predicated region
      $region77: #{tpu_custom_call.1} parent=5 // pred_check
        %p604 = pneg %p603
      $region78: #{tpu_custom_call.1} parent=5 // pred_check_branch
        %606 = sbr.rel (%p604) target = $region80
      $region79: #{tpu_custom_call.1} parent=5 // pred_region
        // Predicated region
        $region81: #{tpu_custom_call.1} parent=79 // pred_check
          %p607 = pneg %p68
        $region82: #{tpu_custom_call.1} parent=79 // pred_check_branch
          %609 = sbr.rel (%p607) target = $region84
        $region83: #{tpu_custom_call.1} parent=79 // pred_region
          %s610 = sand.u32 %s58, 1
          %s611 = sand.u32 %s58, 1
          %s612 = smul.addr %s611, 8
          %s613 = scalar_lea.vmem [#allocation4], %s612
          %s614 = smul.addr %s41, 4
          %s615 = sadd.s32 %s42, %s614
          %s616 = smul.addr %s615, 4
          %s617 = scalar_lea.vmem %s0, %s616
          // Predicated region
          $region85: #{tpu_custom_call.1} parent=83 // pred_check
            _
          $region86: #{tpu_custom_call.1} parent=83 // pred_check_branch
            %619 = sbr.rel (0) target = $region88
          $region87: #{tpu_custom_call.1} parent=83 // pred_region
            // Predicated region
            $region89: #{tpu_custom_call.1} parent=87 // pred_check
              _
            $region90: #{tpu_custom_call.1} parent=87 // pred_check_branch
              %621 = sbr.rel target = $region92
            $region91: #{tpu_custom_call.1} parent=87 // pred_region
              // Predicated region
              $region104: #{tpu_custom_call.1} parent=91 // pred_check
                _
              $region105: #{tpu_custom_call.1} parent=91 // pred_check_branch
                %638 = sbr.rel (0) target = $region107
              $region106: #{tpu_custom_call.1} parent=91 // pred_region
                loop: start=0, step=1, limit=1
                $region108: #{tpu_custom_call.1} parent=106 // loop_pre_header
                  _
                $region109: #{tpu_custom_call.1} parent=106 // loop_header
                  %s640 = sphi 0, %s644
                  %p641 = scmp.ge.s32.totalorder %s640, 1
                  %s645 = sphi %s617, %s617
                  %s646 = sphi %s613, %s613
                $region110: #{tpu_custom_call.1} parent=106 // loop_header_branch
                  %643 = sbr.rel (%p641) target = $region114
                $region111: #{tpu_custom_call.1} parent=106 // loop_body
                  _
                $region112: #{tpu_custom_call.1} parent=106 // loop_footer
                  %s644 = sadd.s32 1, %s640
                $region113: #{tpu_custom_call.1} parent=106 // loop_footer_branch
                  %639 = sbr.rel target = $region109
                $region114: #{tpu_custom_call.1} parent=106 // loop_exit
                  _
                loop: start=0, step=1, limit=1
                $region115: #{tpu_custom_call.1} parent=106 // loop_pre_header
                  _
                $region116: #{tpu_custom_call.1} parent=106 // loop_header
                  %s649 = sphi 0, %s653
                  %p650 = scmp.ge.s32.totalorder %s649, 1
                  %s654 = sphi %s617, %s617
                  %s655 = sphi %s613, %s613
                $region117: #{tpu_custom_call.1} parent=106 // loop_header_branch
                  %652 = sbr.rel (%p650) target = $region121
                $region118: #{tpu_custom_call.1} parent=106 // loop_body
                  %v656 = vld [vmem:[%s654] sm:$0xf]
                  %657 = vst [vmem:[%s655] sm:$0xf] %v656
                  %v658 = vld [vmem:[%s654 + $0x8] sm:$0xf]
                  %659 = vst [vmem:[%s655 + $0x4] sm:$0xf] %v658
                $region119: #{tpu_custom_call.1} parent=106 // loop_footer
                  %s653 = sadd.s32 1, %s649
                $region120: #{tpu_custom_call.1} parent=106 // loop_footer_branch
                  %648 = sbr.rel target = $region116
                $region121: #{tpu_custom_call.1} parent=106 // loop_exit
                  _
              $region107: #{tpu_custom_call.1} parent=91 // pred_fallthru
                _
            $region92: #{tpu_custom_call.1} parent=87 // pred_fallthru
              _
            // Predicated region
            $region93: #{tpu_custom_call.1} parent=87 // pred_check
              _
            $region94: #{tpu_custom_call.1} parent=87 // pred_check_branch
              %623 = sbr.rel (0) target = $region96
            $region95: #{tpu_custom_call.1} parent=87 // pred_region
              loop: start=0, step=1, limit=1
              $region97: #{tpu_custom_call.1} parent=95 // loop_pre_header
                _
              $region98: #{tpu_custom_call.1} parent=95 // loop_header
                %s626 = sphi 0, %s630
                %p627 = scmp.ge.s32.totalorder %s626, 1
                %s631 = sphi %s617, %s617
                %s632 = sphi %s613, %s613
              $region99: #{tpu_custom_call.1} parent=95 // loop_header_branch
                %629 = sbr.rel (%p627) target = $region103
              $region100: #{tpu_custom_call.1} parent=95 // loop_body
                %v633 = vld [vmem:[%s631] sm:$0xf]
                %634 = vst [vmem:[%s632] sm:$0xf] %v633
                %v635 = vld [vmem:[%s631 + $0x8] sm:$0xf]
                %636 = vst [vmem:[%s632 + $0x4] sm:$0xf] %v635
              $region101: #{tpu_custom_call.1} parent=95 // loop_footer
                %s630 = sadd.s32 1, %s626
              $region102: #{tpu_custom_call.1} parent=95 // loop_footer_branch
                %625 = sbr.rel target = $region98
              $region103: #{tpu_custom_call.1} parent=95 // loop_exit
                _
            $region96: #{tpu_custom_call.1} parent=87 // pred_fallthru
              _
          $region88: #{tpu_custom_call.1} parent=83 // pred_fallthru
            _
          %660 = vnop
        $region84: #{tpu_custom_call.1} parent=79 // pred_fallthru
          _
        // Predicated region
        $region122: #{tpu_custom_call.1} parent=79 // pred_check
          %p661 = pneg %p96
        $region123: #{tpu_custom_call.1} parent=79 // pred_check_branch
          %663 = sbr.rel (%p661) target = $region125
        $region124: #{tpu_custom_call.1} parent=79 // pred_region
          %s664 = sand.u32 %s86, 1
          %s665 = scalar_lea.sflag [#allocation6], %s664
          %s666 = sand.u32 %s86, 1
          %s667 = smul.addr %s666, 8
          %s668 = scalar_lea.vmem [#allocation5], %s667
          %s670 = ssub.s32 128, 128
          %671 = vsyncadd %s665, %s670
          %s672 = smul.addr %s41, 4
          %s673 = sadd.s32 %s42, %s672
          %s674 = smul.addr %s673, 64
          %s675 = scalar_lea.hbm %s1, %s674
          %s676 = sshll.u32 %s668, 4
          %s677 = int_to_ptr.vmem [resolvable:$true] %s676
          %682 = dma.hbm_to_vmem [thread:$0]  %s675, 128, %s677, %s665, 128, 64, 4
        $region125: #{tpu_custom_call.1} parent=79 // pred_fallthru
          _
      $region80: #{tpu_custom_call.1} parent=5 // pred_fallthru
        _
      %p683 = scmp.le.s32.totalorder 1, %s34
      %p684 = scmp.lt.s32.totalorder %s34, 5
      %p685 = pnand %p683, %p684
      %p686 = pneg %p685
      // Predicated region
      $region126: #{tpu_custom_call.1} parent=5 // pred_check
        _
      $region127: #{tpu_custom_call.1} parent=5 // pred_check_branch
        %688 = sbr.rel (%p685) target = $region129
      $region128: #{tpu_custom_call.1} parent=5 // pred_region
        %s689 = ssub.s32 %s34, 1
        %s690 = sand.u32 %s61, 1
        %s691 = sand.u32 %s61, 1
        %s692 = smul.addr %s691, 8
        %s693 = scalar_lea.vmem [#allocation4], %s692
        // Predicated region
        $region130: #{tpu_custom_call.1} parent=128 // pred_check
          %p694 = pneg %p74
        $region131: #{tpu_custom_call.1} parent=128 // pred_check_branch
          %696 = sbr.rel (%p694) target = $region133
        $region132: #{tpu_custom_call.1} parent=128 // pred_region
          _
        $region133: #{tpu_custom_call.1} parent=128 // pred_fallthru
          _
        %s697 = sand.u32 %s89, 1
        %s698 = scalar_lea.sflag [#allocation6], %s697
        %s699 = sand.u32 %s89, 1
        %s700 = smul.addr %s699, 8
        %s701 = scalar_lea.vmem [#allocation5], %s700
        // Predicated region
        $region134: #{tpu_custom_call.1} parent=128 // pred_check
          %p702 = pneg %p102
        $region135: #{tpu_custom_call.1} parent=128 // pred_check_branch
          %704 = sbr.rel (%p702) target = $region137
        $region136: #{tpu_custom_call.1} parent=128 // pred_region
          %705 = dma.done %s698, 128
        $region137: #{tpu_custom_call.1} parent=128 // pred_fallthru
          _
        // Predicated region
        $region138: #{tpu_custom_call.1} parent=128 // pred_check
          %p706 = pneg %p123
        $region139: #{tpu_custom_call.1} parent=128 // pred_check_branch
          %708 = sbr.rel (%p706) target = $region141
        $region140: #{tpu_custom_call.1} parent=128 // pred_region
          %709 = dma.done [#allocation9], 128
        $region141: #{tpu_custom_call.1} parent=128 // pred_fallthru
          _
        // Predicated region
        $region142: #{tpu_custom_call.1} parent=128 // pred_check
          %p710 = pneg %p165
        $region143: #{tpu_custom_call.1} parent=128 // pred_check_branch
          %712 = sbr.rel (%p710) target = $region145
        $region144: #{tpu_custom_call.1} parent=128 // pred_region
          %713 = dma.done [#allocation9], 128
        $region145: #{tpu_custom_call.1} parent=128 // pred_fallthru
          _
        // Predicated region
        $region146: #{tpu_custom_call.1} parent=128 // pred_check
          %p714 = pneg %p270
        $region147: #{tpu_custom_call.1} parent=128 // pred_check_branch
          %716 = sbr.rel (%p714) target = $region149
        $region148: #{tpu_custom_call.1} parent=128 // pred_region
          %717 = dma.done [#allocation12], 256
        $region149: #{tpu_custom_call.1} parent=128 // pred_fallthru
          _
        // Predicated region
        $region150: #{tpu_custom_call.1} parent=128 // pred_check
          %p718 = pneg %p291
        $region151: #{tpu_custom_call.1} parent=128 // pred_check_branch
          %720 = sbr.rel (%p718) target = $region153
        $region152: #{tpu_custom_call.1} parent=128 // pred_region
          %721 = dma.done [#allocation12], 16
        $region153: #{tpu_custom_call.1} parent=128 // pred_fallthru
          _
        // Predicated region
        $region154: #{tpu_custom_call.1} parent=128 // pred_check
          %p722 = pneg %p312
        $region155: #{tpu_custom_call.1} parent=128 // pred_check_branch
          %724 = sbr.rel (%p722) target = $region157
        $region156: #{tpu_custom_call.1} parent=128 // pred_region
          %725 = dma.done [#allocation15], 16
        $region157: #{tpu_custom_call.1} parent=128 // pred_fallthru
          _
        // Predicated region
        $region158: #{tpu_custom_call.1} parent=128 // pred_check
          %p726 = pneg %p354
        $region159: #{tpu_custom_call.1} parent=128 // pred_check_branch
          %728 = sbr.rel (%p726) target = $region161
        $region160: #{tpu_custom_call.1} parent=128 // pred_region
          %729 = dma.done [#allocation15], 256
        $region161: #{tpu_custom_call.1} parent=128 // pred_fallthru
          _
        // Predicated region
        $region162: #{tpu_custom_call.1} parent=128 // pred_check
          %p730 = pneg %p375
        $region163: #{tpu_custom_call.1} parent=128 // pred_check_branch
          %732 = sbr.rel (%p730) target = $region165
        $region164: #{tpu_custom_call.1} parent=128 // pred_region
          %733 = dma.done [#allocation18], 256
        $region165: #{tpu_custom_call.1} parent=128 // pred_fallthru
          _
        // Predicated region
        $region166: #{tpu_custom_call.1} parent=128 // pred_check
          %p734 = pneg %p417
        $region167: #{tpu_custom_call.1} parent=128 // pred_check_branch
          %736 = sbr.rel (%p734) target = $region169
        $region168: #{tpu_custom_call.1} parent=128 // pred_region
          %737 = dma.done [#allocation18], 256
        $region169: #{tpu_custom_call.1} parent=128 // pred_fallthru
          _
        %s738 = sand.u32 %s61, 1
        %s739 = sand.u32 %s61, 1
        %s740 = smul.addr %s739, 8
        %s741 = scalar_lea.vmem [#allocation4], %s740
        %p742 = pneg %p74
        %p743 = pneg %p71
        %s744 = sand.u32 %s89, 1
        %s745 = scalar_lea.sflag [#allocation6], %s744
        %s746 = sand.u32 %s89, 1
        %s747 = smul.addr %s746, 8
        %s748 = scalar_lea.vmem [#allocation5], %s747
        %p749 = pneg %p102
        %p750 = pneg %p99
        %p751 = pneg %p123
        %p752 = pneg %p120
        %p753 = pneg %p144
        %p754 = pneg %p141
        %p755 = pneg %p165
        %p756 = pneg %p162
        %p757 = pneg %p186
        %p758 = pneg %p183
        %p759 = pneg %p207
        %p760 = pneg %p204
        %p761 = pneg %p228
        %p762 = pneg %p225
        %p763 = pneg %p249
        %p764 = pneg %p246
        %p765 = pneg %p270
        %p766 = pneg %p267
        %p767 = pneg %p291
        %p768 = pneg %p288
        %p769 = pneg %p312
        %p770 = pneg %p309
        %p771 = pneg %p333
        %p772 = pneg %p330
        %p773 = pneg %p354
        %p774 = pneg %p351
        %p775 = pneg %p375
        %p776 = pneg %p372
        %p777 = pneg %p396
        %p778 = pneg %p393
        %p779 = pneg %p417
        %p780 = pneg %p414
        %p781 = pneg %p438
        %p782 = pneg %p435
        %p783 = pneg %p464
        %p784 = pneg %p461
        %s785 = sand.u32 %s451, 1
        %s786 = scalar_lea.sflag [#allocation7], %s785
        %s787 = sand.u32 %s451, 1
        %s788 = smul.addr %s787, 16
        %s789 = scalar_lea.vmem [#allocation20], %s788
        %p791 = scmp.eq.s32.totalorder %s44, 0
        // Predicated region
        $region170: #{tpu_custom_call.1} parent=128 // pred_check
          %p792 = pneg %p791
        $region171: #{tpu_custom_call.1} parent=128 // pred_check_branch
          %794 = sbr.rel (%p792) target = $region173
        $region172: #{tpu_custom_call.1} parent=128 // pred_region
          %vm795 = vcmask 130048
          %796 = vst.msk [vmem:[#allocation2] sm:$0xff] %vm795, 0.0
          %797 = vst.msk [vmem:[#allocation2 + $0x8] sm:$0xff] %vm795, 0.0
          %798 = vst.msk [vmem:[#allocation3] sm:$0xff] %vm795, 0.0
          %799 = vst.msk [vmem:[#allocation3 + $0x8] sm:$0xff] %vm795, 0.0
        $region173: #{tpu_custom_call.1} parent=128 // pred_fallthru
          _
        %v800 = vld [vmem:[%s693] sm:$0xf]
        %v801 = vld [vmem:[%s693 + $0x4] sm:$0xf]
        %v802 = vld [vmem:[%s701] sm:$0xf]
        %v803 = vld [vmem:[%s701 + $0x4] sm:$0xf]
        %v804 = vld [vmem:[#allocation8] sm:$0xf]
        %v805 = vld [vmem:[#allocation8 + $0x4] sm:$0xf]
        %v806 = vld [vmem:[#allocation10] sm:$0xf]
        %v807 = vld [vmem:[#allocation10 + $0x4] sm:$0xf]
        %v808 = vld [vmem:[%s3] sm:$0xff]
        %v809 = vld [vmem:[%s3 + $0x8] sm:$0xff]
        %811 = vset.pattern.permute.xlu0 0
        %812 = vperm.xlu0 %811, %v808
        %v813 = vpop.permute.xlu0 %812
        %816 = vset.pattern.permute.xlu0 0
        %817 = vperm.xlu0 %816, %v809
        %v818 = vpop.permute.xlu0 %817
        %v822 = vunpack.c.l.b16 %v804
        %v823 = vunpack.c.l.b16 %v805
        %v824 = vpack.c.b16 %v823, %v822
        %v827 = vunpack.c.l.b16 %v800
        %v828 = vunpack.c.l.b16 %v801
        %v829 = vpack.c.b16 %v828, %v827
        %vm831 = vcmask 130048
        %v833 = vsel %vm831, %v824, 0
        %835 = vmatprep.subr.bf16.mxu0 0
        %836 = vmatpush1.bf16.msra.mxu0 %v829
        %837 = vmatprep.subr.bf16.mxu0 0
        %838 = vmatpush1.bf16.msra.mxu0 0
        %839 = vmatprep.subr.bf16.mxu0 0
        %840 = vmatpush1.bf16.msra.mxu0 0
        %841 = vmatprep.subr.bf16.mxu0 0
        %842 = vmatpush1.bf16.msra.mxu0 0
        %843 = vmatprep.subr.bf16.mxu0 0
        %844 = vmatpush1.bf16.msra.mxu0 0
        %845 = vmatprep.subr.bf16.mxu0 0
        %846 = vmatpush1.bf16.msra.mxu0 0
        %847 = vmatprep.subr.bf16.mxu0 0
        %848 = vmatpush1.bf16.msra.mxu0 0
        %849 = vmatprep.subr.bf16.mxu0 0
        %850 = vmatpush1.bf16.msra.mxu0 0
        %851 = vmatprep.subr.bf16.mxu0 0
        %852 = vmatpush1.bf16.msra.mxu0 0
        %853 = vmatprep.subr.bf16.mxu0 0
        %854 = vmatpush1.bf16.msra.mxu0 0
        %855 = vmatprep.subr.bf16.mxu0 0
        %856 = vmatpush1.bf16.msra.mxu0 0
        %857 = vmatprep.subr.bf16.mxu0 0
        %858 = vmatpush1.bf16.msra.mxu0 0
        %859 = vmatprep.subr.bf16.mxu0 0
        %860 = vmatpush1.bf16.msra.mxu0 0
        %861 = vmatprep.subr.bf16.mxu0 0
        %862 = vmatpush1.bf16.msra.mxu0 0
        %863 = vmatprep.subr.bf16.mxu0 0
        %864 = vmatpush1.bf16.msra.mxu0 0
        %865 = vmatprep.subr.bf16.mxu0 0
        %866 = vmatpush1.bf16.msra.mxu0 0
        %867 = vmatprep.mubr.bf16.mxu0 0
        %868 = vmatmul.mubr.bf16.gmra.mrb[0].mxu0 %v833
        %v869 = vpop.f32.mrb[0].mxu0
        %v870 = vadd.f32 %v813, %v869
        %v871 = vpop.f32.mrb[0].mxu0
        %v872 = vpop.f32.mrb[0].mxu0
        %v873 = vadd.f32 %v818, %v872
        %v874 = vpop.f32.mrb[0].mxu0
        %875 = vdwg.mxu0
        %v878 = vunpack.c.l.b16 %v802
        %v879 = vunpack.c.l.b16 %v803
        %v880 = vpack.c.b16 %v879, %v878
        %882 = vmatprep.subr.bf16.mxu0 0
        %883 = vmatpush1.bf16.msra.mxu0 %v880
        %884 = vmatprep.subr.bf16.mxu0 0
        %885 = vmatpush1.bf16.msra.mxu0 0
        %886 = vmatprep.subr.bf16.mxu0 0
        %887 = vmatpush1.bf16.msra.mxu0 0
        %888 = vmatprep.subr.bf16.mxu0 0
        %889 = vmatpush1.bf16.msra.mxu0 0
        %890 = vmatprep.subr.bf16.mxu0 0
        %891 = vmatpush1.bf16.msra.mxu0 0
        %892 = vmatprep.subr.bf16.mxu0 0
        %893 = vmatpush1.bf16.msra.mxu0 0
        %894 = vmatprep.subr.bf16.mxu0 0
        %895 = vmatpush1.bf16.msra.mxu0 0
        %896 = vmatprep.subr.bf16.mxu0 0
        %897 = vmatpush1.bf16.msra.mxu0 0
        %898 = vmatprep.subr.bf16.mxu0 0
        %899 = vmatpush1.bf16.msra.mxu0 0
        %900 = vmatprep.subr.bf16.mxu0 0
        %901 = vmatpush1.bf16.msra.mxu0 0
        %902 = vmatprep.subr.bf16.mxu0 0
        %903 = vmatpush1.bf16.msra.mxu0 0
        %904 = vmatprep.subr.bf16.mxu0 0
        %905 = vmatpush1.bf16.msra.mxu0 0
        %906 = vmatprep.subr.bf16.mxu0 0
        %907 = vmatpush1.bf16.msra.mxu0 0
        %908 = vmatprep.subr.bf16.mxu0 0
        %909 = vmatpush1.bf16.msra.mxu0 0
        %910 = vmatprep.subr.bf16.mxu0 0
        %911 = vmatpush1.bf16.msra.mxu0 0
        %912 = vmatprep.subr.bf16.mxu0 0
        %913 = vmatpush1.bf16.msra.mxu0 0
        %914 = vmatprep.mubr.bf16.mxu0 0
        %915 = vmatmul.mubr.bf16.gmra.mrb[0].mxu0 %v833
        %v916 = vpop.f32.mrb[0].mxu0
        %v917 = vadd.f32 %v813, %v916
        %v918 = vpop.f32.mrb[0].mxu0
        %v919 = vpop.f32.mrb[0].mxu0
        %v920 = vadd.f32 %v818, %v919
        %v921 = vpop.f32.mrb[0].mxu0
        %922 = vdwg.mxu0
        %v923 = vld [vmem:[%s5] sm:$0xff]
        %v924 = vld [vmem:[%s5 + $0x8] sm:$0xff]
        %926 = vset.pattern.permute.xlu0 0
        %927 = vperm.xlu0 %926, %v923
        %v928 = vpop.permute.xlu0 %927
        %931 = vset.pattern.permute.xlu0 0
        %932 = vperm.xlu0 %931, %v924
        %v933 = vpop.permute.xlu0 %932
        %v937 = vunpack.c.l.b16 %v806
        %v938 = vunpack.c.l.b16 %v807
        %v939 = vpack.c.b16 %v938, %v937
        %v941 = vsel %vm831, %v939, 0
        %943 = vmatprep.subr.bf16.mxu0 0
        %944 = vmatpush1.bf16.msra.mxu0 %v829
        %945 = vmatprep.subr.bf16.mxu0 0
        %946 = vmatpush1.bf16.msra.mxu0 0
        %947 = vmatprep.subr.bf16.mxu0 0
        %948 = vmatpush1.bf16.msra.mxu0 0
        %949 = vmatprep.subr.bf16.mxu0 0
        %950 = vmatpush1.bf16.msra.mxu0 0
        %951 = vmatprep.subr.bf16.mxu0 0
        %952 = vmatpush1.bf16.msra.mxu0 0
        %953 = vmatprep.subr.bf16.mxu0 0
        %954 = vmatpush1.bf16.msra.mxu0 0
        %955 = vmatprep.subr.bf16.mxu0 0
        %956 = vmatpush1.bf16.msra.mxu0 0
        %957 = vmatprep.subr.bf16.mxu0 0
        %958 = vmatpush1.bf16.msra.mxu0 0
        %959 = vmatprep.subr.bf16.mxu0 0
        %960 = vmatpush1.bf16.msra.mxu0 0
        %961 = vmatprep.subr.bf16.mxu0 0
        %962 = vmatpush1.bf16.msra.mxu0 0
        %963 = vmatprep.subr.bf16.mxu0 0
        %964 = vmatpush1.bf16.msra.mxu0 0
        %965 = vmatprep.subr.bf16.mxu0 0
        %966 = vmatpush1.bf16.msra.mxu0 0
        %967 = vmatprep.subr.bf16.mxu0 0
        %968 = vmatpush1.bf16.msra.mxu0 0
        %969 = vmatprep.subr.bf16.mxu0 0
        %970 = vmatpush1.bf16.msra.mxu0 0
        %971 = vmatprep.subr.bf16.mxu0 0
        %972 = vmatpush1.bf16.msra.mxu0 0
        %973 = vmatprep.subr.bf16.mxu0 0
        %974 = vmatpush1.bf16.msra.mxu0 0
        %975 = vmatprep.mubr.bf16.mxu0 0
        %976 = vmatmul.mubr.bf16.gmra.mrb[0].mxu0 %v941
        %v977 = vpop.f32.mrb[0].mxu0
        %v978 = vadd.f32 %v928, %v977
        %v979 = vpop.f32.mrb[0].mxu0
        %v980 = vpop.f32.mrb[0].mxu0
        %v981 = vadd.f32 %v933, %v980
        %v982 = vpop.f32.mrb[0].mxu0
        %983 = vdwg.mxu0
        %984 = vmatprep.subr.bf16.mxu0 0
        %985 = vmatpush1.bf16.msra.mxu0 %v880
        %986 = vmatprep.subr.bf16.mxu0 0
        %987 = vmatpush1.bf16.msra.mxu0 0
        %988 = vmatprep.subr.bf16.mxu0 0
        %989 = vmatpush1.bf16.msra.mxu0 0
        %990 = vmatprep.subr.bf16.mxu0 0
        %991 = vmatpush1.bf16.msra.mxu0 0
        %992 = vmatprep.subr.bf16.mxu0 0
        %993 = vmatpush1.bf16.msra.mxu0 0
        %994 = vmatprep.subr.bf16.mxu0 0
        %995 = vmatpush1.bf16.msra.mxu0 0
        %996 = vmatprep.subr.bf16.mxu0 0
        %997 = vmatpush1.bf16.msra.mxu0 0
        %998 = vmatprep.subr.bf16.mxu0 0
        %999 = vmatpush1.bf16.msra.mxu0 0
        %1000 = vmatprep.subr.bf16.mxu0 0
        %1001 = vmatpush1.bf16.msra.mxu0 0
        %1002 = vmatprep.subr.bf16.mxu0 0
        %1003 = vmatpush1.bf16.msra.mxu0 0
        %1004 = vmatprep.subr.bf16.mxu0 0
        %1005 = vmatpush1.bf16.msra.mxu0 0
        %1006 = vmatprep.subr.bf16.mxu0 0
        %1007 = vmatpush1.bf16.msra.mxu0 0
        %1008 = vmatprep.subr.bf16.mxu0 0
        %1009 = vmatpush1.bf16.msra.mxu0 0
        %1010 = vmatprep.subr.bf16.mxu0 0
        %1011 = vmatpush1.bf16.msra.mxu0 0
        %1012 = vmatprep.subr.bf16.mxu0 0
        %1013 = vmatpush1.bf16.msra.mxu0 0
        %1014 = vmatprep.subr.bf16.mxu0 0
        %1015 = vmatpush1.bf16.msra.mxu0 0
        %1016 = vmatprep.mubr.bf16.mxu0 0
        %1017 = vmatmul.mubr.bf16.gmra.mrb[0].mxu0 %v941
        %v1018 = vpop.f32.mrb[0].mxu0
        %v1019 = vadd.f32 %v928, %v1018
        %v1020 = vpop.f32.mrb[0].mxu0
        %v1021 = vpop.f32.mrb[0].mxu0
        %v1022 = vadd.f32 %v933, %v1021
        %v1023 = vpop.f32.mrb[0].mxu0
        %1024 = vdwg.mxu0
        %v1025 = vld [vmem:[#allocation2] sm:$0xff]
        %v1026 = vld [vmem:[#allocation2 + $0x8] sm:$0xff]
        %v1027 = vpack.c.bf16 %v873, %v870
        %v1028 = vpack.c.bf16 %v1022, %v1019
        %1029 = vmatprep.subr.bf16.mxu0 0
        %1030 = vmatpush1.bf16.xpose.msra.mxu0 %v1028
        %1031 = vmatprep.subr.bf16.mxu0 0
        %1032 = vmatpush1.bf16.xpose.msra.mxu0 0
        %1033 = vmatprep.subr.bf16.mxu0 0
        %1034 = vmatpush1.bf16.xpose.msra.mxu0 0
        %1035 = vmatprep.subr.bf16.mxu0 0
        %1036 = vmatpush1.bf16.xpose.msra.mxu0 0
        %1037 = vmatprep.subr.bf16.mxu0 0
        %1038 = vmatpush1.bf16.xpose.msra.mxu0 0
        %1039 = vmatprep.subr.bf16.mxu0 0
        %1040 = vmatpush1.bf16.xpose.msra.mxu0 0
        %1041 = vmatprep.subr.bf16.mxu0 0
        %1042 = vmatpush1.bf16.xpose.msra.mxu0 0
        %1043 = vmatprep.subr.bf16.mxu0 0
        %1044 = vmatpush1.bf16.xpose.msra.mxu0 0
        %1045 = vmatprep.subr.bf16.mxu0 0
        %1046 = vmatpush1.bf16.xpose.msra.mxu0 0
        %1047 = vmatprep.subr.bf16.mxu0 0
        %1048 = vmatpush1.bf16.xpose.msra.mxu0 0
        %1049 = vmatprep.subr.bf16.mxu0 0
        %1050 = vmatpush1.bf16.xpose.msra.mxu0 0
        %1051 = vmatprep.subr.bf16.mxu0 0
        %1052 = vmatpush1.bf16.xpose.msra.mxu0 0
        %1053 = vmatprep.subr.bf16.mxu0 0
        %1054 = vmatpush1.bf16.xpose.msra.mxu0 0
        %1055 = vmatprep.subr.bf16.mxu0 0
        %1056 = vmatpush1.bf16.xpose.msra.mxu0 0
        %1057 = vmatprep.subr.bf16.mxu0 0
        %1058 = vmatpush1.bf16.xpose.msra.mxu0 0
        %1059 = vmatprep.subr.bf16.mxu0 0
        %1060 = vmatpush1.bf16.xpose.msra.mxu0 0
        %1061 = vmatprep.mubr.bf16.mxu0 0
        %1062 = vmatmul.mubr.bf16.gmra.mrb[0].mxu0 %v1027
        %v1063 = vpop.f32.mrb[0].mxu0
        %v1064 = vadd.f32 0.0, %v1063
        %v1065 = vpop.f32.mrb[0].mxu0
        %v1066 = vpop.f32.mrb[0].mxu0
        %v1067 = vadd.f32 0.0, %v1066
        %v1068 = vpop.f32.mrb[0].mxu0
        %1069 = vdwg.mxu0
        %v1070 = vadd.f32 %v1025, %v1064
        %v1071 = vadd.f32 %v1026, %v1067
        %1072 = vst.msk [vmem:[#allocation2] sm:$0xff] %vm831, %v1070
        %1073 = vst.msk [vmem:[#allocation2 + $0x8] sm:$0xff] %vm831, %v1071
        %v1074 = vld [vmem:[#allocation3] sm:$0xff]
        %v1075 = vld [vmem:[#allocation3 + $0x8] sm:$0xff]
        %v1076 = vpack.c.bf16 %v920, %v917
        %v1077 = vpack.c.bf16 %v981, %v978
        %1078 = vmatprep.subr.bf16.mxu0 0
        %1079 = vmatpush1.bf16.xpose.msra.mxu0 %v1077
        %1080 = vmatprep.subr.bf16.mxu0 0
        %1081 = vmatpush1.bf16.xpose.msra.mxu0 0
        %1082 = vmatprep.subr.bf16.mxu0 0
        %1083 = vmatpush1.bf16.xpose.msra.mxu0 0
        %1084 = vmatprep.subr.bf16.mxu0 0
        %1085 = vmatpush1.bf16.xpose.msra.mxu0 0
        %1086 = vmatprep.subr.bf16.mxu0 0
        %1087 = vmatpush1.bf16.xpose.msra.mxu0 0
        %1088 = vmatprep.subr.bf16.mxu0 0
        %1089 = vmatpush1.bf16.xpose.msra.mxu0 0
        %1090 = vmatprep.subr.bf16.mxu0 0
        %1091 = vmatpush1.bf16.xpose.msra.mxu0 0
        %1092 = vmatprep.subr.bf16.mxu0 0
        %1093 = vmatpush1.bf16.xpose.msra.mxu0 0
        %1094 = vmatprep.subr.bf16.mxu0 0
        %1095 = vmatpush1.bf16.xpose.msra.mxu0 0
        %1096 = vmatprep.subr.bf16.mxu0 0
        %1097 = vmatpush1.bf16.xpose.msra.mxu0 0
        %1098 = vmatprep.subr.bf16.mxu0 0
        %1099 = vmatpush1.bf16.xpose.msra.mxu0 0
        %1100 = vmatprep.subr.bf16.mxu0 0
        %1101 = vmatpush1.bf16.xpose.msra.mxu0 0
        %1102 = vmatprep.subr.bf16.mxu0 0
        %1103 = vmatpush1.bf16.xpose.msra.mxu0 0
        %1104 = vmatprep.subr.bf16.mxu0 0
        %1105 = vmatpush1.bf16.xpose.msra.mxu0 0
        %1106 = vmatprep.subr.bf16.mxu0 0
        %1107 = vmatpush1.bf16.xpose.msra.mxu0 0
        %1108 = vmatprep.subr.bf16.mxu0 0
        %1109 = vmatpush1.bf16.xpose.msra.mxu0 0
        %1110 = vmatprep.mubr.bf16.mxu0 0
        %1111 = vmatmul.mubr.bf16.gmra.mrb[0].mxu0 %v1076
        %v1112 = vpop.f32.mrb[0].mxu0
        %v1113 = vadd.f32 0.0, %v1112
        %v1114 = vpop.f32.mrb[0].mxu0
        %v1115 = vpop.f32.mrb[0].mxu0
        %v1116 = vadd.f32 0.0, %v1115
        %v1117 = vpop.f32.mrb[0].mxu0
        %1118 = vdwg.mxu0
        %v1119 = vadd.f32 %v1074, %v1113
        %v1120 = vadd.f32 %v1075, %v1116
        %1121 = vst.msk [vmem:[#allocation3] sm:$0xff] %vm831, %v1119
        %1122 = vst.msk [vmem:[#allocation3 + $0x8] sm:$0xff] %vm831, %v1120
        %p1123 = scmp.eq.s32.totalorder %s44, 1
        // Predicated region
        $region174: #{tpu_custom_call.1} parent=128 // pred_check
          %p1124 = pneg %p1123
        $region175: #{tpu_custom_call.1} parent=128 // pred_check_branch
          %1126 = sbr.rel (%p1124) target = $region177
        $region176: #{tpu_custom_call.1} parent=128 // pred_region
          %v1127 = vld [vmem:[#allocation2] sm:$0xff]
          %v1128 = vld [vmem:[#allocation2 + $0x8] sm:$0xff]
          %v1129 = vld [vmem:[#allocation3] sm:$0xff]
          %v1130 = vld [vmem:[#allocation3 + $0x8] sm:$0xff]
          %v1131 = vld [vmem:[%s6] sm:$0xff]
          %v1132 = vld [vmem:[%s6 + $0x8] sm:$0xff]
          %v1133 = vld [vmem:[%s7] sm:$0xff]
          %v1134 = vld [vmem:[%s7 + $0x8] sm:$0xff]
          %v1136 = vsel %vm831, %v1129, 0
          %v1139 = vsel %vm831, %v1130, 0
          %v1142 = vsel %vm831, %v1133, 0
          %v1145 = vsel %vm831, %v1134, 0
          %1147 = vmatprep.subr.mxu0 0.0
          %1148 = vmatpush1.xpose.msra.mxu0 %v1142
          %1149 = vmatprep.subr.mxu0 0.0
          %1150 = vmatpush1.xpose.msra.mxu0 %v1145
          %1151 = vmatprep.subr.mxu0 0.0
          %1152 = vmatpush1.xpose.msra.mxu0 0.0
          %1153 = vmatprep.subr.mxu0 0.0
          %1154 = vmatpush1.xpose.msra.mxu0 0.0
          %1155 = vmatprep.subr.mxu0 0.0
          %1156 = vmatpush1.xpose.msra.mxu0 0.0
          %1157 = vmatprep.subr.mxu0 0.0
          %1158 = vmatpush1.xpose.msra.mxu0 0.0
          %1159 = vmatprep.subr.mxu0 0.0
          %1160 = vmatpush1.xpose.msra.mxu0 0.0
          %1161 = vmatprep.subr.mxu0 0.0
          %1162 = vmatpush1.xpose.msra.mxu0 0.0
          %1163 = vmatprep.subr.mxu0 0.0
          %1164 = vmatpush1.xpose.msra.mxu0 0.0
          %1165 = vmatprep.subr.mxu0 0.0
          %1166 = vmatpush1.xpose.msra.mxu0 0.0
          %1167 = vmatprep.subr.mxu0 0.0
          %1168 = vmatpush1.xpose.msra.mxu0 0.0
          %1169 = vmatprep.subr.mxu0 0.0
          %1170 = vmatpush1.xpose.msra.mxu0 0.0
          %1171 = vmatprep.subr.mxu0 0.0
          %1172 = vmatpush1.xpose.msra.mxu0 0.0
          %1173 = vmatprep.subr.mxu0 0.0
          %1174 = vmatpush1.xpose.msra.mxu0 0.0
          %1175 = vmatprep.subr.mxu0 0.0
          %1176 = vmatpush1.xpose.msra.mxu0 0.0
          %1177 = vmatprep.subr.mxu0 0.0
          %1178 = vmatpush1.xpose.msra.mxu0 0.0
          %1179 = vmatprep.subr.mxu0 0.0
          %1180 = vmatpush1.xpose.msra.mxu0 0.0
          %1181 = vmatprep.subr.mxu0 0.0
          %1182 = vmatpush1.xpose.msra.mxu0 0.0
          %1183 = vmatprep.subr.mxu0 0.0
          %1184 = vmatpush1.xpose.msra.mxu0 0.0
          %1185 = vmatprep.subr.mxu0 0.0
          %1186 = vmatpush1.xpose.msra.mxu0 0.0
          %1187 = vmatprep.subr.mxu0 0.0
          %1188 = vmatpush1.xpose.msra.mxu0 0.0
          %1189 = vmatprep.subr.mxu0 0.0
          %1190 = vmatpush1.xpose.msra.mxu0 0.0
          %1191 = vmatprep.subr.mxu0 0.0
          %1192 = vmatpush1.xpose.msra.mxu0 0.0
          %1193 = vmatprep.subr.mxu0 0.0
          %1194 = vmatpush1.xpose.msra.mxu0 0.0
          %1195 = vmatprep.subr.mxu0 0.0
          %1196 = vmatpush1.xpose.msra.mxu0 0.0
          %1197 = vmatprep.subr.mxu0 0.0
          %1198 = vmatpush1.xpose.msra.mxu0 0.0
          %1199 = vmatprep.subr.mxu0 0.0
          %1200 = vmatpush1.xpose.msra.mxu0 0.0
          %1201 = vmatprep.subr.mxu0 0.0
          %1202 = vmatpush1.xpose.msra.mxu0 0.0
          %1203 = vmatprep.subr.mxu0 0.0
          %1204 = vmatpush1.xpose.msra.mxu0 0.0
          %1205 = vmatprep.subr.mxu0 0.0
          %1206 = vmatpush1.xpose.msra.mxu0 0.0
          %1207 = vmatprep.subr.mxu0 0.0
          %1208 = vmatpush1.xpose.msra.mxu0 0.0
          %1209 = vmatprep.subr.mxu0 0.0
          %1210 = vmatpush1.xpose.msra.mxu0 0.0
          %1211 = vmatprep.mubr.f32.mxu0 0.0
          %1212 = vmatmul.mubr.f32.gmra.mrb[0].mxu0 %v1136
          %v1213 = vpop.f32.mrb[0].mxu0
          %v1214 = vadd.f32 0.0, %v1213
          %v1215 = vpop.f32.mrb[0].mxu0
          %1216 = vmatprep.mubr.f32.mxu0 0.0
          %1217 = vmatmul.mubr.f32.gmra.mrb[0].mxu0 %v1139
          %v1218 = vpop.f32.mrb[0].mxu0
          %v1219 = vadd.f32 0.0, %v1218
          %v1220 = vpop.f32.mrb[0].mxu0
          %1221 = vdwg.mxu0
          %v1223 = vsel %vm831, %v1127, 0
          %v1226 = vsel %vm831, %v1128, 0
          %v1229 = vsel %vm831, %v1131, 0
          %v1232 = vsel %vm831, %v1132, 0
          %1234 = vmatprep.subr.mxu0 0.0
          %1235 = vmatpush1.xpose.msra.mxu0 %v1229
          %1236 = vmatprep.subr.mxu0 0.0
          %1237 = vmatpush1.xpose.msra.mxu0 %v1232
          %1238 = vmatprep.subr.mxu0 0.0
          %1239 = vmatpush1.xpose.msra.mxu0 0.0
          %1240 = vmatprep.subr.mxu0 0.0
          %1241 = vmatpush1.xpose.msra.mxu0 0.0
          %1242 = vmatprep.subr.mxu0 0.0
          %1243 = vmatpush1.xpose.msra.mxu0 0.0
          %1244 = vmatprep.subr.mxu0 0.0
          %1245 = vmatpush1.xpose.msra.mxu0 0.0
          %1246 = vmatprep.subr.mxu0 0.0
          %1247 = vmatpush1.xpose.msra.mxu0 0.0
          %1248 = vmatprep.subr.mxu0 0.0
          %1249 = vmatpush1.xpose.msra.mxu0 0.0
          %1250 = vmatprep.subr.mxu0 0.0
          %1251 = vmatpush1.xpose.msra.mxu0 0.0
          %1252 = vmatprep.subr.mxu0 0.0
          %1253 = vmatpush1.xpose.msra.mxu0 0.0
          %1254 = vmatprep.subr.mxu0 0.0
          %1255 = vmatpush1.xpose.msra.mxu0 0.0
          %1256 = vmatprep.subr.mxu0 0.0
          %1257 = vmatpush1.xpose.msra.mxu0 0.0
          %1258 = vmatprep.subr.mxu0 0.0
          %1259 = vmatpush1.xpose.msra.mxu0 0.0
          %1260 = vmatprep.subr.mxu0 0.0
          %1261 = vmatpush1.xpose.msra.mxu0 0.0
          %1262 = vmatprep.subr.mxu0 0.0
          %1263 = vmatpush1.xpose.msra.mxu0 0.0
          %1264 = vmatprep.subr.mxu0 0.0
          %1265 = vmatpush1.xpose.msra.mxu0 0.0
          %1266 = vmatprep.subr.mxu0 0.0
          %1267 = vmatpush1.xpose.msra.mxu0 0.0
          %1268 = vmatprep.subr.mxu0 0.0
          %1269 = vmatpush1.xpose.msra.mxu0 0.0
          %1270 = vmatprep.subr.mxu0 0.0
          %1271 = vmatpush1.xpose.msra.mxu0 0.0
          %1272 = vmatprep.subr.mxu0 0.0
          %1273 = vmatpush1.xpose.msra.mxu0 0.0
          %1274 = vmatprep.subr.mxu0 0.0
          %1275 = vmatpush1.xpose.msra.mxu0 0.0
          %1276 = vmatprep.subr.mxu0 0.0
          %1277 = vmatpush1.xpose.msra.mxu0 0.0
          %1278 = vmatprep.subr.mxu0 0.0
          %1279 = vmatpush1.xpose.msra.mxu0 0.0
          %1280 = vmatprep.subr.mxu0 0.0
          %1281 = vmatpush1.xpose.msra.mxu0 0.0
          %1282 = vmatprep.subr.mxu0 0.0
          %1283 = vmatpush1.xpose.msra.mxu0 0.0
          %1284 = vmatprep.subr.mxu0 0.0
          %1285 = vmatpush1.xpose.msra.mxu0 0.0
          %1286 = vmatprep.subr.mxu0 0.0
          %1287 = vmatpush1.xpose.msra.mxu0 0.0
          %1288 = vmatprep.subr.mxu0 0.0
          %1289 = vmatpush1.xpose.msra.mxu0 0.0
          %1290 = vmatprep.subr.mxu0 0.0
          %1291 = vmatpush1.xpose.msra.mxu0 0.0
          %1292 = vmatprep.subr.mxu0 0.0
          %1293 = vmatpush1.xpose.msra.mxu0 0.0
          %1294 = vmatprep.subr.mxu0 0.0
          %1295 = vmatpush1.xpose.msra.mxu0 0.0
          %1296 = vmatprep.subr.mxu0 0.0
          %1297 = vmatpush1.xpose.msra.mxu0 0.0
          %1298 = vmatprep.mubr.f32.mxu0 0.0
          %1299 = vmatmul.mubr.f32.gmra.mrb[0].mxu0 %v1223
          %v1300 = vpop.f32.mrb[0].mxu0
          %v1301 = vadd.f32 %v1214, %v1300
          %v1302 = vpop.f32.mrb[0].mxu0
          %1303 = vmatprep.mubr.f32.mxu0 0.0
          %1304 = vmatmul.mubr.f32.gmra.mrb[0].mxu0 %v1226
          %v1305 = vpop.f32.mrb[0].mxu0
          %v1306 = vadd.f32 %v1219, %v1305
          %v1307 = vpop.f32.mrb[0].mxu0
          %1308 = vdwg.mxu0
          %v1309 = vld [vmem:[#allocation13] sm:$0x1]
          %v1311 = vlaneseq
          %v1312 = vshrl.u32 %v1311, 7
          %v1313 = vsub.s32 0, %v1312
          %v1314 = vrot.slane %v1309, %v1313
          %v1316 = vadd.f32 %v1301, %v1314
          %v1317 = vadd.f32 %v1306, %v1314
          %v1318 = vld [vmem:[%s8] sm:$0xff]
          %v1319 = vld [vmem:[%s8 + $0x8] sm:$0xff]
          %v1320 = vld [vmem:[#allocation11] sm:$0xff]
          %v1321 = vld [vmem:[#allocation11 + $0x8] sm:$0xff]
          %v1323 = vsel %vm831, %v1320, 0
          %v1326 = vsel %vm831, %v1321, 0
          %1328 = vmatprep.subr.mxu0 0.0
          %1329 = vmatpush1.xpose.msra.mxu0 %v1323
          %1330 = vmatprep.subr.mxu0 0.0
          %1331 = vmatpush1.xpose.msra.mxu0 %v1326
          %1332 = vmatprep.subr.mxu0 0.0
          %1333 = vmatpush1.xpose.msra.mxu0 0.0
          %1334 = vmatprep.subr.mxu0 0.0
          %1335 = vmatpush1.xpose.msra.mxu0 0.0
          %1336 = vmatprep.subr.mxu0 0.0
          %1337 = vmatpush1.xpose.msra.mxu0 0.0
          %1338 = vmatprep.subr.mxu0 0.0
          %1339 = vmatpush1.xpose.msra.mxu0 0.0
          %1340 = vmatprep.subr.mxu0 0.0
          %1341 = vmatpush1.xpose.msra.mxu0 0.0
          %1342 = vmatprep.subr.mxu0 0.0
          %1343 = vmatpush1.xpose.msra.mxu0 0.0
          %1344 = vmatprep.subr.mxu0 0.0
          %1345 = vmatpush1.xpose.msra.mxu0 0.0
          %1346 = vmatprep.subr.mxu0 0.0
          %1347 = vmatpush1.xpose.msra.mxu0 0.0
          %1348 = vmatprep.subr.mxu0 0.0
          %1349 = vmatpush1.xpose.msra.mxu0 0.0
          %1350 = vmatprep.subr.mxu0 0.0
          %1351 = vmatpush1.xpose.msra.mxu0 0.0
          %1352 = vmatprep.subr.mxu0 0.0
          %1353 = vmatpush1.xpose.msra.mxu0 0.0
          %1354 = vmatprep.subr.mxu0 0.0
          %1355 = vmatpush1.xpose.msra.mxu0 0.0
          %1356 = vmatprep.subr.mxu0 0.0
          %1357 = vmatpush1.xpose.msra.mxu0 0.0
          %1358 = vmatprep.subr.mxu0 0.0
          %1359 = vmatpush1.xpose.msra.mxu0 0.0
          %1360 = vmatprep.subr.mxu0 0.0
          %1361 = vmatpush1.xpose.msra.mxu0 0.0
          %1362 = vmatprep.subr.mxu0 0.0
          %1363 = vmatpush1.xpose.msra.mxu0 0.0
          %1364 = vmatprep.subr.mxu0 0.0
          %1365 = vmatpush1.xpose.msra.mxu0 0.0
          %1366 = vmatprep.subr.mxu0 0.0
          %1367 = vmatpush1.xpose.msra.mxu0 0.0
          %1368 = vmatprep.subr.mxu0 0.0
          %1369 = vmatpush1.xpose.msra.mxu0 0.0
          %1370 = vmatprep.subr.mxu0 0.0
          %1371 = vmatpush1.xpose.msra.mxu0 0.0
          %1372 = vmatprep.subr.mxu0 0.0
          %1373 = vmatpush1.xpose.msra.mxu0 0.0
          %1374 = vmatprep.subr.mxu0 0.0
          %1375 = vmatpush1.xpose.msra.mxu0 0.0
          %1376 = vmatprep.subr.mxu0 0.0
          %1377 = vmatpush1.xpose.msra.mxu0 0.0
          %1378 = vmatprep.subr.mxu0 0.0
          %1379 = vmatpush1.xpose.msra.mxu0 0.0
          %1380 = vmatprep.subr.mxu0 0.0
          %1381 = vmatpush1.xpose.msra.mxu0 0.0
          %1382 = vmatprep.subr.mxu0 0.0
          %1383 = vmatpush1.xpose.msra.mxu0 0.0
          %1384 = vmatprep.subr.mxu0 0.0
          %1385 = vmatpush1.xpose.msra.mxu0 0.0
          %1386 = vmatprep.subr.mxu0 0.0
          %1387 = vmatpush1.xpose.msra.mxu0 0.0
          %1388 = vmatprep.subr.mxu0 0.0
          %1389 = vmatpush1.xpose.msra.mxu0 0.0
          %1390 = vmatprep.subr.mxu0 0.0
          %1391 = vmatpush1.xpose.msra.mxu0 0.0
          %1392 = vmatprep.mubr.f32.mxu0 0.0
          %1393 = vmatmul.mubr.f32.gmra.mrb[0].mxu0 %v1136
          %v1394 = vpop.f32.mrb[0].mxu0
          %v1395 = vadd.f32 0.0, %v1394
          %v1396 = vpop.f32.mrb[0].mxu0
          %1397 = vmatprep.mubr.f32.mxu0 0.0
          %1398 = vmatmul.mubr.f32.gmra.mrb[0].mxu0 %v1139
          %v1399 = vpop.f32.mrb[0].mxu0
          %v1400 = vadd.f32 0.0, %v1399
          %v1401 = vpop.f32.mrb[0].mxu0
          %1402 = vdwg.mxu0
          %v1404 = vsel %vm831, %v1318, 0
          %v1407 = vsel %vm831, %v1319, 0
          %1409 = vmatprep.subr.mxu0 0.0
          %1410 = vmatpush1.xpose.msra.mxu0 %v1404
          %1411 = vmatprep.subr.mxu0 0.0
          %1412 = vmatpush1.xpose.msra.mxu0 %v1407
          %1413 = vmatprep.subr.mxu0 0.0
          %1414 = vmatpush1.xpose.msra.mxu0 0.0
          %1415 = vmatprep.subr.mxu0 0.0
          %1416 = vmatpush1.xpose.msra.mxu0 0.0
          %1417 = vmatprep.subr.mxu0 0.0
          %1418 = vmatpush1.xpose.msra.mxu0 0.0
          %1419 = vmatprep.subr.mxu0 0.0
          %1420 = vmatpush1.xpose.msra.mxu0 0.0
          %1421 = vmatprep.subr.mxu0 0.0
          %1422 = vmatpush1.xpose.msra.mxu0 0.0
          %1423 = vmatprep.subr.mxu0 0.0
          %1424 = vmatpush1.xpose.msra.mxu0 0.0
          %1425 = vmatprep.subr.mxu0 0.0
          %1426 = vmatpush1.xpose.msra.mxu0 0.0
          %1427 = vmatprep.subr.mxu0 0.0
          %1428 = vmatpush1.xpose.msra.mxu0 0.0
          %1429 = vmatprep.subr.mxu0 0.0
          %1430 = vmatpush1.xpose.msra.mxu0 0.0
          %1431 = vmatprep.subr.mxu0 0.0
          %1432 = vmatpush1.xpose.msra.mxu0 0.0
          %1433 = vmatprep.subr.mxu0 0.0
          %1434 = vmatpush1.xpose.msra.mxu0 0.0
          %1435 = vmatprep.subr.mxu0 0.0
          %1436 = vmatpush1.xpose.msra.mxu0 0.0
          %1437 = vmatprep.subr.mxu0 0.0
          %1438 = vmatpush1.xpose.msra.mxu0 0.0
          %1439 = vmatprep.subr.mxu0 0.0
          %1440 = vmatpush1.xpose.msra.mxu0 0.0
          %1441 = vmatprep.subr.mxu0 0.0
          %1442 = vmatpush1.xpose.msra.mxu0 0.0
          %1443 = vmatprep.subr.mxu0 0.0
          %1444 = vmatpush1.xpose.msra.mxu0 0.0
          %1445 = vmatprep.subr.mxu0 0.0
          %1446 = vmatpush1.xpose.msra.mxu0 0.0
          %1447 = vmatprep.subr.mxu0 0.0
          %1448 = vmatpush1.xpose.msra.mxu0 0.0
          %1449 = vmatprep.subr.mxu0 0.0
          %1450 = vmatpush1.xpose.msra.mxu0 0.0
          %1451 = vmatprep.subr.mxu0 0.0
          %1452 = vmatpush1.xpose.msra.mxu0 0.0
          %1453 = vmatprep.subr.mxu0 0.0
          %1454 = vmatpush1.xpose.msra.mxu0 0.0
          %1455 = vmatprep.subr.mxu0 0.0
          %1456 = vmatpush1.xpose.msra.mxu0 0.0
          %1457 = vmatprep.subr.mxu0 0.0
          %1458 = vmatpush1.xpose.msra.mxu0 0.0
          %1459 = vmatprep.subr.mxu0 0.0
          %1460 = vmatpush1.xpose.msra.mxu0 0.0
          %1461 = vmatprep.subr.mxu0 0.0
          %1462 = vmatpush1.xpose.msra.mxu0 0.0
          %1463 = vmatprep.subr.mxu0 0.0
          %1464 = vmatpush1.xpose.msra.mxu0 0.0
          %1465 = vmatprep.subr.mxu0 0.0
          %1466 = vmatpush1.xpose.msra.mxu0 0.0
          %1467 = vmatprep.subr.mxu0 0.0
          %1468 = vmatpush1.xpose.msra.mxu0 0.0
          %1469 = vmatprep.subr.mxu0 0.0
          %1470 = vmatpush1.xpose.msra.mxu0 0.0
          %1471 = vmatprep.subr.mxu0 0.0
          %1472 = vmatpush1.xpose.msra.mxu0 0.0
          %1473 = vmatprep.mubr.f32.mxu0 0.0
          %1474 = vmatmul.mubr.f32.gmra.mrb[0].mxu0 %v1223
          %v1475 = vpop.f32.mrb[0].mxu0
          %v1476 = vadd.f32 %v1395, %v1475
          %v1477 = vpop.f32.mrb[0].mxu0
          %1478 = vmatprep.mubr.f32.mxu0 0.0
          %1479 = vmatmul.mubr.f32.gmra.mrb[0].mxu0 %v1226
          %v1480 = vpop.f32.mrb[0].mxu0
          %v1481 = vadd.f32 %v1400, %v1480
          %v1482 = vpop.f32.mrb[0].mxu0
          %1483 = vdwg.mxu0
          %v1484 = vld [vmem:[#allocation14] sm:$0x1]
          %v1486 = vlaneseq
          %v1487 = vshrl.u32 %v1486, 7
          %v1488 = vsub.s32 0, %v1487
          %v1489 = vrot.slane %v1484, %v1488
          %v1491 = vadd.f32 %v1476, %v1489
          %v1492 = vadd.f32 %v1481, %v1489
          %v1493 = vadd.f32 %v1316, %v1127
          %v1494 = vadd.f32 %v1317, %v1128
          %v1495 = vmax.f32 %v1493, 0.0
          %v1496 = vmax.f32 %v1494, 0.0
          %v1497 = vadd.f32 %v1491, %v1129
          %v1498 = vadd.f32 %v1492, %v1130
          %v1499 = vmax.f32 %v1497, 0.0
          %v1500 = vmax.f32 %v1498, 0.0
          %v1501 = vld [vmem:[%s12] sm:$0xff]
          %v1502 = vld [vmem:[%s12 + $0x8] sm:$0xff]
          %v1504 = vsel %vm831, %v1501, 0
          %v1507 = vsel %vm831, %v1502, 0
          %1509 = vmatprep.subr.mxu0 0.0
          %1510 = vmatpush1.msra.mxu0 %v1495
          %1511 = vmatprep.subr.mxu0 0.0
          %1512 = vmatpush1.msra.mxu0 %v1496
          %1513 = vmatprep.subr.mxu0 0.0
          %1514 = vmatpush1.msra.mxu0 0.0
          %1515 = vmatprep.subr.mxu0 0.0
          %1516 = vmatpush1.msra.mxu0 0.0
          %1517 = vmatprep.subr.mxu0 0.0
          %1518 = vmatpush1.msra.mxu0 0.0
          %1519 = vmatprep.subr.mxu0 0.0
          %1520 = vmatpush1.msra.mxu0 0.0
          %1521 = vmatprep.subr.mxu0 0.0
          %1522 = vmatpush1.msra.mxu0 0.0
          %1523 = vmatprep.subr.mxu0 0.0
          %1524 = vmatpush1.msra.mxu0 0.0
          %1525 = vmatprep.subr.mxu0 0.0
          %1526 = vmatpush1.msra.mxu0 0.0
          %1527 = vmatprep.subr.mxu0 0.0
          %1528 = vmatpush1.msra.mxu0 0.0
          %1529 = vmatprep.subr.mxu0 0.0
          %1530 = vmatpush1.msra.mxu0 0.0
          %1531 = vmatprep.subr.mxu0 0.0
          %1532 = vmatpush1.msra.mxu0 0.0
          %1533 = vmatprep.subr.mxu0 0.0
          %1534 = vmatpush1.msra.mxu0 0.0
          %1535 = vmatprep.subr.mxu0 0.0
          %1536 = vmatpush1.msra.mxu0 0.0
          %1537 = vmatprep.subr.mxu0 0.0
          %1538 = vmatpush1.msra.mxu0 0.0
          %1539 = vmatprep.subr.mxu0 0.0
          %1540 = vmatpush1.msra.mxu0 0.0
          %1541 = vmatprep.subr.mxu0 0.0
          %1542 = vmatpush1.msra.mxu0 0.0
          %1543 = vmatprep.subr.mxu0 0.0
          %1544 = vmatpush1.msra.mxu0 0.0
          %1545 = vmatprep.subr.mxu0 0.0
          %1546 = vmatpush1.msra.mxu0 0.0
          %1547 = vmatprep.subr.mxu0 0.0
          %1548 = vmatpush1.msra.mxu0 0.0
          %1549 = vmatprep.subr.mxu0 0.0
          %1550 = vmatpush1.msra.mxu0 0.0
          %1551 = vmatprep.subr.mxu0 0.0
          %1552 = vmatpush1.msra.mxu0 0.0
          %1553 = vmatprep.subr.mxu0 0.0
          %1554 = vmatpush1.msra.mxu0 0.0
          %1555 = vmatprep.subr.mxu0 0.0
          %1556 = vmatpush1.msra.mxu0 0.0
          %1557 = vmatprep.subr.mxu0 0.0
          %1558 = vmatpush1.msra.mxu0 0.0
          %1559 = vmatprep.subr.mxu0 0.0
          %1560 = vmatpush1.msra.mxu0 0.0
          %1561 = vmatprep.subr.mxu0 0.0
          %1562 = vmatpush1.msra.mxu0 0.0
          %1563 = vmatprep.subr.mxu0 0.0
          %1564 = vmatpush1.msra.mxu0 0.0
          %1565 = vmatprep.subr.mxu0 0.0
          %1566 = vmatpush1.msra.mxu0 0.0
          %1567 = vmatprep.subr.mxu0 0.0
          %1568 = vmatpush1.msra.mxu0 0.0
          %1569 = vmatprep.subr.mxu0 0.0
          %1570 = vmatpush1.msra.mxu0 0.0
          %1571 = vmatprep.subr.mxu0 0.0
          %1572 = vmatpush1.msra.mxu0 0.0
          %1573 = vmatprep.mubr.f32.mxu0 0.0
          %1574 = vmatmul.mubr.f32.gmra.mrb[0].mxu0 %v1504
          %v1575 = vpop.f32.mrb[0].mxu0
          %v1576 = vadd.f32 0.0, %v1575
          %v1577 = vpop.f32.mrb[0].mxu0
          %1578 = vmatprep.mubr.f32.mxu0 0.0
          %1579 = vmatmul.mubr.f32.gmra.mrb[0].mxu0 %v1507
          %v1580 = vpop.f32.mrb[0].mxu0
          %v1581 = vadd.f32 0.0, %v1580
          %v1582 = vpop.f32.mrb[0].mxu0
          %1583 = vdwg.mxu0
          %1584 = vmatprep.subr.mxu0 0.0
          %1585 = vmatpush1.msra.mxu0 %v1499
          %1586 = vmatprep.subr.mxu0 0.0
          %1587 = vmatpush1.msra.mxu0 %v1500
          %1588 = vmatprep.subr.mxu0 0.0
          %1589 = vmatpush1.msra.mxu0 0.0
          %1590 = vmatprep.subr.mxu0 0.0
          %1591 = vmatpush1.msra.mxu0 0.0
          %1592 = vmatprep.subr.mxu0 0.0
          %1593 = vmatpush1.msra.mxu0 0.0
          %1594 = vmatprep.subr.mxu0 0.0
          %1595 = vmatpush1.msra.mxu0 0.0
          %1596 = vmatprep.subr.mxu0 0.0
          %1597 = vmatpush1.msra.mxu0 0.0
          %1598 = vmatprep.subr.mxu0 0.0
          %1599 = vmatpush1.msra.mxu0 0.0
          %1600 = vmatprep.subr.mxu0 0.0
          %1601 = vmatpush1.msra.mxu0 0.0
          %1602 = vmatprep.subr.mxu0 0.0
          %1603 = vmatpush1.msra.mxu0 0.0
          %1604 = vmatprep.subr.mxu0 0.0
          %1605 = vmatpush1.msra.mxu0 0.0
          %1606 = vmatprep.subr.mxu0 0.0
          %1607 = vmatpush1.msra.mxu0 0.0
          %1608 = vmatprep.subr.mxu0 0.0
          %1609 = vmatpush1.msra.mxu0 0.0
          %1610 = vmatprep.subr.mxu0 0.0
          %1611 = vmatpush1.msra.mxu0 0.0
          %1612 = vmatprep.subr.mxu0 0.0
          %1613 = vmatpush1.msra.mxu0 0.0
          %1614 = vmatprep.subr.mxu0 0.0
          %1615 = vmatpush1.msra.mxu0 0.0
          %1616 = vmatprep.subr.mxu0 0.0
          %1617 = vmatpush1.msra.mxu0 0.0
          %1618 = vmatprep.subr.mxu0 0.0
          %1619 = vmatpush1.msra.mxu0 0.0
          %1620 = vmatprep.subr.mxu0 0.0
          %1621 = vmatpush1.msra.mxu0 0.0
          %1622 = vmatprep.subr.mxu0 0.0
          %1623 = vmatpush1.msra.mxu0 0.0
          %1624 = vmatprep.subr.mxu0 0.0
          %1625 = vmatpush1.msra.mxu0 0.0
          %1626 = vmatprep.subr.mxu0 0.0
          %1627 = vmatpush1.msra.mxu0 0.0
          %1628 = vmatprep.subr.mxu0 0.0
          %1629 = vmatpush1.msra.mxu0 0.0
          %1630 = vmatprep.subr.mxu0 0.0
          %1631 = vmatpush1.msra.mxu0 0.0
          %1632 = vmatprep.subr.mxu0 0.0
          %1633 = vmatpush1.msra.mxu0 0.0
          %1634 = vmatprep.subr.mxu0 0.0
          %1635 = vmatpush1.msra.mxu0 0.0
          %1636 = vmatprep.subr.mxu0 0.0
          %1637 = vmatpush1.msra.mxu0 0.0
          %1638 = vmatprep.subr.mxu0 0.0
          %1639 = vmatpush1.msra.mxu0 0.0
          %1640 = vmatprep.subr.mxu0 0.0
          %1641 = vmatpush1.msra.mxu0 0.0
          %1642 = vmatprep.subr.mxu0 0.0
          %1643 = vmatpush1.msra.mxu0 0.0
          %1644 = vmatprep.subr.mxu0 0.0
          %1645 = vmatpush1.msra.mxu0 0.0
          %1646 = vmatprep.subr.mxu0 0.0
          %1647 = vmatpush1.msra.mxu0 0.0
          %1648 = vmatprep.mubr.f32.mxu0 0.0
          %1649 = vmatmul.mubr.f32.gmra.mrb[0].mxu0 %v1504
          %v1650 = vpop.f32.mrb[0].mxu0
          %v1651 = vadd.f32 0.0, %v1650
          %v1652 = vpop.f32.mrb[0].mxu0
          %1653 = vmatprep.mubr.f32.mxu0 0.0
          %1654 = vmatmul.mubr.f32.gmra.mrb[0].mxu0 %v1507
          %v1655 = vpop.f32.mrb[0].mxu0
          %v1656 = vadd.f32 0.0, %v1655
          %v1657 = vpop.f32.mrb[0].mxu0
          %1658 = vdwg.mxu0
          %v1659 = vld [vmem:[#allocation16] sm:$0xff]
          %v1660 = vld [vmem:[#allocation16 + $0x8] sm:$0xff]
          %v1661 = vld [vmem:[#allocation17] sm:$0xff]
          %v1662 = vld [vmem:[#allocation17 + $0x8] sm:$0xff]
          %v1664 = vsel %vm831, %v1651, 0
          %v1667 = vsel %vm831, %v1656, 0
          %v1670 = vsel %vm831, %v1661, 0
          %v1673 = vsel %vm831, %v1662, 0
          %1675 = vmatprep.subr.mxu0 0.0
          %1676 = vmatpush1.xpose.msra.mxu0 %v1670
          %1677 = vmatprep.subr.mxu0 0.0
          %1678 = vmatpush1.xpose.msra.mxu0 %v1673
          %1679 = vmatprep.subr.mxu0 0.0
          %1680 = vmatpush1.xpose.msra.mxu0 0.0
          %1681 = vmatprep.subr.mxu0 0.0
          %1682 = vmatpush1.xpose.msra.mxu0 0.0
          %1683 = vmatprep.subr.mxu0 0.0
          %1684 = vmatpush1.xpose.msra.mxu0 0.0
          %1685 = vmatprep.subr.mxu0 0.0
          %1686 = vmatpush1.xpose.msra.mxu0 0.0
          %1687 = vmatprep.subr.mxu0 0.0
          %1688 = vmatpush1.xpose.msra.mxu0 0.0
          %1689 = vmatprep.subr.mxu0 0.0
          %1690 = vmatpush1.xpose.msra.mxu0 0.0
          %1691 = vmatprep.subr.mxu0 0.0
          %1692 = vmatpush1.xpose.msra.mxu0 0.0
          %1693 = vmatprep.subr.mxu0 0.0
          %1694 = vmatpush1.xpose.msra.mxu0 0.0
          %1695 = vmatprep.subr.mxu0 0.0
          %1696 = vmatpush1.xpose.msra.mxu0 0.0
          %1697 = vmatprep.subr.mxu0 0.0
          %1698 = vmatpush1.xpose.msra.mxu0 0.0
          %1699 = vmatprep.subr.mxu0 0.0
          %1700 = vmatpush1.xpose.msra.mxu0 0.0
          %1701 = vmatprep.subr.mxu0 0.0
          %1702 = vmatpush1.xpose.msra.mxu0 0.0
          %1703 = vmatprep.subr.mxu0 0.0
          %1704 = vmatpush1.xpose.msra.mxu0 0.0
          %1705 = vmatprep.subr.mxu0 0.0
          %1706 = vmatpush1.xpose.msra.mxu0 0.0
          %1707 = vmatprep.subr.mxu0 0.0
          %1708 = vmatpush1.xpose.msra.mxu0 0.0
          %1709 = vmatprep.subr.mxu0 0.0
          %1710 = vmatpush1.xpose.msra.mxu0 0.0
          %1711 = vmatprep.subr.mxu0 0.0
          %1712 = vmatpush1.xpose.msra.mxu0 0.0
          %1713 = vmatprep.subr.mxu0 0.0
          %1714 = vmatpush1.xpose.msra.mxu0 0.0
          %1715 = vmatprep.subr.mxu0 0.0
          %1716 = vmatpush1.xpose.msra.mxu0 0.0
          %1717 = vmatprep.subr.mxu0 0.0
          %1718 = vmatpush1.xpose.msra.mxu0 0.0
          %1719 = vmatprep.subr.mxu0 0.0
          %1720 = vmatpush1.xpose.msra.mxu0 0.0
          %1721 = vmatprep.subr.mxu0 0.0
          %1722 = vmatpush1.xpose.msra.mxu0 0.0
          %1723 = vmatprep.subr.mxu0 0.0
          %1724 = vmatpush1.xpose.msra.mxu0 0.0
          %1725 = vmatprep.subr.mxu0 0.0
          %1726 = vmatpush1.xpose.msra.mxu0 0.0
          %1727 = vmatprep.subr.mxu0 0.0
          %1728 = vmatpush1.xpose.msra.mxu0 0.0
          %1729 = vmatprep.subr.mxu0 0.0
          %1730 = vmatpush1.xpose.msra.mxu0 0.0
          %1731 = vmatprep.subr.mxu0 0.0
          %1732 = vmatpush1.xpose.msra.mxu0 0.0
          %1733 = vmatprep.subr.mxu0 0.0
          %1734 = vmatpush1.xpose.msra.mxu0 0.0
          %1735 = vmatprep.subr.mxu0 0.0
          %1736 = vmatpush1.xpose.msra.mxu0 0.0
          %1737 = vmatprep.subr.mxu0 0.0
          %1738 = vmatpush1.xpose.msra.mxu0 0.0
          %1739 = vmatprep.mubr.f32.mxu0 0.0
          %1740 = vmatmul.mubr.f32.gmra.mrb[0].mxu0 %v1664
          %v1741 = vpop.f32.mrb[0].mxu0
          %v1742 = vadd.f32 0.0, %v1741
          %v1743 = vpop.f32.mrb[0].mxu0
          %1744 = vmatprep.mubr.f32.mxu0 0.0
          %1745 = vmatmul.mubr.f32.gmra.mrb[0].mxu0 %v1667
          %v1746 = vpop.f32.mrb[0].mxu0
          %v1747 = vadd.f32 0.0, %v1746
          %v1748 = vpop.f32.mrb[0].mxu0
          %1749 = vdwg.mxu0
          %v1751 = vsel %vm831, %v1576, 0
          %v1754 = vsel %vm831, %v1581, 0
          %v1757 = vsel %vm831, %v1659, 0
          %v1760 = vsel %vm831, %v1660, 0
          %1762 = vmatprep.subr.mxu0 0.0
          %1763 = vmatpush1.xpose.msra.mxu0 %v1757
          %1764 = vmatprep.subr.mxu0 0.0
          %1765 = vmatpush1.xpose.msra.mxu0 %v1760
          %1766 = vmatprep.subr.mxu0 0.0
          %1767 = vmatpush1.xpose.msra.mxu0 0.0
          %1768 = vmatprep.subr.mxu0 0.0
          %1769 = vmatpush1.xpose.msra.mxu0 0.0
          %1770 = vmatprep.subr.mxu0 0.0
          %1771 = vmatpush1.xpose.msra.mxu0 0.0
          %1772 = vmatprep.subr.mxu0 0.0
          %1773 = vmatpush1.xpose.msra.mxu0 0.0
          %1774 = vmatprep.subr.mxu0 0.0
          %1775 = vmatpush1.xpose.msra.mxu0 0.0
          %1776 = vmatprep.subr.mxu0 0.0
          %1777 = vmatpush1.xpose.msra.mxu0 0.0
          %1778 = vmatprep.subr.mxu0 0.0
          %1779 = vmatpush1.xpose.msra.mxu0 0.0
          %1780 = vmatprep.subr.mxu0 0.0
          %1781 = vmatpush1.xpose.msra.mxu0 0.0
          %1782 = vmatprep.subr.mxu0 0.0
          %1783 = vmatpush1.xpose.msra.mxu0 0.0
          %1784 = vmatprep.subr.mxu0 0.0
          %1785 = vmatpush1.xpose.msra.mxu0 0.0
          %1786 = vmatprep.subr.mxu0 0.0
          %1787 = vmatpush1.xpose.msra.mxu0 0.0
          %1788 = vmatprep.subr.mxu0 0.0
          %1789 = vmatpush1.xpose.msra.mxu0 0.0
          %1790 = vmatprep.subr.mxu0 0.0
          %1791 = vmatpush1.xpose.msra.mxu0 0.0
          %1792 = vmatprep.subr.mxu0 0.0
          %1793 = vmatpush1.xpose.msra.mxu0 0.0
          %1794 = vmatprep.subr.mxu0 0.0
          %1795 = vmatpush1.xpose.msra.mxu0 0.0
          %1796 = vmatprep.subr.mxu0 0.0
          %1797 = vmatpush1.xpose.msra.mxu0 0.0
          %1798 = vmatprep.subr.mxu0 0.0
          %1799 = vmatpush1.xpose.msra.mxu0 0.0
          %1800 = vmatprep.subr.mxu0 0.0
          %1801 = vmatpush1.xpose.msra.mxu0 0.0
          %1802 = vmatprep.subr.mxu0 0.0
          %1803 = vmatpush1.xpose.msra.mxu0 0.0
          %1804 = vmatprep.subr.mxu0 0.0
          %1805 = vmatpush1.xpose.msra.mxu0 0.0
          %1806 = vmatprep.subr.mxu0 0.0
          %1807 = vmatpush1.xpose.msra.mxu0 0.0
          %1808 = vmatprep.subr.mxu0 0.0
          %1809 = vmatpush1.xpose.msra.mxu0 0.0
          %1810 = vmatprep.subr.mxu0 0.0
          %1811 = vmatpush1.xpose.msra.mxu0 0.0
          %1812 = vmatprep.subr.mxu0 0.0
          %1813 = vmatpush1.xpose.msra.mxu0 0.0
          %1814 = vmatprep.subr.mxu0 0.0
          %1815 = vmatpush1.xpose.msra.mxu0 0.0
          %1816 = vmatprep.subr.mxu0 0.0
          %1817 = vmatpush1.xpose.msra.mxu0 0.0
          %1818 = vmatprep.subr.mxu0 0.0
          %1819 = vmatpush1.xpose.msra.mxu0 0.0
          %1820 = vmatprep.subr.mxu0 0.0
          %1821 = vmatpush1.xpose.msra.mxu0 0.0
          %1822 = vmatprep.subr.mxu0 0.0
          %1823 = vmatpush1.xpose.msra.mxu0 0.0
          %1824 = vmatprep.subr.mxu0 0.0
          %1825 = vmatpush1.xpose.msra.mxu0 0.0
          %1826 = vmatprep.mubr.f32.mxu0 0.0
          %1827 = vmatmul.mubr.f32.gmra.mrb[0].mxu0 %v1751
          %v1828 = vpop.f32.mrb[0].mxu0
          %v1829 = vadd.f32 %v1742, %v1828
          %v1830 = vpop.f32.mrb[0].mxu0
          %1831 = vmatprep.mubr.f32.mxu0 0.0
          %1832 = vmatmul.mubr.f32.gmra.mrb[0].mxu0 %v1754
          %v1833 = vpop.f32.mrb[0].mxu0
          %v1834 = vadd.f32 %v1747, %v1833
          %v1835 = vpop.f32.mrb[0].mxu0
          %1836 = vdwg.mxu0
          %v1837 = vld [vmem:[%s15] sm:$0x1]
          %v1839 = vlaneseq
          %v1840 = vshrl.u32 %v1839, 7
          %v1841 = vsub.s32 0, %v1840
          %v1842 = vrot.slane %v1837, %v1841
          %v1844 = vadd.f32 %v1829, %v1842
          %v1845 = vadd.f32 %v1834, %v1842
          %v1846 = vld [vmem:[#allocation19] sm:$0xff]
          %v1847 = vld [vmem:[#allocation19 + $0x8] sm:$0xff]
          %v1849 = vsel %vm831, %v1846, 0
          %v1852 = vsel %vm831, %v1847, 0
          %1854 = vmatprep.subr.mxu0 0.0
          %1855 = vmatpush1.msra.mxu0 %v1844
          %1856 = vmatprep.subr.mxu0 0.0
          %1857 = vmatpush1.msra.mxu0 %v1845
          %1858 = vmatprep.subr.mxu0 0.0
          %1859 = vmatpush1.msra.mxu0 0.0
          %1860 = vmatprep.subr.mxu0 0.0
          %1861 = vmatpush1.msra.mxu0 0.0
          %1862 = vmatprep.subr.mxu0 0.0
          %1863 = vmatpush1.msra.mxu0 0.0
          %1864 = vmatprep.subr.mxu0 0.0
          %1865 = vmatpush1.msra.mxu0 0.0
          %1866 = vmatprep.subr.mxu0 0.0
          %1867 = vmatpush1.msra.mxu0 0.0
          %1868 = vmatprep.subr.mxu0 0.0
          %1869 = vmatpush1.msra.mxu0 0.0
          %1870 = vmatprep.subr.mxu0 0.0
          %1871 = vmatpush1.msra.mxu0 0.0
          %1872 = vmatprep.subr.mxu0 0.0
          %1873 = vmatpush1.msra.mxu0 0.0
          %1874 = vmatprep.subr.mxu0 0.0
          %1875 = vmatpush1.msra.mxu0 0.0
          %1876 = vmatprep.subr.mxu0 0.0
          %1877 = vmatpush1.msra.mxu0 0.0
          %1878 = vmatprep.subr.mxu0 0.0
          %1879 = vmatpush1.msra.mxu0 0.0
          %1880 = vmatprep.subr.mxu0 0.0
          %1881 = vmatpush1.msra.mxu0 0.0
          %1882 = vmatprep.subr.mxu0 0.0
          %1883 = vmatpush1.msra.mxu0 0.0
          %1884 = vmatprep.subr.mxu0 0.0
          %1885 = vmatpush1.msra.mxu0 0.0
          %1886 = vmatprep.subr.mxu0 0.0
          %1887 = vmatpush1.msra.mxu0 0.0
          %1888 = vmatprep.subr.mxu0 0.0
          %1889 = vmatpush1.msra.mxu0 0.0
          %1890 = vmatprep.subr.mxu0 0.0
          %1891 = vmatpush1.msra.mxu0 0.0
          %1892 = vmatprep.subr.mxu0 0.0
          %1893 = vmatpush1.msra.mxu0 0.0
          %1894 = vmatprep.subr.mxu0 0.0
          %1895 = vmatpush1.msra.mxu0 0.0
          %1896 = vmatprep.subr.mxu0 0.0
          %1897 = vmatpush1.msra.mxu0 0.0
          %1898 = vmatprep.subr.mxu0 0.0
          %1899 = vmatpush1.msra.mxu0 0.0
          %1900 = vmatprep.subr.mxu0 0.0
          %1901 = vmatpush1.msra.mxu0 0.0
          %1902 = vmatprep.subr.mxu0 0.0
          %1903 = vmatpush1.msra.mxu0 0.0
          %1904 = vmatprep.subr.mxu0 0.0
          %1905 = vmatpush1.msra.mxu0 0.0
          %1906 = vmatprep.subr.mxu0 0.0
          %1907 = vmatpush1.msra.mxu0 0.0
          %1908 = vmatprep.subr.mxu0 0.0
          %1909 = vmatpush1.msra.mxu0 0.0
          %1910 = vmatprep.subr.mxu0 0.0
          %1911 = vmatpush1.msra.mxu0 0.0
          %1912 = vmatprep.subr.mxu0 0.0
          %1913 = vmatpush1.msra.mxu0 0.0
          %1914 = vmatprep.subr.mxu0 0.0
          %1915 = vmatpush1.msra.mxu0 0.0
          %1916 = vmatprep.subr.mxu0 0.0
          %1917 = vmatpush1.msra.mxu0 0.0
          %1918 = vmatprep.mubr.f32.mxu0 0.0
          %1919 = vmatmul.mubr.f32.gmra.mrb[0].mxu0 %v1849
          %v1920 = vpop.f32.mrb[0].mxu0
          %v1921 = vadd.f32 0.0, %v1920
          %v1922 = vpop.f32.mrb[0].mxu0
          %1923 = vmatprep.mubr.f32.mxu0 0.0
          %1924 = vmatmul.mubr.f32.gmra.mrb[0].mxu0 %v1852
          %v1925 = vpop.f32.mrb[0].mxu0
          %v1926 = vadd.f32 0.0, %v1925
          %v1927 = vpop.f32.mrb[0].mxu0
          %1928 = vdwg.mxu0
          %v1929 = vld [vmem:[%s17] sm:$0xff]
          %v1930 = vld [vmem:[%s17 + $0x8] sm:$0xff]
          %1932 = vset.pattern.permute.xlu0 0
          %1933 = vperm.xlu0 %1932, %v1929
          %v1934 = vpop.permute.xlu0 %1933
          %1937 = vset.pattern.permute.xlu0 0
          %1938 = vperm.xlu0 %1937, %v1930
          %v1939 = vpop.permute.xlu0 %1938
          %v1941 = vmul.f32 %v1921, %v1934
          %v1942 = vmul.f32 %v1926, %v1939
          %1943 = vst.msk [vmem:[%s789] sm:$0xff] %vm831, %v1941
          %1944 = vst.msk [vmem:[%s789 + $0x8] sm:$0xff] %vm831, %v1942
        $region177: #{tpu_custom_call.1} parent=128 // pred_fallthru
          _
        %s1945 = sand.u32 %s451, 1
        %s1946 = scalar_lea.sflag [#allocation7], %s1945
        %s1947 = sand.u32 %s451, 1
        %s1948 = smul.addr %s1947, 16
        %s1949 = scalar_lea.vmem [#allocation20], %s1948
        // Predicated region
        $region178: #{tpu_custom_call.1} parent=128 // pred_check
          %p1950 = pneg %p461
        $region179: #{tpu_custom_call.1} parent=128 // pred_check_branch
          %1952 = sbr.rel (%p1950) target = $region181
        $region180: #{tpu_custom_call.1} parent=128 // pred_region
          %s1954 = ssub.s32 256, 256
          %1955 = vsyncadd %s1946, %s1954
          %s1956 = smul.addr %s43, 2
          %s1957 = smul.addr %s1956, 128
          %s1958 = scalar_lea.hbm %s18, %s1957
          %s1959 = sshll.u32 %s1949, 4
          %s1960 = int_to_ptr.vmem [resolvable:$true] %s1959
          %1965 = dma.vmem_to_hbm [thread:$0]  %s1960, 256, %s1958, %s1946, 128, 128, 8
        $region181: #{tpu_custom_call.1} parent=128 // pred_fallthru
          _
      $region129: #{tpu_custom_call.1} parent=5 // pred_fallthru
        _
      %p1966 = scmp.le.s32.totalorder 2, %s34
      // Predicated region
      $region182: #{tpu_custom_call.1} parent=5 // pred_check
        %p1967 = pneg %p1966
      $region183: #{tpu_custom_call.1} parent=5 // pred_check_branch
        %1969 = sbr.rel (%p1967) target = $region185
      $region184: #{tpu_custom_call.1} parent=5 // pred_region
        %s1970 = ssub.s32 %s34, 2
        // Predicated region
        $region186: #{tpu_custom_call.1} parent=184 // pred_check
          %p1971 = pneg %p467
        $region187: #{tpu_custom_call.1} parent=184 // pred_check_branch
          %1973 = sbr.rel (%p1971) target = $region189
        $region188: #{tpu_custom_call.1} parent=184 // pred_region
          %s1974 = sand.u32 %s452, 1
          %s1975 = scalar_lea.sflag [#allocation7], %s1974
          %s1976 = sand.u32 %s452, 1
          %s1977 = smul.addr %s1976, 16
          %s1978 = scalar_lea.vmem [#allocation20], %s1977
          %1979 = dma.done %s1975, 256
        $region189: #{tpu_custom_call.1} parent=184 // pred_fallthru
          _
      $region185: #{tpu_custom_call.1} parent=5 // pred_fallthru
        _
    $region6: #{tpu_custom_call.1} parent=1 // loop_footer
      %s38 = sadd.s32 1, %s34
    $region7: #{tpu_custom_call.1} parent=1 // loop_footer_branch
      %33 = sbr.rel target = $region3
    $region8: #{tpu_custom_call.1} parent=1 // loop_exit
      _
    %1980 = vsyncpa [#allocation6], 1
    %s1981 = scalar_lea.sflag [#allocation6], 1
    %1982 = vsyncpa %s1981, 1
    %1983 = vsyncpa [#allocation9], 1
    %1984 = vsyncpa [#allocation12], 1
    %1985 = vsyncpa [#allocation15], 1
    %1986 = vsyncpa [#allocation18], 1
    %1987 = vsyncpa [#allocation7], 1
    %s1988 = scalar_lea.sflag [#allocation7], 1
    %1989 = vsyncpa %s1988, 1

</llo_original>
